<compile_context>
chip_gen: v7x
topology: tpu7x:2x2x1
jax: 0.10.0
libtpu: 0.0.40
codegen_flags: <defaults>
</compile_context>

<pallas_src>
import jax
import jax.numpy as jnp
from jax.experimental import pallas as pl
from jax.experimental.pallas import tpu as pltpu

LEAK = 0.2
BN_EPS = 0.8          # nn.BatchNorm1d(out_feat, 0.8) -> eps = 0.8
D1, D2, D3, D4 = 128, 256, 512, 1024


def _leaky(x):
    return jnp.where(x > 0, x, LEAK * x)


def _batchnorm_train(x, gamma, beta):
    # training-mode BN: per-batch mean and *biased* variance over axis 0
    mean = jnp.mean(x, axis=0, keepdims=True)
    c = x - mean                                  # reuse centered tensor
    var = jnp.mean(c * c, axis=0, keepdims=True)
    inv = jax.lax.rsqrt(var + BN_EPS)
    return c * inv * gamma + beta


def generator_kernel(z_ref, w1_ref, w2_ref, w3_ref, w4_ref, w5_ref, vec_ref, out_ref):
    # Unpack the packed (1, TOTAL) vector. Every slot is a multiple of 128 lanes,
    # so all offsets are lane-tile aligned (no layout copies).
    o = 0
    b1  = vec_ref[:, o:o + D1]; o += D1
    g2  = vec_ref[:, o:o + D2]; o += D2
    be2 = vec_ref[:, o:o + D2]; o += D2
    g3  = vec_ref[:, o:o + D3]; o += D3
    be3 = vec_ref[:, o:o + D3]; o += D3
    g4  = vec_ref[:, o:o + D4]; o += D4
    be4 = vec_ref[:, o:o + D4]; o += D4
    n_out = w5_ref.shape[1]
    b5  = vec_ref[:, o:o + n_out]

    # block 1: Linear -> LeakyReLU (no BN)
    h = jnp.dot(z_ref[...].astype(jnp.bfloat16), w1_ref[...],
                preferred_element_type=jnp.float32) + b1
    h = _leaky(h)

    # blocks 2-4: Linear (bias algebraically cancelled by BN) -> BN(train) -> LeakyReLU
    h = jnp.dot(h.astype(jnp.bfloat16), w2_ref[...],
                preferred_element_type=jnp.float32)
    h = _leaky(_batchnorm_train(h, g2, be2))

    h = jnp.dot(h.astype(jnp.bfloat16), w3_ref[...],
                preferred_element_type=jnp.float32)
    h = _leaky(_batchnorm_train(h, g3, be3))

    h = jnp.dot(h.astype(jnp.bfloat16), w4_ref[...],
                preferred_element_type=jnp.float32)
    h = _leaky(_batchnorm_train(h, g4, be4))

    # output: Linear -> Tanh  (lane-padded; wrapper slices back to out_shape)
    h = jnp.dot(h.astype(jnp.bfloat16), w5_ref[...],
                preferred_element_type=jnp.float32) + b5
    out_ref[...] = jnp.tanh(h)


def init_params(key, latent_dim, out_shape):
    """PyTorch-style uniform(-1/sqrt(fan_in), 1/sqrt(fan_in)) init.
    Weights stored as (in, out) bf16; biases / BN affine params stay f32."""
    dims = [latent_dim, D1, D2, D3, D4, out_shape]
    params = []
    keys = jax.random.split(key, 2 * (len(dims) - 1))
    for i in range(len(dims) - 1):
        fan_in, fan_out = dims[i], dims[i + 1]
        bound = 1.0 / float(fan_in) ** 0.5
        w = jax.random.uniform(keys[2 * i], (fan_in, fan_out), jnp.float32, -bound, bound)
        b = jax.random.uniform(keys[2 * i + 1], (1, fan_out), jnp.float32, -bound, bound)
        params.append((w.astype(jnp.bfloat16), b))
    bn = [(jnp.ones((1, d), jnp.float32), jnp.zeros((1, d), jnp.float32))
          for d in (D2, D3, D4)]
    return params, bn


def generator_forward(z, params, bn):
    (w1, b1), (w2, _b2), (w3, _b3), (w4, _b4), (w5, b5) = params  # b2/b3/b4 cancelled by BN
    (g2, be2), (g3, be3), (g4, be4) = bn
    B = z.shape[0]
    out_dim = w5.shape[1]
    out_pad = ((out_dim + 127) // 128) * 128          # lane-dense output width

    w5p = jnp.pad(w5, ((0, 0), (0, out_pad - out_dim)))
    b5p = jnp.pad(b5, ((0, 0), (0, out_pad - out_dim)))

    # Pack every (1, N) vector into a single lane-aligned array -> one DMA.
    vec = jnp.concatenate([b1, g2, be2, g3, be3, g4, be4, b5p],
                          axis=1).astype(jnp.float32)

    args = (z, w1, w2, w3, w4, w5p, vec)

    # TODO(synk): at large B, move w3/w4 to memory_space=pl.ANY and double-buffer them
    #             with pltpu.make_async_copy so their DMA hides behind earlier layers.
    # TODO(synk): on v7x, add a leading "parallel" grid axis over independent batches to
    #             use both TensorCores (BN couples the batch, so don't split one batch).
    out = pl.pallas_call(
        generator_kernel,
        out_shape=jax.ShapeDtypeStruct((B, out_pad), jnp.float32),
        in_specs=[pl.BlockSpec(memory_space=pltpu.MemorySpace.VMEM)] * len(args),
        out_specs=pl.BlockSpec(memory_space=pltpu.MemorySpace.VMEM),
        compiler_params=pltpu.CompilerParams(vmem_limit_bytes=32 * 1024 * 1024),
    )(*args)
    return out[:, :out_dim]


def generator_reference(z, params, bn):
    """Pure-JAX reference following the exact same numerical path (bf16 weights,
    f32 accumulation, bias-free BN blocks)."""
    (w1, b1), (w2, _), (w3, _), (w4, _), (w5, b5) = params
    (g2, be2), (g3, be3), (g4, be4) = bn

    def mm(x, w):
        return jnp.dot(x.astype(jnp.bfloat16), w, preferred_element_type=jnp.float32)

    def bn_ref(x, g, b):
        m = jnp.mean(x, axis=0, keepdims=True)
        v = jnp.mean((x - m) ** 2, axis=0, keepdims=True)
        return (x - m) / jnp.sqrt(v + BN_EPS) * g + b

    h = _leaky(mm(z, w1) + b1)
    h = _leaky(bn_ref(mm(h, w2), g2, be2))
    h = _leaky(bn_ref(mm(h, w3), g3, be3))
    h = _leaky(bn_ref(mm(h, w4), g4, be4))
    return jnp.tanh(mm(h, w5) + b5)


if __name__ == "__main__":
    latent_dim = 32
    out_shape = 64
    B = 8

    key = jax.random.PRNGKey(0)
    kz, kp = jax.random.split(key)
    z = jax.random.normal(kz, (B, latent_dim), jnp.float32)
    params, bn = init_params(kp, latent_dim, out_shape)

    out = jax.block_until_ready(generator_forward(z, params, bn))
    ref = jax.block_until_ready(generator_reference(z, params, bn))

    assert out.shape == (B, out_shape)
    assert jnp.allclose(out, ref, atol=5e-3, rtol=5e-3), "mismatch vs JAX reference"

    print("KERNEL_OK")
</pallas_src>

<mosaic_0001>
module attributes {stable_mosaic.version = 11 : i64} {
  func.func @generator_kernel(%arg0: memref<8x32xf32, #tpu.memory_space<vmem>>, %arg1: memref<32x128xbf16, #tpu.memory_space<vmem>>, %arg2: memref<128x256xbf16, #tpu.memory_space<vmem>>, %arg3: memref<256x512xbf16, #tpu.memory_space<vmem>>, %arg4: memref<512x1024xbf16, #tpu.memory_space<vmem>>, %arg5: memref<1024x128xbf16, #tpu.memory_space<vmem>>, %arg6: memref<1x3840xf32, #tpu.memory_space<vmem>>, %arg7: memref<8x128xf32, #tpu.memory_space<vmem>>) attributes {dimension_semantics = [], scalar_prefetch = 0 : i64, scratch_operands = 0 : i64, tpu.core_type = #tpu.core_type<tc>} {
    %c0 = arith.constant 0 : index
    %c0_0 = arith.constant 0 : index
    %0 = vector.load %arg6[%c0, %c0_0] : memref<1x3840xf32, #tpu.memory_space<vmem>>, vector<1x128xf32>
    %c0_1 = arith.constant 0 : index
    %c128 = arith.constant 128 : index
    %1 = vector.load %arg6[%c0_1, %c128] : memref<1x3840xf32, #tpu.memory_space<vmem>>, vector<1x256xf32>
    %c0_2 = arith.constant 0 : index
    %c384 = arith.constant 384 : index
    %2 = vector.load %arg6[%c0_2, %c384] : memref<1x3840xf32, #tpu.memory_space<vmem>>, vector<1x256xf32>
    %c0_3 = arith.constant 0 : index
    %c640 = arith.constant 640 : index
    %3 = vector.load %arg6[%c0_3, %c640] : memref<1x3840xf32, #tpu.memory_space<vmem>>, vector<1x512xf32>
    %c0_4 = arith.constant 0 : index
    %c1152 = arith.constant 1152 : index
    %4 = vector.load %arg6[%c0_4, %c1152] : memref<1x3840xf32, #tpu.memory_space<vmem>>, vector<1x512xf32>
    %c0_5 = arith.constant 0 : index
    %c1664 = arith.constant 1664 : index
    %5 = vector.load %arg6[%c0_5, %c1664] : memref<1x3840xf32, #tpu.memory_space<vmem>>, vector<1x1024xf32>
    %c0_6 = arith.constant 0 : index
    %c2688 = arith.constant 2688 : index
    %6 = vector.load %arg6[%c0_6, %c2688] : memref<1x3840xf32, #tpu.memory_space<vmem>>, vector<1x1024xf32>
    %c0_7 = arith.constant 0 : index
    %c3712 = arith.constant 3712 : index
    %7 = vector.load %arg6[%c0_7, %c3712] : memref<1x3840xf32, #tpu.memory_space<vmem>>, vector<1x128xf32>
    %c0_8 = arith.constant 0 : index
    %c0_9 = arith.constant 0 : index
    %8 = vector.load %arg0[%c0_8, %c0_9] : memref<8x32xf32, #tpu.memory_space<vmem>>, vector<8x32xf32>
    %9 = arith.truncf %8 : vector<8x32xf32> to vector<8x32xbf16>
    %c0_10 = arith.constant 0 : index
    %c0_11 = arith.constant 0 : index
    %10 = vector.load %arg1[%c0_10, %c0_11] : memref<32x128xbf16, #tpu.memory_space<vmem>>, vector<32x128xbf16>
    %cst = arith.constant dense<0.000000e+00> : vector<8x128xf32>
    %11 = tpu.matmul %9, %10, %cst {dimension_numbers = #tpu.dot_dimension_numbers<[1], [0], [0], [1], [0, 0, 1, 1], [], []>} : vector<8x32xbf16>, vector<32x128xbf16>, vector<8x128xf32> -> vector<8x128xf32>
    %12 = vector.broadcast %0 : vector<1x128xf32> to vector<8x128xf32>
    %13 = arith.addf %11, %12 : vector<8x128xf32>
    %cst_12 = arith.constant 0.000000e+00 : f32
    %14 = vector.broadcast %cst_12 : f32 to vector<8x128xf32>
    %15 = arith.cmpf ogt, %13, %14 : vector<8x128xf32>
    %cst_13 = arith.constant 2.000000e-01 : f32
    %16 = vector.broadcast %cst_13 : f32 to vector<8x128xf32>
    %17 = arith.mulf %16, %13 : vector<8x128xf32>
    %18 = arith.select %15, %13, %17 : vector<8x128xi1>, vector<8x128xf32>
    %19 = arith.truncf %18 : vector<8x128xf32> to vector<8x128xbf16>
    %c0_14 = arith.constant 0 : index
    %c0_15 = arith.constant 0 : index
    %20 = vector.load %arg2[%c0_14, %c0_15] : memref<128x256xbf16, #tpu.memory_space<vmem>>, vector<128x256xbf16>
    %cst_16 = arith.constant dense<0.000000e+00> : vector<8x256xf32>
    %21 = tpu.matmul %19, %20, %cst_16 {dimension_numbers = #tpu.dot_dimension_numbers<[1], [0], [0], [1], [0, 0, 1, 1], [], []>} : vector<8x128xbf16>, vector<128x256xbf16>, vector<8x256xf32> -> vector<8x256xf32>
    %cst_17 = arith.constant dense<0.000000e+00> : vector<256xf32>
    %22 = vector.multi_reduction <add>, %21, %cst_17 [0] : vector<8x256xf32> to vector<256xf32>
    %23 = vector.shape_cast %22 : vector<256xf32> to vector<1x256xf32>
    %cst_18 = arith.constant 8.000000e+00 : f32
    %24 = vector.broadcast %cst_18 : f32 to vector<1x256xf32>
    %25 = arith.divf %23, %24 : vector<1x256xf32>
    %26 = vector.broadcast %25 : vector<1x256xf32> to vector<8x256xf32>
    %27 = arith.subf %21, %26 : vector<8x256xf32>
    %28 = arith.mulf %27, %27 : vector<8x256xf32>
    %cst_19 = arith.constant dense<0.000000e+00> : vector<256xf32>
    %29 = vector.multi_reduction <add>, %28, %cst_19 [0] : vector<8x256xf32> to vector<256xf32>
    %30 = vector.shape_cast %29 : vector<256xf32> to vector<1x256xf32>
    %cst_20 = arith.constant 8.000000e+00 : f32
    %31 = vector.broadcast %cst_20 : f32 to vector<1x256xf32>
    %32 = arith.divf %30, %31 : vector<1x256xf32>
    %cst_21 = arith.constant 8.000000e-01 : f32
    %33 = vector.broadcast %cst_21 : f32 to vector<1x256xf32>
    %34 = arith.addf %32, %33 : vector<1x256xf32>
    %35 = math.rsqrt %34 : vector<1x256xf32>
    %36 = vector.broadcast %35 : vector<1x256xf32> to vector<8x256xf32>
    %37 = arith.mulf %27, %36 : vector<8x256xf32>
    %38 = vector.broadcast %1 : vector<1x256xf32> to vector<8x256xf32>
    %39 = arith.mulf %37, %38 : vector<8x256xf32>
    %40 = vector.broadcast %2 : vector<1x256xf32> to vector<8x256xf32>
    %41 = arith.addf %39, %40 : vector<8x256xf32>
    %cst_22 = arith.constant 0.000000e+00 : f32
    %42 = vector.broadcast %cst_22 : f32 to vector<8x256xf32>
    %43 = arith.cmpf ogt, %41, %42 : vector<8x256xf32>
    %cst_23 = arith.constant 2.000000e-01 : f32
    %44 = vector.broadcast %cst_23 : f32 to vector<8x256xf32>
    %45 = arith.mulf %44, %41 : vector<8x256xf32>
    %46 = arith.select %43, %41, %45 : vector<8x256xi1>, vector<8x256xf32>
    %47 = arith.truncf %46 : vector<8x256xf32> to vector<8x256xbf16>
    %c0_24 = arith.constant 0 : index
    %c0_25 = arith.constant 0 : index
    %48 = vector.load %arg3[%c0_24, %c0_25] : memref<256x512xbf16, #tpu.memory_space<vmem>>, vector<256x512xbf16>
    %cst_26 = arith.constant dense<0.000000e+00> : vector<8x512xf32>
    %49 = tpu.matmul %47, %48, %cst_26 {dimension_numbers = #tpu.dot_dimension_numbers<[1], [0], [0], [1], [0, 0, 1, 1], [], []>} : vector<8x256xbf16>, vector<256x512xbf16>, vector<8x512xf32> -> vector<8x512xf32>
    %cst_27 = arith.constant dense<0.000000e+00> : vector<512xf32>
    %50 = vector.multi_reduction <add>, %49, %cst_27 [0] : vector<8x512xf32> to vector<512xf32>
    %51 = vector.shape_cast %50 : vector<512xf32> to vector<1x512xf32>
    %cst_28 = arith.constant 8.000000e+00 : f32
    %52 = vector.broadcast %cst_28 : f32 to vector<1x512xf32>
    %53 = arith.divf %51, %52 : vector<1x512xf32>
    %54 = vector.broadcast %53 : vector<1x512xf32> to vector<8x512xf32>
    %55 = arith.subf %49, %54 : vector<8x512xf32>
    %56 = arith.mulf %55, %55 : vector<8x512xf32>
    %cst_29 = arith.constant dense<0.000000e+00> : vector<512xf32>
    %57 = vector.multi_reduction <add>, %56, %cst_29 [0] : vector<8x512xf32> to vector<512xf32>
    %58 = vector.shape_cast %57 : vector<512xf32> to vector<1x512xf32>
    %cst_30 = arith.constant 8.000000e+00 : f32
    %59 = vector.broadcast %cst_30 : f32 to vector<1x512xf32>
    %60 = arith.divf %58, %59 : vector<1x512xf32>
    %cst_31 = arith.constant 8.000000e-01 : f32
    %61 = vector.broadcast %cst_31 : f32 to vector<1x512xf32>
    %62 = arith.addf %60, %61 : vector<1x512xf32>
    %63 = math.rsqrt %62 : vector<1x512xf32>
    %64 = vector.broadcast %63 : vector<1x512xf32> to vector<8x512xf32>
    %65 = arith.mulf %55, %64 : vector<8x512xf32>
    %66 = vector.broadcast %3 : vector<1x512xf32> to vector<8x512xf32>
    %67 = arith.mulf %65, %66 : vector<8x512xf32>
    %68 = vector.broadcast %4 : vector<1x512xf32> to vector<8x512xf32>
    %69 = arith.addf %67, %68 : vector<8x512xf32>
    %cst_32 = arith.constant 0.000000e+00 : f32
    %70 = vector.broadcast %cst_32 : f32 to vector<8x512xf32>
    %71 = arith.cmpf ogt, %69, %70 : vector<8x512xf32>
    %cst_33 = arith.constant 2.000000e-01 : f32
    %72 = vector.broadcast %cst_33 : f32 to vector<8x512xf32>
    %73 = arith.mulf %72, %69 : vector<8x512xf32>
    %74 = arith.select %71, %69, %73 : vector<8x512xi1>, vector<8x512xf32>
    %75 = arith.truncf %74 : vector<8x512xf32> to vector<8x512xbf16>
    %c0_34 = arith.constant 0 : index
    %c0_35 = arith.constant 0 : index
    %76 = vector.load %arg4[%c0_34, %c0_35] : memref<512x1024xbf16, #tpu.memory_space<vmem>>, vector<512x1024xbf16>
    %cst_36 = arith.constant dense<0.000000e+00> : vector<8x1024xf32>
    %77 = tpu.matmul %75, %76, %cst_36 {dimension_numbers = #tpu.dot_dimension_numbers<[1], [0], [0], [1], [0, 0, 1, 1], [], []>} : vector<8x512xbf16>, vector<512x1024xbf16>, vector<8x1024xf32> -> vector<8x1024xf32>
    %cst_37 = arith.constant dense<0.000000e+00> : vector<1024xf32>
    %78 = vector.multi_reduction <add>, %77, %cst_37 [0] : vector<8x1024xf32> to vector<1024xf32>
    %79 = vector.shape_cast %78 : vector<1024xf32> to vector<1x1024xf32>
    %cst_38 = arith.constant 8.000000e+00 : f32
    %80 = vector.broadcast %cst_38 : f32 to vector<1x1024xf32>
    %81 = arith.divf %79, %80 : vector<1x1024xf32>
    %82 = vector.broadcast %81 : vector<1x1024xf32> to vector<8x1024xf32>
    %83 = arith.subf %77, %82 : vector<8x1024xf32>
    %84 = arith.mulf %83, %83 : vector<8x1024xf32>
    %cst_39 = arith.constant dense<0.000000e+00> : vector<1024xf32>
    %85 = vector.multi_reduction <add>, %84, %cst_39 [0] : vector<8x1024xf32> to vector<1024xf32>
    %86 = vector.shape_cast %85 : vector<1024xf32> to vector<1x1024xf32>
    %cst_40 = arith.constant 8.000000e+00 : f32
    %87 = vector.broadcast %cst_40 : f32 to vector<1x1024xf32>
    %88 = arith.divf %86, %87 : vector<1x1024xf32>
    %cst_41 = arith.constant 8.000000e-01 : f32
    %89 = vector.broadcast %cst_41 : f32 to vector<1x1024xf32>
    %90 = arith.addf %88, %89 : vector<1x1024xf32>
    %91 = math.rsqrt %90 : vector<1x1024xf32>
    %92 = vector.broadcast %91 : vector<1x1024xf32> to vector<8x1024xf32>
    %93 = arith.mulf %83, %92 : vector<8x1024xf32>
    %94 = vector.broadcast %5 : vector<1x1024xf32> to vector<8x1024xf32>
    %95 = arith.mulf %93, %94 : vector<8x1024xf32>
    %96 = vector.broadcast %6 : vector<1x1024xf32> to vector<8x1024xf32>
    %97 = arith.addf %95, %96 : vector<8x1024xf32>
    %cst_42 = arith.constant 0.000000e+00 : f32
    %98 = vector.broadcast %cst_42 : f32 to vector<8x1024xf32>
    %99 = arith.cmpf ogt, %97, %98 : vector<8x1024xf32>
    %cst_43 = arith.constant 2.000000e-01 : f32
    %100 = vector.broadcast %cst_43 : f32 to vector<8x1024xf32>
    %101 = arith.mulf %100, %97 : vector<8x1024xf32>
    %102 = arith.select %99, %97, %101 : vector<8x1024xi1>, vector<8x1024xf32>
    %103 = arith.truncf %102 : vector<8x1024xf32> to vector<8x1024xbf16>
    %c0_44 = arith.constant 0 : index
    %c0_45 = arith.constant 0 : index
    %104 = vector.load %arg5[%c0_44, %c0_45] : memref<1024x128xbf16, #tpu.memory_space<vmem>>, vector<1024x128xbf16>
    %cst_46 = arith.constant dense<0.000000e+00> : vector<8x128xf32>
    %105 = tpu.matmul %103, %104, %cst_46 {dimension_numbers = #tpu.dot_dimension_numbers<[1], [0], [0], [1], [0, 0, 1, 1], [], []>} : vector<8x1024xbf16>, vector<1024x128xbf16>, vector<8x128xf32> -> vector<8x128xf32>
    %106 = vector.broadcast %7 : vector<1x128xf32> to vector<8x128xf32>
    %107 = arith.addf %105, %106 : vector<8x128xf32>
    %108 = math.tanh %107 : vector<8x128xf32>
    %c0_47 = arith.constant 0 : index
    %c0_48 = arith.constant 0 : index
    %109 = vector.load %arg7[%c0_47, %c0_48] : memref<8x128xf32, #tpu.memory_space<vmem>>, vector<8x128xf32>
    tpu.vector_store %arg7[%c0_47, %c0_48], %108 {strides = array<i32>} : memref<8x128xf32, #tpu.memory_space<vmem>>, vector<8x128xf32>,
    return
  }
}

</mosaic_0001>

<llo_original>
// kernel: tpu_custom_call.1
$region0: #{tpu_custom_call.1}
  #allocation0 [shape = 'u32[]', space=smem, size = 0x4, offset = 0x4, fixed_abs, tag = 'smem constant byte address 0x4 - core index']
  #allocation1 [shape = 'u32[144,128]{1,0:T(1,128)}', space=vmem, size = 0x12000, scoped, tag = 'internal scratch']
  %s0 = inlined_call_operand.hbm [shape: f32[8,32], index: 0, kind: input, shape index: {}]
  %s1 = inlined_call_operand.hbm [shape: bf16[32,128], index: 1, kind: input, shape index: {}]
  %s2 = inlined_call_operand.hbm [shape: bf16[128,256], index: 2, kind: input, shape index: {}]
  %s3 = inlined_call_operand.hbm [shape: bf16[256,512], index: 3, kind: input, shape index: {}]
  %s4 = inlined_call_operand.hbm [shape: bf16[512,1024], index: 4, kind: input, shape index: {}]
  %s5 = inlined_call_operand.hbm [shape: bf16[1024,128], index: 5, kind: input, shape index: {}]
  %s6 = inlined_call_operand.hbm [shape: f32[1,3840], index: 6, kind: input, shape index: {}]
  %s7 = inlined_call_operand.hbm [shape: f32[8,128], index: 7, kind: output, shape index: {}]
  %s8 = sld [smem:[#allocation0]]
  $region66: #{tpu_custom_call.1} parent=0
    _
  %s10 = ssub.s32 1, %s8
  %s11 = scalar_select 0, %s10, %s8
  $region1: #{tpu_custom_call.1} parent=0
    #allocation2 [shape = 'u8[4096]{0}', space=vmem, size = 0x1000, scoped, tag = 'input window, operand 0, single buffered']
    #allocation3 [shape = 's32[1]{0}', space=sflag, size = 0x4, scoped, tag = 'scoped memory for tpu_custom_call.1']
    #allocation4 [shape = 's32[1]{0}', space=sflag, size = 0x4, scoped, tag = 'scoped memory for tpu_custom_call.1']
    #allocation5 [shape = 'u8[8192]{0}', space=vmem, size = 0x2000, scoped, tag = 'input window, operand 1, single buffered']
    #allocation6 [shape = 's32[1]{0}', space=sflag, size = 0x4, scoped, tag = 'scoped memory for tpu_custom_call.1']
    #allocation7 [shape = 'u8[65536]{0}', space=vmem, size = 0x10000, scoped, tag = 'input window, operand 2, single buffered']
    #allocation8 [shape = 'u8[262144]{0}', space=vmem, size = 0x40000, scoped, tag = 'input window, operand 3, single buffered']
    #allocation9 [shape = 's32[1]{0}', space=sflag, size = 0x4, scoped, tag = 'scoped memory for tpu_custom_call.1']
    #allocation10 [shape = 'u8[1048576]{0}', space=vmem, size = 0x100000, scoped, tag = 'input window, operand 4, single buffered']
    #allocation11 [shape = 'u8[262144]{0}', space=vmem, size = 0x40000, scoped, tag = 'input window, operand 5, single buffered']
    #allocation12 [shape = 's32[1]{0}', space=sflag, size = 0x4, scoped, tag = 'scoped memory for tpu_custom_call.1']
    #allocation13 [shape = 'u8[15360]{0}', space=vmem, size = 0x3c00, scoped, tag = 'input window, operand 6, single buffered']
    #allocation14 [shape = 'u8[4096]{0}', space=vmem, size = 0x1000, scoped, tag = 'output window, operand 0, single buffered']
    %12 = vsyncpa [#allocation3], 0
    %13 = vsyncpa [#allocation6], 0
    %14 = vsyncpa [#allocation9], 0
    %15 = vsyncpa [#allocation12], 0
    %16 = vsyncpa [#allocation4], 0
    // Predicated region
    $region2: #{tpu_custom_call.1} parent=1 // pred_check
      _
    $region3: #{tpu_custom_call.1} parent=1 // pred_check_branch
      %18 = sbr.rel (0) target = $region5
    $region4: #{tpu_custom_call.1} parent=1 // pred_region
      %s20 = ssub.s32 128, 128
      %21 = vsyncadd [#allocation3], %s20
      %s23 = sshll.u32 [#allocation2], 4
      %s24 = int_to_ptr.vmem [resolvable:$true] %s23
      %26 = dma.hbm_to_vmem [thread:$0]  %s0, 128, %s24, [#allocation3]
    $region5: #{tpu_custom_call.1} parent=1 // pred_fallthru
      _
    // Predicated region
    $region6: #{tpu_custom_call.1} parent=1 // pred_check
      _
    $region7: #{tpu_custom_call.1} parent=1 // pred_check_branch
      %28 = sbr.rel (0) target = $region9
    $region8: #{tpu_custom_call.1} parent=1 // pred_region
      %s30 = ssub.s32 256, 256
      %31 = vsyncadd [#allocation6], %s30
      %s32 = sshll.u32 [#allocation5], 4
      %s33 = int_to_ptr.vmem [resolvable:$true] %s32
      %38 = dma.hbm_to_vmem [thread:$0]  %s1, 256, %s33, [#allocation6], 64, 64, 4
    $region9: #{tpu_custom_call.1} parent=1 // pred_fallthru
      _
    // Predicated region
    $region10: #{tpu_custom_call.1} parent=1 // pred_check
      _
    $region11: #{tpu_custom_call.1} parent=1 // pred_check_branch
      %40 = sbr.rel (0) target = $region13
    $region12: #{tpu_custom_call.1} parent=1 // pred_region
      %s42 = ssub.s32 2048, 2048
      %43 = vsyncadd [#allocation6], %s42
      %s44 = sshll.u32 [#allocation7], 4
      %s45 = int_to_ptr.vmem [resolvable:$true] %s44
      %50 = dma.hbm_to_vmem [thread:$0]  %s2, 2048, %s45, [#allocation6], 128, 128, 8
    $region13: #{tpu_custom_call.1} parent=1 // pred_fallthru
      _
    // Predicated region
    $region14: #{tpu_custom_call.1} parent=1 // pred_check
      _
    $region15: #{tpu_custom_call.1} parent=1 // pred_check_branch
      %52 = sbr.rel (0) target = $region17
    $region16: #{tpu_custom_call.1} parent=1 // pred_region
      %s54 = ssub.s32 8192, 8192
      %55 = vsyncadd [#allocation9], %s54
      %s56 = sshll.u32 [#allocation8], 4
      %s57 = int_to_ptr.vmem [resolvable:$true] %s56
      %62 = dma.hbm_to_vmem [thread:$0]  %s3, 8192, %s57, [#allocation9], 256, 256, 16
    $region17: #{tpu_custom_call.1} parent=1 // pred_fallthru
      _
    // Predicated region
    $region18: #{tpu_custom_call.1} parent=1 // pred_check
      _
    $region19: #{tpu_custom_call.1} parent=1 // pred_check_branch
      %64 = sbr.rel (0) target = $region21
    $region20: #{tpu_custom_call.1} parent=1 // pred_region
      %s66 = ssub.s32 32768, 32768
      %67 = vsyncadd [#allocation9], %s66
      %s68 = sshll.u32 [#allocation10], 4
      %s69 = int_to_ptr.vmem [resolvable:$true] %s68
      %74 = dma.hbm_to_vmem [thread:$0]  %s4, 32768, %s69, [#allocation9], 512, 512, 32
    $region21: #{tpu_custom_call.1} parent=1 // pred_fallthru
      _
    // Predicated region
    $region22: #{tpu_custom_call.1} parent=1 // pred_check
      _
    $region23: #{tpu_custom_call.1} parent=1 // pred_check_branch
      %76 = sbr.rel (0) target = $region25
    $region24: #{tpu_custom_call.1} parent=1 // pred_region
      %s78 = ssub.s32 8192, 8192
      %79 = vsyncadd [#allocation12], %s78
      %s80 = sshll.u32 [#allocation11], 4
      %s81 = int_to_ptr.vmem [resolvable:$true] %s80
      %86 = dma.hbm_to_vmem [thread:$0]  %s5, 8192, %s81, [#allocation12], 64, 64, 4
    $region25: #{tpu_custom_call.1} parent=1 // pred_fallthru
      _
    // Predicated region
    $region26: #{tpu_custom_call.1} parent=1 // pred_check
      _
    $region27: #{tpu_custom_call.1} parent=1 // pred_check_branch
      %88 = sbr.rel (0) target = $region29
    $region28: #{tpu_custom_call.1} parent=1 // pred_region
      %s90 = ssub.s32 480, 480
      %91 = vsyncadd [#allocation12], %s90
      %s93 = sshll.u32 [#allocation13], 4
      %s94 = int_to_ptr.vmem [resolvable:$true] %s93
      %96 = dma.hbm_to_vmem [thread:$0]  %s6, 480, %s94, [#allocation12]
    $region29: #{tpu_custom_call.1} parent=1 // pred_fallthru
      _
    // Predicated region
    $region30: #{tpu_custom_call.1} parent=1 // pred_check
      _
    $region31: #{tpu_custom_call.1} parent=1 // pred_check_branch
      %98 = sbr.rel (0) target = $region33
    $region32: #{tpu_custom_call.1} parent=1 // pred_region
      %99 = dma.done [#allocation3], 128
    $region33: #{tpu_custom_call.1} parent=1 // pred_fallthru
      _
    // Predicated region
    $region34: #{tpu_custom_call.1} parent=1 // pred_check
      _
    $region35: #{tpu_custom_call.1} parent=1 // pred_check_branch
      %101 = sbr.rel (0) target = $region37
    $region36: #{tpu_custom_call.1} parent=1 // pred_region
      %102 = dma.done [#allocation6], 256
    $region37: #{tpu_custom_call.1} parent=1 // pred_fallthru
      _
    // Predicated region
    $region38: #{tpu_custom_call.1} parent=1 // pred_check
      _
    $region39: #{tpu_custom_call.1} parent=1 // pred_check_branch
      %104 = sbr.rel (0) target = $region41
    $region40: #{tpu_custom_call.1} parent=1 // pred_region
      %105 = dma.done [#allocation6], 2048
    $region41: #{tpu_custom_call.1} parent=1 // pred_fallthru
      _
    // Predicated region
    $region42: #{tpu_custom_call.1} parent=1 // pred_check
      _
    $region43: #{tpu_custom_call.1} parent=1 // pred_check_branch
      %107 = sbr.rel (0) target = $region45
    $region44: #{tpu_custom_call.1} parent=1 // pred_region
      %108 = dma.done [#allocation9], 8192
    $region45: #{tpu_custom_call.1} parent=1 // pred_fallthru
      _
    // Predicated region
    $region46: #{tpu_custom_call.1} parent=1 // pred_check
      _
    $region47: #{tpu_custom_call.1} parent=1 // pred_check_branch
      %110 = sbr.rel (0) target = $region49
    $region48: #{tpu_custom_call.1} parent=1 // pred_region
      %111 = dma.done [#allocation9], 32768
    $region49: #{tpu_custom_call.1} parent=1 // pred_fallthru
      _
    // Predicated region
    $region50: #{tpu_custom_call.1} parent=1 // pred_check
      _
    $region51: #{tpu_custom_call.1} parent=1 // pred_check_branch
      %113 = sbr.rel (0) target = $region53
    $region52: #{tpu_custom_call.1} parent=1 // pred_region
      %114 = dma.done [#allocation12], 8192
    $region53: #{tpu_custom_call.1} parent=1 // pred_fallthru
      _
    // Predicated region
    $region54: #{tpu_custom_call.1} parent=1 // pred_check
      _
    $region55: #{tpu_custom_call.1} parent=1 // pred_check_branch
      %116 = sbr.rel (0) target = $region57
    $region56: #{tpu_custom_call.1} parent=1 // pred_region
      %117 = dma.done [#allocation12], 480
    $region57: #{tpu_custom_call.1} parent=1 // pred_fallthru
      _
    %v119 = vld [vmem:[#allocation13] sm:$0x1]
    %v120 = vld [vmem:[#allocation13 + $0x1] sm:$0x3]
    %v121 = vld [vmem:[#allocation13 + $0x3] sm:$0x3]
    %v122 = vld [vmem:[#allocation13 + $0x5] sm:$0xf]
    %v123 = vld [vmem:[#allocation13 + $0x9] sm:$0xf]
    %v124 = vld [vmem:[#allocation13 + $0xd] sm:$0xff]
    %v125 = vld [vmem:[#allocation13 + $0x15] sm:$0xff]
    %v126 = vld [vmem:[#allocation13 + $0x1d] sm:$0x1]
    %v127 = vld [vmem:[#allocation2] sm:$0xff]
    %v128 = vpack.c.bf16 %v127, %v127
    %v129 = vld [vmem:[#allocation5] sm:$0xf]
    %v130 = vld [vmem:[#allocation5 + $0x4] sm:$0xf]
    %v131 = vld [vmem:[#allocation5 + $0x8] sm:$0xf]
    %v132 = vld [vmem:[#allocation5 + $0xc] sm:$0xf]
    %v134 = vlaneseq
    %v135 = vshrl.u32 %v134, 7
    %v136 = vsub.s32 0, %v135
    %v137 = vrot.slane %v119, %v136
    %v143 = vunpack.c.l.b16 %v129
    %v144 = vunpack.c.l.b16 %v130
    %v145 = vunpack.c.l.b16 %v131
    %v146 = vunpack.c.l.b16 %v132
    %v147 = vpack.c.b16 %v144, %v143
    %v148 = vpack.c.b16 %v146, %v145
    %vm151 = vcmask 261120
    %v153 = vsel %vm151, %v128, 0
    %155 = vmatprep.subr.bf16.mxu0 0
    %156 = vmatpush1.bf16.msra.mxu0 %v147
    %157 = vmatprep.subr.bf16.mxu0 0
    %158 = vmatpush1.bf16.msra.mxu0 %v148
    %159 = vmatprep.subr.bf16.mxu0 0
    %160 = vmatpush1.bf16.msra.mxu0 0
    %161 = vmatprep.subr.bf16.mxu0 0
    %162 = vmatpush1.bf16.msra.mxu0 0
    %163 = vmatprep.subr.bf16.mxu0 0
    %164 = vmatpush1.bf16.msra.mxu0 0
    %165 = vmatprep.subr.bf16.mxu0 0
    %166 = vmatpush1.bf16.msra.mxu0 0
    %167 = vmatprep.subr.bf16.mxu0 0
    %168 = vmatpush1.bf16.msra.mxu0 0
    %169 = vmatprep.subr.bf16.mxu0 0
    %170 = vmatpush1.bf16.msra.mxu0 0
    %171 = vmatprep.subr.bf16.mxu0 0
    %172 = vmatpush1.bf16.msra.mxu0 0
    %173 = vmatprep.subr.bf16.mxu0 0
    %174 = vmatpush1.bf16.msra.mxu0 0
    %175 = vmatprep.subr.bf16.mxu0 0
    %176 = vmatpush1.bf16.msra.mxu0 0
    %177 = vmatprep.subr.bf16.mxu0 0
    %178 = vmatpush1.bf16.msra.mxu0 0
    %179 = vmatprep.subr.bf16.mxu0 0
    %180 = vmatpush1.bf16.msra.mxu0 0
    %181 = vmatprep.subr.bf16.mxu0 0
    %182 = vmatpush1.bf16.msra.mxu0 0
    %183 = vmatprep.subr.bf16.mxu0 0
    %184 = vmatpush1.bf16.msra.mxu0 0
    %185 = vmatprep.subr.bf16.mxu0 0
    %186 = vmatpush1.bf16.msra.mxu0 0
    %187 = vmatprep.mubr.bf16.mxu0 0
    %188 = vmatmul.mubr.bf16.gmra.mrb[0].mxu0 %v153
    %v189 = vpop.f32.mrb[0].mxu0
    %v190 = vadd.f32 %v137, %v189
    %v191 = vpop.f32.mrb[0].mxu0
    %v192 = vpop.f32.mrb[0].mxu0
    %v193 = vpop.f32.mrb[0].mxu0
    %194 = vdwg.mxu0
    %vm195 = vcmp.gt.f32.partialorder %v190, 0.0
    %v196 = vmul.f32 %v190, 0.2
    %v197 = vsel %vm195, %v190, %v196
    %v198 = vpack.c.bf16 %v197, %v197
    %v199 = vld [vmem:[#allocation7] sm:$0xff]
    %v200 = vld [vmem:[#allocation7 + $0x8] sm:$0xff]
    %v201 = vld [vmem:[#allocation7 + $0x10] sm:$0xff]
    %v202 = vld [vmem:[#allocation7 + $0x18] sm:$0xff]
    %v203 = vld [vmem:[#allocation7 + $0x20] sm:$0xff]
    %v204 = vld [vmem:[#allocation7 + $0x28] sm:$0xff]
    %v205 = vld [vmem:[#allocation7 + $0x30] sm:$0xff]
    %v206 = vld [vmem:[#allocation7 + $0x38] sm:$0xff]
    %v207 = vld [vmem:[#allocation7 + $0x40] sm:$0xff]
    %v208 = vld [vmem:[#allocation7 + $0x48] sm:$0xff]
    %v209 = vld [vmem:[#allocation7 + $0x50] sm:$0xff]
    %v210 = vld [vmem:[#allocation7 + $0x58] sm:$0xff]
    %v211 = vld [vmem:[#allocation7 + $0x60] sm:$0xff]
    %v212 = vld [vmem:[#allocation7 + $0x68] sm:$0xff]
    %v213 = vld [vmem:[#allocation7 + $0x70] sm:$0xff]
    %v214 = vld [vmem:[#allocation7 + $0x78] sm:$0xff]
    %v231 = vunpack.c.l.b16 %v199
    %v232 = vunpack.c.h.b16 %v199
    %v233 = vunpack.c.l.b16 %v200
    %v234 = vunpack.c.h.b16 %v200
    %v235 = vunpack.c.l.b16 %v201
    %v236 = vunpack.c.h.b16 %v201
    %v237 = vunpack.c.l.b16 %v202
    %v238 = vunpack.c.h.b16 %v202
    %v239 = vunpack.c.l.b16 %v203
    %v240 = vunpack.c.h.b16 %v203
    %v241 = vunpack.c.l.b16 %v204
    %v242 = vunpack.c.h.b16 %v204
    %v243 = vunpack.c.l.b16 %v205
    %v244 = vunpack.c.h.b16 %v205
    %v245 = vunpack.c.l.b16 %v206
    %v246 = vunpack.c.h.b16 %v206
    %v247 = vunpack.c.l.b16 %v207
    %v248 = vunpack.c.h.b16 %v207
    %v249 = vunpack.c.l.b16 %v208
    %v250 = vunpack.c.h.b16 %v208
    %v251 = vunpack.c.l.b16 %v209
    %v252 = vunpack.c.h.b16 %v209
    %v253 = vunpack.c.l.b16 %v210
    %v254 = vunpack.c.h.b16 %v210
    %v255 = vunpack.c.l.b16 %v211
    %v256 = vunpack.c.h.b16 %v211
    %v257 = vunpack.c.l.b16 %v212
    %v258 = vunpack.c.h.b16 %v212
    %v259 = vunpack.c.l.b16 %v213
    %v260 = vunpack.c.h.b16 %v213
    %v261 = vunpack.c.l.b16 %v214
    %v262 = vunpack.c.h.b16 %v214
    %v263 = vpack.c.b16 %v233, %v231
    %v264 = vpack.c.b16 %v234, %v232
    %v265 = vpack.c.b16 %v237, %v235
    %v266 = vpack.c.b16 %v238, %v236
    %v267 = vpack.c.b16 %v241, %v239
    %v268 = vpack.c.b16 %v242, %v240
    %v269 = vpack.c.b16 %v245, %v243
    %v270 = vpack.c.b16 %v246, %v244
    %v271 = vpack.c.b16 %v249, %v247
    %v272 = vpack.c.b16 %v250, %v248
    %v273 = vpack.c.b16 %v253, %v251
    %v274 = vpack.c.b16 %v254, %v252
    %v275 = vpack.c.b16 %v257, %v255
    %v276 = vpack.c.b16 %v258, %v256
    %v277 = vpack.c.b16 %v261, %v259
    %v278 = vpack.c.b16 %v262, %v260
    %295 = vmatprep.subr.bf16.mxu0 %v264
    %296 = vmatpush1.bf16.msra.mxu0 %v263
    %297 = vmatprep.subr.bf16.mxu0 %v266
    %298 = vmatpush1.bf16.msra.mxu0 %v265
    %299 = vmatprep.subr.bf16.mxu0 %v268
    %300 = vmatpush1.bf16.msra.mxu0 %v267
    %301 = vmatprep.subr.bf16.mxu0 %v270
    %302 = vmatpush1.bf16.msra.mxu0 %v269
    %303 = vmatprep.subr.bf16.mxu0 %v272
    %304 = vmatpush1.bf16.msra.mxu0 %v271
    %305 = vmatprep.subr.bf16.mxu0 %v274
    %306 = vmatpush1.bf16.msra.mxu0 %v273
    %307 = vmatprep.subr.bf16.mxu0 %v276
    %308 = vmatpush1.bf16.msra.mxu0 %v275
    %309 = vmatprep.subr.bf16.mxu0 %v278
    %310 = vmatpush1.bf16.msra.mxu0 %v277
    %311 = vmatprep.subr.bf16.mxu0 0
    %312 = vmatpush1.bf16.msra.mxu0 0
    %313 = vmatprep.subr.bf16.mxu0 0
    %314 = vmatpush1.bf16.msra.mxu0 0
    %315 = vmatprep.subr.bf16.mxu0 0
    %316 = vmatpush1.bf16.msra.mxu0 0
    %317 = vmatprep.subr.bf16.mxu0 0
    %318 = vmatpush1.bf16.msra.mxu0 0
    %319 = vmatprep.subr.bf16.mxu0 0
    %320 = vmatpush1.bf16.msra.mxu0 0
    %321 = vmatprep.subr.bf16.mxu0 0
    %322 = vmatpush1.bf16.msra.mxu0 0
    %323 = vmatprep.subr.bf16.mxu0 0
    %324 = vmatpush1.bf16.msra.mxu0 0
    %325 = vmatprep.subr.bf16.mxu0 0
    %326 = vmatpush1.bf16.msra.mxu0 0
    %327 = vmatprep.mubr.bf16.mxu0 0
    %328 = vmatmul.mubr.bf16.gmra.mrb[0].mxu0 %v198
    %v329 = vpop.f32.mrb[0].mxu0
    %v330 = vadd.f32 0.0, %v329
    %v331 = vpop.f32.mrb[0].mxu0
    %v332 = vadd.f32 0.0, %v331
    %v333 = vpop.f32.mrb[0].mxu0
    %v334 = vpop.f32.mrb[0].mxu0
    %335 = vdwg.mxu0
    %v336 = vrot.slane %v330, 4
    %v337 = vadd.f32 %v330, %v336
    %v338 = vrot.slane %v337, 2
    %v339 = vadd.f32 %v337, %v338
    %v340 = vrot.slane %v339, 1
    %v341 = vadd.f32 %v339, %v340
    %v342 = vrot.slane %v332, 4
    %v343 = vadd.f32 %v332, %v342
    %v344 = vrot.slane %v343, 2
    %v345 = vadd.f32 %v343, %v344
    %v346 = vrot.slane %v345, 1
    %v347 = vadd.f32 %v345, %v346
    %v348 = vrcp.pop 8.0
    %v349 = vmul.f32 %v341, %v348
    %v350 = vmul.f32 %v347, %v348
    %v351 = vsub.f32 %v330, %v349
    %v352 = vsub.f32 %v332, %v350
    %v353 = vmul.f32 %v351, %v351
    %v354 = vmul.f32 %v352, %v352
    %v355 = vrot.slane %v353, 4
    %v356 = vadd.f32 %v353, %v355
    %v357 = vrot.slane %v356, 2
    %v358 = vadd.f32 %v356, %v357
    %v359 = vrot.slane %v358, 1
    %v360 = vadd.f32 %v358, %v359
    %v361 = vrot.slane %v354, 4
    %v362 = vadd.f32 %v354, %v361
    %v363 = vrot.slane %v362, 2
    %v364 = vadd.f32 %v362, %v363
    %v365 = vrot.slane %v364, 1
    %v366 = vadd.f32 %v364, %v365
    %v367 = vmul.f32 %v360, %v348
    %v368 = vmul.f32 %v366, %v348
    %v369 = vadd.f32 %v367, 0.8
    %v370 = vadd.f32 %v368, 0.8
    %v371 = vrsqrt.pop %v369
    %v372 = vrsqrt.pop %v370
    %v373 = vmul.f32 %v351, %v371
    %v374 = vmul.f32 %v352, %v372
    %v376 = vlaneseq
    %v377 = vshrl.u32 %v376, 7
    %v378 = vsub.s32 0, %v377
    %v379 = vrot.slane %v120, %v378
    %v380 = vlaneseq
    %v381 = vshrl.u32 %v380, 7
    %v382 = vsub.s32 1, %v381
    %v383 = vrot.slane %v120, %v382
    %v386 = vmul.f32 %v373, %v379
    %v387 = vmul.f32 %v374, %v383
    %v389 = vlaneseq
    %v390 = vshrl.u32 %v389, 7
    %v391 = vsub.s32 0, %v390
    %v392 = vrot.slane %v121, %v391
    %v393 = vlaneseq
    %v394 = vshrl.u32 %v393, 7
    %v395 = vsub.s32 1, %v394
    %v396 = vrot.slane %v121, %v395
    %v399 = vadd.f32 %v386, %v392
    %v400 = vadd.f32 %v387, %v396
    %vm401 = vcmp.gt.f32.partialorder %v399, 0.0
    %vm402 = vcmp.gt.f32.partialorder %v400, 0.0
    %v403 = vmul.f32 %v399, 0.2
    %v404 = vmul.f32 %v400, 0.2
    %v405 = vsel %vm401, %v399, %v403
    %v406 = vsel %vm402, %v400, %v404
    %v407 = vpack.c.bf16 %v405, %v405
    %v408 = vpack.c.bf16 %v406, %v406
    %v409 = vld [vmem:[#allocation8] sm:$0xff]
    %v410 = vld [vmem:[#allocation8 + $0x8] sm:$0xff]
    %v411 = vld [vmem:[#allocation8 + $0x10] sm:$0xff]
    %v412 = vld [vmem:[#allocation8 + $0x18] sm:$0xff]
    %v413 = vld [vmem:[#allocation8 + $0x20] sm:$0xff]
    %v414 = vld [vmem:[#allocation8 + $0x28] sm:$0xff]
    %v415 = vld [vmem:[#allocation8 + $0x30] sm:$0xff]
    %v416 = vld [vmem:[#allocation8 + $0x38] sm:$0xff]
    %v417 = vld [vmem:[#allocation8 + $0x40] sm:$0xff]
    %v418 = vld [vmem:[#allocation8 + $0x48] sm:$0xff]
    %v419 = vld [vmem:[#allocation8 + $0x50] sm:$0xff]
    %v420 = vld [vmem:[#allocation8 + $0x58] sm:$0xff]
    %v421 = vld [vmem:[#allocation8 + $0x60] sm:$0xff]
    %v422 = vld [vmem:[#allocation8 + $0x68] sm:$0xff]
    %v423 = vld [vmem:[#allocation8 + $0x70] sm:$0xff]
    %v424 = vld [vmem:[#allocation8 + $0x78] sm:$0xff]
    %v425 = vld [vmem:[#allocation8 + $0x80] sm:$0xff]
    %v426 = vld [vmem:[#allocation8 + $0x88] sm:$0xff]
    %v427 = vld [vmem:[#allocation8 + $0x90] sm:$0xff]
    %v428 = vld [vmem:[#allocation8 + $0x98] sm:$0xff]
    %v429 = vld [vmem:[#allocation8 + $0xa0] sm:$0xff]
    %v430 = vld [vmem:[#allocation8 + $0xa8] sm:$0xff]
    %v431 = vld [vmem:[#allocation8 + $0xb0] sm:$0xff]
    %v432 = vld [vmem:[#allocation8 + $0xb8] sm:$0xff]
    %v433 = vld [vmem:[#allocation8 + $0xc0] sm:$0xff]
    %v434 = vld [vmem:[#allocation8 + $0xc8] sm:$0xff]
    %v435 = vld [vmem:[#allocation8 + $0xd0] sm:$0xff]
    %v436 = vld [vmem:[#allocation8 + $0xd8] sm:$0xff]
    %v437 = vld [vmem:[#allocation8 + $0xe0] sm:$0xff]
    %v438 = vld [vmem:[#allocation8 + $0xe8] sm:$0xff]
    %v439 = vld [vmem:[#allocation8 + $0xf0] sm:$0xff]
    %v440 = vld [vmem:[#allocation8 + $0xf8] sm:$0xff]
    %v441 = vld [vmem:[#allocation8 + $0x100] sm:$0xff]
    %v442 = vld [vmem:[#allocation8 + $0x108] sm:$0xff]
    %v443 = vld [vmem:[#allocation8 + $0x110] sm:$0xff]
    %v444 = vld [vmem:[#allocation8 + $0x118] sm:$0xff]
    %v445 = vld [vmem:[#allocation8 + $0x120] sm:$0xff]
    %v446 = vld [vmem:[#allocation8 + $0x128] sm:$0xff]
    %v447 = vld [vmem:[#allocation8 + $0x130] sm:$0xff]
    %v448 = vld [vmem:[#allocation8 + $0x138] sm:$0xff]
    %v449 = vld [vmem:[#allocation8 + $0x140] sm:$0xff]
    %v450 = vld [vmem:[#allocation8 + $0x148] sm:$0xff]
    %v451 = vld [vmem:[#allocation8 + $0x150] sm:$0xff]
    %v452 = vld [vmem:[#allocation8 + $0x158] sm:$0xff]
    %v453 = vld [vmem:[#allocation8 + $0x160] sm:$0xff]
    %v454 = vld [vmem:[#allocation8 + $0x168] sm:$0xff]
    %v455 = vld [vmem:[#allocation8 + $0x170] sm:$0xff]
    %v456 = vld [vmem:[#allocation8 + $0x178] sm:$0xff]
    %v457 = vld [vmem:[#allocation8 + $0x180] sm:$0xff]
    %v458 = vld [vmem:[#allocation8 + $0x188] sm:$0xff]
    %v459 = vld [vmem:[#allocation8 + $0x190] sm:$0xff]
    %v460 = vld [vmem:[#allocation8 + $0x198] sm:$0xff]
    %v461 = vld [vmem:[#allocation8 + $0x1a0] sm:$0xff]
    %v462 = vld [vmem:[#allocation8 + $0x1a8] sm:$0xff]
    %v463 = vld [vmem:[#allocation8 + $0x1b0] sm:$0xff]
    %v464 = vld [vmem:[#allocation8 + $0x1b8] sm:$0xff]
    %v465 = vld [vmem:[#allocation8 + $0x1c0] sm:$0xff]
    %v466 = vld [vmem:[#allocation8 + $0x1c8] sm:$0xff]
    %v467 = vld [vmem:[#allocation8 + $0x1d0] sm:$0xff]
    %v468 = vld [vmem:[#allocation8 + $0x1d8] sm:$0xff]
    %v469 = vld [vmem:[#allocation8 + $0x1e0] sm:$0xff]
    %v470 = vld [vmem:[#allocation8 + $0x1e8] sm:$0xff]
    %v471 = vld [vmem:[#allocation8 + $0x1f0] sm:$0xff]
    %v472 = vld [vmem:[#allocation8 + $0x1f8] sm:$0xff]
    %v537 = vunpack.c.l.b16 %v409
    %v538 = vunpack.c.h.b16 %v409
    %v539 = vunpack.c.l.b16 %v410
    %v540 = vunpack.c.h.b16 %v410
    %v541 = vunpack.c.l.b16 %v411
    %v542 = vunpack.c.h.b16 %v411
    %v543 = vunpack.c.l.b16 %v412
    %v544 = vunpack.c.h.b16 %v412
    %v545 = vunpack.c.l.b16 %v413
    %v546 = vunpack.c.h.b16 %v413
    %v547 = vunpack.c.l.b16 %v414
    %v548 = vunpack.c.h.b16 %v414
    %v549 = vunpack.c.l.b16 %v415
    %v550 = vunpack.c.h.b16 %v415
    %v551 = vunpack.c.l.b16 %v416
    %v552 = vunpack.c.h.b16 %v416
    %v553 = vunpack.c.l.b16 %v417
    %v554 = vunpack.c.h.b16 %v417
    %v555 = vunpack.c.l.b16 %v418
    %v556 = vunpack.c.h.b16 %v418
    %v557 = vunpack.c.l.b16 %v419
    %v558 = vunpack.c.h.b16 %v419
    %v559 = vunpack.c.l.b16 %v420
    %v560 = vunpack.c.h.b16 %v420
    %v561 = vunpack.c.l.b16 %v421
    %v562 = vunpack.c.h.b16 %v421
    %v563 = vunpack.c.l.b16 %v422
    %v564 = vunpack.c.h.b16 %v422
    %v565 = vunpack.c.l.b16 %v423
    %v566 = vunpack.c.h.b16 %v423
    %v567 = vunpack.c.l.b16 %v424
    %v568 = vunpack.c.h.b16 %v424
    %v569 = vunpack.c.l.b16 %v425
    %v570 = vunpack.c.h.b16 %v425
    %v571 = vunpack.c.l.b16 %v426
    %v572 = vunpack.c.h.b16 %v426
    %v573 = vunpack.c.l.b16 %v427
    %v574 = vunpack.c.h.b16 %v427
    %v575 = vunpack.c.l.b16 %v428
    %v576 = vunpack.c.h.b16 %v428
    %v577 = vunpack.c.l.b16 %v429
    %v578 = vunpack.c.h.b16 %v429
    %v579 = vunpack.c.l.b16 %v430
    %v580 = vunpack.c.h.b16 %v430
    %v581 = vunpack.c.l.b16 %v431
    %v582 = vunpack.c.h.b16 %v431
    %v583 = vunpack.c.l.b16 %v432
    %v584 = vunpack.c.h.b16 %v432
    %v585 = vunpack.c.l.b16 %v433
    %v586 = vunpack.c.h.b16 %v433
    %v587 = vunpack.c.l.b16 %v434
    %v588 = vunpack.c.h.b16 %v434
    %v589 = vunpack.c.l.b16 %v435
    %v590 = vunpack.c.h.b16 %v435
    %v591 = vunpack.c.l.b16 %v436
    %v592 = vunpack.c.h.b16 %v436
    %v593 = vunpack.c.l.b16 %v437
    %v594 = vunpack.c.h.b16 %v437
    %v595 = vunpack.c.l.b16 %v438
    %v596 = vunpack.c.h.b16 %v438
    %v597 = vunpack.c.l.b16 %v439
    %v598 = vunpack.c.h.b16 %v439
    %v599 = vunpack.c.l.b16 %v440
    %v600 = vunpack.c.h.b16 %v440
    %v601 = vunpack.c.l.b16 %v441
    %v602 = vunpack.c.h.b16 %v441
    %v603 = vunpack.c.l.b16 %v442
    %v604 = vunpack.c.h.b16 %v442
    %v605 = vunpack.c.l.b16 %v443
    %v606 = vunpack.c.h.b16 %v443
    %v607 = vunpack.c.l.b16 %v444
    %v608 = vunpack.c.h.b16 %v444
    %v609 = vunpack.c.l.b16 %v445
    %v610 = vunpack.c.h.b16 %v445
    %v611 = vunpack.c.l.b16 %v446
    %v612 = vunpack.c.h.b16 %v446
    %v613 = vunpack.c.l.b16 %v447
    %v614 = vunpack.c.h.b16 %v447
    %v615 = vunpack.c.l.b16 %v448
    %v616 = vunpack.c.h.b16 %v448
    %v617 = vunpack.c.l.b16 %v449
    %v618 = vunpack.c.h.b16 %v449
    %v619 = vunpack.c.l.b16 %v450
    %v620 = vunpack.c.h.b16 %v450
    %v621 = vunpack.c.l.b16 %v451
    %v622 = vunpack.c.h.b16 %v451
    %v623 = vunpack.c.l.b16 %v452
    %v624 = vunpack.c.h.b16 %v452
    %v625 = vunpack.c.l.b16 %v453
    %v626 = vunpack.c.h.b16 %v453
    %v627 = vunpack.c.l.b16 %v454
    %v628 = vunpack.c.h.b16 %v454
    %v629 = vunpack.c.l.b16 %v455
    %v630 = vunpack.c.h.b16 %v455
    %v631 = vunpack.c.l.b16 %v456
    %v632 = vunpack.c.h.b16 %v456
    %v633 = vunpack.c.l.b16 %v457
    %v634 = vunpack.c.h.b16 %v457
    %v635 = vunpack.c.l.b16 %v458
    %v636 = vunpack.c.h.b16 %v458
    %v637 = vunpack.c.l.b16 %v459
    %v638 = vunpack.c.h.b16 %v459
    %v639 = vunpack.c.l.b16 %v460
    %v640 = vunpack.c.h.b16 %v460
    %v641 = vunpack.c.l.b16 %v461
    %v642 = vunpack.c.h.b16 %v461
    %v643 = vunpack.c.l.b16 %v462
    %v644 = vunpack.c.h.b16 %v462
    %v645 = vunpack.c.l.b16 %v463
    %v646 = vunpack.c.h.b16 %v463
    %v647 = vunpack.c.l.b16 %v464
    %v648 = vunpack.c.h.b16 %v464
    %v649 = vunpack.c.l.b16 %v465
    %v650 = vunpack.c.h.b16 %v465
    %v651 = vunpack.c.l.b16 %v466
    %v652 = vunpack.c.h.b16 %v466
    %v653 = vunpack.c.l.b16 %v467
    %v654 = vunpack.c.h.b16 %v467
    %v655 = vunpack.c.l.b16 %v468
    %v656 = vunpack.c.h.b16 %v468
    %v657 = vunpack.c.l.b16 %v469
    %v658 = vunpack.c.h.b16 %v469
    %v659 = vunpack.c.l.b16 %v470
    %v660 = vunpack.c.h.b16 %v470
    %v661 = vunpack.c.l.b16 %v471
    %v662 = vunpack.c.h.b16 %v471
    %v663 = vunpack.c.l.b16 %v472
    %v664 = vunpack.c.h.b16 %v472
    %v665 = vpack.c.b16 %v541, %v537
    %v666 = vpack.c.b16 %v542, %v538
    %v667 = vpack.c.b16 %v543, %v539
    %v668 = vpack.c.b16 %v544, %v540
    %v669 = vpack.c.b16 %v549, %v545
    %v670 = vpack.c.b16 %v550, %v546
    %v671 = vpack.c.b16 %v551, %v547
    %v672 = vpack.c.b16 %v552, %v548
    %v673 = vpack.c.b16 %v557, %v553
    %v674 = vpack.c.b16 %v558, %v554
    %v675 = vpack.c.b16 %v559, %v555
    %v676 = vpack.c.b16 %v560, %v556
    %v677 = vpack.c.b16 %v565, %v561
    %v678 = vpack.c.b16 %v566, %v562
    %v679 = vpack.c.b16 %v567, %v563
    %v680 = vpack.c.b16 %v568, %v564
    %v681 = vpack.c.b16 %v573, %v569
    %v682 = vpack.c.b16 %v574, %v570
    %v683 = vpack.c.b16 %v575, %v571
    %v684 = vpack.c.b16 %v576, %v572
    %v685 = vpack.c.b16 %v581, %v577
    %v686 = vpack.c.b16 %v582, %v578
    %v687 = vpack.c.b16 %v583, %v579
    %v688 = vpack.c.b16 %v584, %v580
    %v689 = vpack.c.b16 %v589, %v585
    %v690 = vpack.c.b16 %v590, %v586
    %v691 = vpack.c.b16 %v591, %v587
    %v692 = vpack.c.b16 %v592, %v588
    %v693 = vpack.c.b16 %v597, %v593
    %v694 = vpack.c.b16 %v598, %v594
    %v695 = vpack.c.b16 %v599, %v595
    %v696 = vpack.c.b16 %v600, %v596
    %v697 = vpack.c.b16 %v605, %v601
    %v698 = vpack.c.b16 %v606, %v602
    %v699 = vpack.c.b16 %v607, %v603
    %v700 = vpack.c.b16 %v608, %v604
    %v701 = vpack.c.b16 %v613, %v609
    %v702 = vpack.c.b16 %v614, %v610
    %v703 = vpack.c.b16 %v615, %v611
    %v704 = vpack.c.b16 %v616, %v612
    %v705 = vpack.c.b16 %v621, %v617
    %v706 = vpack.c.b16 %v622, %v618
    %v707 = vpack.c.b16 %v623, %v619
    %v708 = vpack.c.b16 %v624, %v620
    %v709 = vpack.c.b16 %v629, %v625
    %v710 = vpack.c.b16 %v630, %v626
    %v711 = vpack.c.b16 %v631, %v627
    %v712 = vpack.c.b16 %v632, %v628
    %v713 = vpack.c.b16 %v637, %v633
    %v714 = vpack.c.b16 %v638, %v634
    %v715 = vpack.c.b16 %v639, %v635
    %v716 = vpack.c.b16 %v640, %v636
    %v717 = vpack.c.b16 %v645, %v641
    %v718 = vpack.c.b16 %v646, %v642
    %v719 = vpack.c.b16 %v647, %v643
    %v720 = vpack.c.b16 %v648, %v644
    %v721 = vpack.c.b16 %v653, %v649
    %v722 = vpack.c.b16 %v654, %v650
    %v723 = vpack.c.b16 %v655, %v651
    %v724 = vpack.c.b16 %v656, %v652
    %v725 = vpack.c.b16 %v661, %v657
    %v726 = vpack.c.b16 %v662, %v658
    %v727 = vpack.c.b16 %v663, %v659
    %v728 = vpack.c.b16 %v664, %v660
    %793 = vmatprep.subr.bf16.mxu0 %v666
    %794 = vmatpush1.bf16.msra.mxu0 %v665
    %795 = vmatprep.subr.bf16.mxu0 %v670
    %796 = vmatpush1.bf16.msra.mxu0 %v669
    %797 = vmatprep.subr.bf16.mxu0 %v674
    %798 = vmatpush1.bf16.msra.mxu0 %v673
    %799 = vmatprep.subr.bf16.mxu0 %v678
    %800 = vmatpush1.bf16.msra.mxu0 %v677
    %801 = vmatprep.subr.bf16.mxu0 %v682
    %802 = vmatpush1.bf16.msra.mxu0 %v681
    %803 = vmatprep.subr.bf16.mxu0 %v686
    %804 = vmatpush1.bf16.msra.mxu0 %v685
    %805 = vmatprep.subr.bf16.mxu0 %v690
    %806 = vmatpush1.bf16.msra.mxu0 %v689
    %807 = vmatprep.subr.bf16.mxu0 %v694
    %808 = vmatpush1.bf16.msra.mxu0 %v693
    %809 = vmatprep.subr.bf16.mxu0 %v698
    %810 = vmatpush1.bf16.msra.mxu0 %v697
    %811 = vmatprep.subr.bf16.mxu0 %v702
    %812 = vmatpush1.bf16.msra.mxu0 %v701
    %813 = vmatprep.subr.bf16.mxu0 %v706
    %814 = vmatpush1.bf16.msra.mxu0 %v705
    %815 = vmatprep.subr.bf16.mxu0 %v710
    %816 = vmatpush1.bf16.msra.mxu0 %v709
    %817 = vmatprep.subr.bf16.mxu0 %v714
    %818 = vmatpush1.bf16.msra.mxu0 %v713
    %819 = vmatprep.subr.bf16.mxu0 %v718
    %820 = vmatpush1.bf16.msra.mxu0 %v717
    %821 = vmatprep.subr.bf16.mxu0 %v722
    %822 = vmatpush1.bf16.msra.mxu0 %v721
    %823 = vmatprep.subr.bf16.mxu0 %v726
    %824 = vmatpush1.bf16.msra.mxu0 %v725
    %825 = vmatprep.mubr.bf16.mxu0 %v408
    %826 = vmatmul.mubr.bf16.gmra.mrb[0].mxu0 %v407
    %v827 = vpop.f32.mrb[0].mxu0
    %v828 = vadd.f32 0.0, %v827
    %v829 = vpop.f32.mrb[0].mxu0
    %v830 = vadd.f32 0.0, %v829
    %v831 = vpop.f32.mrb[0].mxu0
    %v832 = vpop.f32.mrb[0].mxu0
    %833 = vdwg.mxu0
    %834 = vmatprep.subr.bf16.mxu0 %v668
    %835 = vmatpush1.bf16.msra.mxu0 %v667
    %836 = vmatprep.subr.bf16.mxu0 %v672
    %837 = vmatpush1.bf16.msra.mxu0 %v671
    %838 = vmatprep.subr.bf16.mxu0 %v676
    %839 = vmatpush1.bf16.msra.mxu0 %v675
    %840 = vmatprep.subr.bf16.mxu0 %v680
    %841 = vmatpush1.bf16.msra.mxu0 %v679
    %842 = vmatprep.subr.bf16.mxu0 %v684
    %843 = vmatpush1.bf16.msra.mxu0 %v683
    %844 = vmatprep.subr.bf16.mxu0 %v688
    %845 = vmatpush1.bf16.msra.mxu0 %v687
    %846 = vmatprep.subr.bf16.mxu0 %v692
    %847 = vmatpush1.bf16.msra.mxu0 %v691
    %848 = vmatprep.subr.bf16.mxu0 %v696
    %849 = vmatpush1.bf16.msra.mxu0 %v695
    %850 = vmatprep.subr.bf16.mxu0 %v700
    %851 = vmatpush1.bf16.msra.mxu0 %v699
    %852 = vmatprep.subr.bf16.mxu0 %v704
    %853 = vmatpush1.bf16.msra.mxu0 %v703
    %854 = vmatprep.subr.bf16.mxu0 %v708
    %855 = vmatpush1.bf16.msra.mxu0 %v707
    %856 = vmatprep.subr.bf16.mxu0 %v712
    %857 = vmatpush1.bf16.msra.mxu0 %v711
    %858 = vmatprep.subr.bf16.mxu0 %v716
    %859 = vmatpush1.bf16.msra.mxu0 %v715
    %860 = vmatprep.subr.bf16.mxu0 %v720
    %861 = vmatpush1.bf16.msra.mxu0 %v719
    %862 = vmatprep.subr.bf16.mxu0 %v724
    %863 = vmatpush1.bf16.msra.mxu0 %v723
    %864 = vmatprep.subr.bf16.mxu0 %v728
    %865 = vmatpush1.bf16.msra.mxu0 %v727
    %866 = vmatprep.mubr.bf16.mxu0 %v408
    %867 = vmatmul.mubr.bf16.gmra.mrb[0].mxu0 %v407
    %v868 = vpop.f32.mrb[0].mxu0
    %v869 = vadd.f32 0.0, %v868
    %v870 = vpop.f32.mrb[0].mxu0
    %v871 = vadd.f32 0.0, %v870
    %v872 = vpop.f32.mrb[0].mxu0
    %v873 = vpop.f32.mrb[0].mxu0
    %874 = vdwg.mxu0
    %v875 = vrot.slane %v828, 4
    %v876 = vadd.f32 %v828, %v875
    %v877 = vrot.slane %v876, 2
    %v878 = vadd.f32 %v876, %v877
    %v879 = vrot.slane %v878, 1
    %v880 = vadd.f32 %v878, %v879
    %v881 = vrot.slane %v830, 4
    %v882 = vadd.f32 %v830, %v881
    %v883 = vrot.slane %v882, 2
    %v884 = vadd.f32 %v882, %v883
    %v885 = vrot.slane %v884, 1
    %v886 = vadd.f32 %v884, %v885
    %v887 = vrot.slane %v869, 4
    %v888 = vadd.f32 %v869, %v887
    %v889 = vrot.slane %v888, 2
    %v890 = vadd.f32 %v888, %v889
    %v891 = vrot.slane %v890, 1
    %v892 = vadd.f32 %v890, %v891
    %v893 = vrot.slane %v871, 4
    %v894 = vadd.f32 %v871, %v893
    %v895 = vrot.slane %v894, 2
    %v896 = vadd.f32 %v894, %v895
    %v897 = vrot.slane %v896, 1
    %v898 = vadd.f32 %v896, %v897
    %v899 = vmul.f32 %v880, %v348
    %v900 = vmul.f32 %v886, %v348
    %v901 = vmul.f32 %v892, %v348
    %v902 = vmul.f32 %v898, %v348
    %v903 = vsub.f32 %v828, %v899
    %v904 = vsub.f32 %v830, %v900
    %v905 = vsub.f32 %v869, %v901
    %v906 = vsub.f32 %v871, %v902
    %v907 = vmul.f32 %v903, %v903
    %v908 = vmul.f32 %v904, %v904
    %v909 = vmul.f32 %v905, %v905
    %v910 = vmul.f32 %v906, %v906
    %v911 = vrot.slane %v907, 4
    %v912 = vadd.f32 %v907, %v911
    %v913 = vrot.slane %v912, 2
    %v914 = vadd.f32 %v912, %v913
    %v915 = vrot.slane %v914, 1
    %v916 = vadd.f32 %v914, %v915
    %v917 = vrot.slane %v908, 4
    %v918 = vadd.f32 %v908, %v917
    %v919 = vrot.slane %v918, 2
    %v920 = vadd.f32 %v918, %v919
    %v921 = vrot.slane %v920, 1
    %v922 = vadd.f32 %v920, %v921
    %v923 = vrot.slane %v909, 4
    %v924 = vadd.f32 %v909, %v923
    %v925 = vrot.slane %v924, 2
    %v926 = vadd.f32 %v924, %v925
    %v927 = vrot.slane %v926, 1
    %v928 = vadd.f32 %v926, %v927
    %v929 = vrot.slane %v910, 4
    %v930 = vadd.f32 %v910, %v929
    %v931 = vrot.slane %v930, 2
    %v932 = vadd.f32 %v930, %v931
    %v933 = vrot.slane %v932, 1
    %v934 = vadd.f32 %v932, %v933
    %v935 = vmul.f32 %v916, %v348
    %v936 = vmul.f32 %v922, %v348
    %v937 = vmul.f32 %v928, %v348
    %v938 = vmul.f32 %v934, %v348
    %v939 = vadd.f32 %v935, 0.8
    %v940 = vadd.f32 %v936, 0.8
    %v941 = vadd.f32 %v937, 0.8
    %v942 = vadd.f32 %v938, 0.8
    %v943 = vrsqrt.pop %v939
    %v944 = vrsqrt.pop %v940
    %v945 = vrsqrt.pop %v941
    %v946 = vrsqrt.pop %v942
    %v947 = vmul.f32 %v903, %v943
    %v948 = vmul.f32 %v904, %v944
    %v949 = vmul.f32 %v905, %v945
    %v950 = vmul.f32 %v906, %v946
    %v952 = vlaneseq
    %v953 = vshrl.u32 %v952, 7
    %v954 = vsub.s32 0, %v953
    %v955 = vrot.slane %v122, %v954
    %v956 = vlaneseq
    %v957 = vshrl.u32 %v956, 7
    %v958 = vsub.s32 1, %v957
    %v959 = vrot.slane %v122, %v958
    %v960 = vlaneseq
    %v961 = vshrl.u32 %v960, 7
    %v962 = vsub.s32 2, %v961
    %v963 = vrot.slane %v122, %v962
    %v964 = vlaneseq
    %v965 = vshrl.u32 %v964, 7
    %v966 = vsub.s32 3, %v965
    %v967 = vrot.slane %v122, %v966
    %v972 = vmul.f32 %v947, %v955
    %v973 = vmul.f32 %v948, %v959
    %v974 = vmul.f32 %v949, %v963
    %v975 = vmul.f32 %v950, %v967
    %v977 = vlaneseq
    %v978 = vshrl.u32 %v977, 7
    %v979 = vsub.s32 0, %v978
    %v980 = vrot.slane %v123, %v979
    %v981 = vlaneseq
    %v982 = vshrl.u32 %v981, 7
    %v983 = vsub.s32 1, %v982
    %v984 = vrot.slane %v123, %v983
    %v985 = vlaneseq
    %v986 = vshrl.u32 %v985, 7
    %v987 = vsub.s32 2, %v986
    %v988 = vrot.slane %v123, %v987
    %v989 = vlaneseq
    %v990 = vshrl.u32 %v989, 7
    %v991 = vsub.s32 3, %v990
    %v992 = vrot.slane %v123, %v991
    %v997 = vadd.f32 %v972, %v980
    %v998 = vadd.f32 %v973, %v984
    %v999 = vadd.f32 %v974, %v988
    %v1000 = vadd.f32 %v975, %v992
    %vm1001 = vcmp.gt.f32.partialorder %v997, 0.0
    %vm1002 = vcmp.gt.f32.partialorder %v998, 0.0
    %vm1003 = vcmp.gt.f32.partialorder %v999, 0.0
    %vm1004 = vcmp.gt.f32.partialorder %v1000, 0.0
    %v1005 = vmul.f32 %v997, 0.2
    %v1006 = vmul.f32 %v998, 0.2
    %v1007 = vmul.f32 %v999, 0.2
    %v1008 = vmul.f32 %v1000, 0.2
    %v1009 = vsel %vm1001, %v997, %v1005
    %v1010 = vsel %vm1002, %v998, %v1006
    %v1011 = vsel %vm1003, %v999, %v1007
    %v1012 = vsel %vm1004, %v1000, %v1008
    %v1013 = vpack.c.bf16 %v1009, %v1009
    %v1014 = vpack.c.bf16 %v1010, %v1010
    %v1015 = vpack.c.bf16 %v1011, %v1011
    %v1016 = vpack.c.bf16 %v1012, %v1012
    %v1017 = vld [vmem:[#allocation10] sm:$0xff]
    %v1018 = vld [vmem:[#allocation10 + $0x8] sm:$0xff]
    %v1019 = vld [vmem:[#allocation10 + $0x10] sm:$0xff]
    %v1020 = vld [vmem:[#allocation10 + $0x18] sm:$0xff]
    %v1021 = vld [vmem:[#allocation10 + $0x20] sm:$0xff]
    %v1022 = vld [vmem:[#allocation10 + $0x28] sm:$0xff]
    %v1023 = vld [vmem:[#allocation10 + $0x30] sm:$0xff]
    %v1024 = vld [vmem:[#allocation10 + $0x38] sm:$0xff]
    %v1025 = vld [vmem:[#allocation10 + $0x40] sm:$0xff]
    %v1026 = vld [vmem:[#allocation10 + $0x48] sm:$0xff]
    %v1027 = vld [vmem:[#allocation10 + $0x50] sm:$0xff]
    %v1028 = vld [vmem:[#allocation10 + $0x58] sm:$0xff]
    %v1029 = vld [vmem:[#allocation10 + $0x60] sm:$0xff]
    %v1030 = vld [vmem:[#allocation10 + $0x68] sm:$0xff]
    %v1031 = vld [vmem:[#allocation10 + $0x70] sm:$0xff]
    %v1032 = vld [vmem:[#allocation10 + $0x78] sm:$0xff]
    %v1033 = vld [vmem:[#allocation10 + $0x80] sm:$0xff]
    %v1034 = vld [vmem:[#allocation10 + $0x88] sm:$0xff]
    %v1035 = vld [vmem:[#allocation10 + $0x90] sm:$0xff]
    %v1036 = vld [vmem:[#allocation10 + $0x98] sm:$0xff]
    %v1037 = vld [vmem:[#allocation10 + $0xa0] sm:$0xff]
    %v1038 = vld [vmem:[#allocation10 + $0xa8] sm:$0xff]
    %v1039 = vld [vmem:[#allocation10 + $0xb0] sm:$0xff]
    %v1040 = vld [vmem:[#allocation10 + $0xb8] sm:$0xff]
    %v1041 = vld [vmem:[#allocation10 + $0xc0] sm:$0xff]
    %v1042 = vld [vmem:[#allocation10 + $0xc8] sm:$0xff]
    %v1043 = vld [vmem:[#allocation10 + $0xd0] sm:$0xff]
    %v1044 = vld [vmem:[#allocation10 + $0xd8] sm:$0xff]
    %v1045 = vld [vmem:[#allocation10 + $0xe0] sm:$0xff]
    %v1046 = vld [vmem:[#allocation10 + $0xe8] sm:$0xff]
    %v1047 = vld [vmem:[#allocation10 + $0xf0] sm:$0xff]
    %v1048 = vld [vmem:[#allocation10 + $0xf8] sm:$0xff]
    %v1049 = vld [vmem:[#allocation10 + $0x100] sm:$0xff]
    %v1050 = vld [vmem:[#allocation10 + $0x108] sm:$0xff]
    %v1051 = vld [vmem:[#allocation10 + $0x110] sm:$0xff]
    %v1052 = vld [vmem:[#allocation10 + $0x118] sm:$0xff]
    %v1053 = vld [vmem:[#allocation10 + $0x120] sm:$0xff]
    %v1054 = vld [vmem:[#allocation10 + $0x128] sm:$0xff]
    %v1055 = vld [vmem:[#allocation10 + $0x130] sm:$0xff]
    %v1056 = vld [vmem:[#allocation10 + $0x138] sm:$0xff]
    %v1057 = vld [vmem:[#allocation10 + $0x140] sm:$0xff]
    %v1058 = vld [vmem:[#allocation10 + $0x148] sm:$0xff]
    %v1059 = vld [vmem:[#allocation10 + $0x150] sm:$0xff]
    %v1060 = vld [vmem:[#allocation10 + $0x158] sm:$0xff]
    %v1061 = vld [vmem:[#allocation10 + $0x160] sm:$0xff]
    %v1062 = vld [vmem:[#allocation10 + $0x168] sm:$0xff]
    %v1063 = vld [vmem:[#allocation10 + $0x170] sm:$0xff]
    %v1064 = vld [vmem:[#allocation10 + $0x178] sm:$0xff]
    %v1065 = vld [vmem:[#allocation10 + $0x180] sm:$0xff]
    %v1066 = vld [vmem:[#allocation10 + $0x188] sm:$0xff]
    %v1067 = vld [vmem:[#allocation10 + $0x190] sm:$0xff]
    %v1068 = vld [vmem:[#allocation10 + $0x198] sm:$0xff]
    %v1069 = vld [vmem:[#allocation10 + $0x1a0] sm:$0xff]
    %v1070 = vld [vmem:[#allocation10 + $0x1a8] sm:$0xff]
    %v1071 = vld [vmem:[#allocation10 + $0x1b0] sm:$0xff]
    %v1072 = vld [vmem:[#allocation10 + $0x1b8] sm:$0xff]
    %v1073 = vld [vmem:[#allocation10 + $0x1c0] sm:$0xff]
    %v1074 = vld [vmem:[#allocation10 + $0x1c8] sm:$0xff]
    %v1075 = vld [vmem:[#allocation10 + $0x1d0] sm:$0xff]
    %v1076 = vld [vmem:[#allocation10 + $0x1d8] sm:$0xff]
    %v1077 = vld [vmem:[#allocation10 + $0x1e0] sm:$0xff]
    %v1078 = vld [vmem:[#allocation10 + $0x1e8] sm:$0xff]
    %v1079 = vld [vmem:[#allocation10 + $0x1f0] sm:$0xff]
    %v1080 = vld [vmem:[#allocation10 + $0x1f8] sm:$0xff]
    %v1081 = vld [vmem:[#allocation10 + $0x200] sm:$0xff]
    %v1082 = vld [vmem:[#allocation10 + $0x208] sm:$0xff]
    %v1083 = vld [vmem:[#allocation10 + $0x210] sm:$0xff]
    %v1084 = vld [vmem:[#allocation10 + $0x218] sm:$0xff]
    %v1085 = vld [vmem:[#allocation10 + $0x220] sm:$0xff]
    %v1086 = vld [vmem:[#allocation10 + $0x228] sm:$0xff]
    %v1087 = vld [vmem:[#allocation10 + $0x230] sm:$0xff]
    %v1088 = vld [vmem:[#allocation10 + $0x238] sm:$0xff]
    %v1089 = vld [vmem:[#allocation10 + $0x240] sm:$0xff]
    %v1090 = vld [vmem:[#allocation10 + $0x248] sm:$0xff]
    %v1091 = vld [vmem:[#allocation10 + $0x250] sm:$0xff]
    %v1092 = vld [vmem:[#allocation10 + $0x258] sm:$0xff]
    %v1093 = vld [vmem:[#allocation10 + $0x260] sm:$0xff]
    %v1094 = vld [vmem:[#allocation10 + $0x268] sm:$0xff]
    %v1095 = vld [vmem:[#allocation10 + $0x270] sm:$0xff]
    %v1096 = vld [vmem:[#allocation10 + $0x278] sm:$0xff]
    %v1097 = vld [vmem:[#allocation10 + $0x280] sm:$0xff]
    %v1098 = vld [vmem:[#allocation10 + $0x288] sm:$0xff]
    %v1099 = vld [vmem:[#allocation10 + $0x290] sm:$0xff]
    %v1100 = vld [vmem:[#allocation10 + $0x298] sm:$0xff]
    %v1101 = vld [vmem:[#allocation10 + $0x2a0] sm:$0xff]
    %v1102 = vld [vmem:[#allocation10 + $0x2a8] sm:$0xff]
    %v1103 = vld [vmem:[#allocation10 + $0x2b0] sm:$0xff]
    %v1104 = vld [vmem:[#allocation10 + $0x2b8] sm:$0xff]
    %v1105 = vld [vmem:[#allocation10 + $0x2c0] sm:$0xff]
    %v1106 = vld [vmem:[#allocation10 + $0x2c8] sm:$0xff]
    %v1107 = vld [vmem:[#allocation10 + $0x2d0] sm:$0xff]
    %v1108 = vld [vmem:[#allocation10 + $0x2d8] sm:$0xff]
    %v1109 = vld [vmem:[#allocation10 + $0x2e0] sm:$0xff]
    %v1110 = vld [vmem:[#allocation10 + $0x2e8] sm:$0xff]
    %v1111 = vld [vmem:[#allocation10 + $0x2f0] sm:$0xff]
    %v1112 = vld [vmem:[#allocation10 + $0x2f8] sm:$0xff]
    %v1113 = vld [vmem:[#allocation10 + $0x300] sm:$0xff]
    %v1114 = vld [vmem:[#allocation10 + $0x308] sm:$0xff]
    %v1115 = vld [vmem:[#allocation10 + $0x310] sm:$0xff]
    %v1116 = vld [vmem:[#allocation10 + $0x318] sm:$0xff]
    %v1117 = vld [vmem:[#allocation10 + $0x320] sm:$0xff]
    %v1118 = vld [vmem:[#allocation10 + $0x328] sm:$0xff]
    %v1119 = vld [vmem:[#allocation10 + $0x330] sm:$0xff]
    %v1120 = vld [vmem:[#allocation10 + $0x338] sm:$0xff]
    %v1121 = vld [vmem:[#allocation10 + $0x340] sm:$0xff]
    %v1122 = vld [vmem:[#allocation10 + $0x348] sm:$0xff]
    %v1123 = vld [vmem:[#allocation10 + $0x350] sm:$0xff]
    %v1124 = vld [vmem:[#allocation10 + $0x358] sm:$0xff]
    %v1125 = vld [vmem:[#allocation10 + $0x360] sm:$0xff]
    %v1126 = vld [vmem:[#allocation10 + $0x368] sm:$0xff]
    %v1127 = vld [vmem:[#allocation10 + $0x370] sm:$0xff]
    %v1128 = vld [vmem:[#allocation10 + $0x378] sm:$0xff]
    %v1129 = vld [vmem:[#allocation10 + $0x380] sm:$0xff]
    %v1130 = vld [vmem:[#allocation10 + $0x388] sm:$0xff]
    %v1131 = vld [vmem:[#allocation10 + $0x390] sm:$0xff]
    %v1132 = vld [vmem:[#allocation10 + $0x398] sm:$0xff]
    %v1133 = vld [vmem:[#allocation10 + $0x3a0] sm:$0xff]
    %v1134 = vld [vmem:[#allocation10 + $0x3a8] sm:$0xff]
    %v1135 = vld [vmem:[#allocation10 + $0x3b0] sm:$0xff]
    %v1136 = vld [vmem:[#allocation10 + $0x3b8] sm:$0xff]
    %v1137 = vld [vmem:[#allocation10 + $0x3c0] sm:$0xff]
    %v1138 = vld [vmem:[#allocation10 + $0x3c8] sm:$0xff]
    %v1139 = vld [vmem:[#allocation10 + $0x3d0] sm:$0xff]
    %v1140 = vld [vmem:[#allocation10 + $0x3d8] sm:$0xff]
    %v1141 = vld [vmem:[#allocation10 + $0x3e0] sm:$0xff]
    %v1142 = vld [vmem:[#allocation10 + $0x3e8] sm:$0xff]
    %v1143 = vld [vmem:[#allocation10 + $0x3f0] sm:$0xff]
    %v1144 = vld [vmem:[#allocation10 + $0x3f8] sm:$0xff]
    %v1145 = vld [vmem:[#allocation10 + $0x400] sm:$0xff]
    %v1146 = vld [vmem:[#allocation10 + $0x408] sm:$0xff]
    %v1147 = vld [vmem:[#allocation10 + $0x410] sm:$0xff]
    %v1148 = vld [vmem:[#allocation10 + $0x418] sm:$0xff]
    %v1149 = vld [vmem:[#allocation10 + $0x420] sm:$0xff]
    %v1150 = vld [vmem:[#allocation10 + $0x428] sm:$0xff]
    %v1151 = vld [vmem:[#allocation10 + $0x430] sm:$0xff]
    %v1152 = vld [vmem:[#allocation10 + $0x438] sm:$0xff]
    %v1153 = vld [vmem:[#allocation10 + $0x440] sm:$0xff]
    %v1154 = vld [vmem:[#allocation10 + $0x448] sm:$0xff]
    %v1155 = vld [vmem:[#allocation10 + $0x450] sm:$0xff]
    %v1156 = vld [vmem:[#allocation10 + $0x458] sm:$0xff]
    %v1157 = vld [vmem:[#allocation10 + $0x460] sm:$0xff]
    %v1158 = vld [vmem:[#allocation10 + $0x468] sm:$0xff]
    %v1159 = vld [vmem:[#allocation10 + $0x470] sm:$0xff]
    %v1160 = vld [vmem:[#allocation10 + $0x478] sm:$0xff]
    %v1161 = vld [vmem:[#allocation10 + $0x480] sm:$0xff]
    %v1162 = vld [vmem:[#allocation10 + $0x488] sm:$0xff]
    %v1163 = vld [vmem:[#allocation10 + $0x490] sm:$0xff]
    %v1164 = vld [vmem:[#allocation10 + $0x498] sm:$0xff]
    %v1165 = vld [vmem:[#allocation10 + $0x4a0] sm:$0xff]
    %v1166 = vld [vmem:[#allocation10 + $0x4a8] sm:$0xff]
    %v1167 = vld [vmem:[#allocation10 + $0x4b0] sm:$0xff]
    %v1168 = vld [vmem:[#allocation10 + $0x4b8] sm:$0xff]
    %v1169 = vld [vmem:[#allocation10 + $0x4c0] sm:$0xff]
    %v1170 = vld [vmem:[#allocation10 + $0x4c8] sm:$0xff]
    %v1171 = vld [vmem:[#allocation10 + $0x4d0] sm:$0xff]
    %v1172 = vld [vmem:[#allocation10 + $0x4d8] sm:$0xff]
    %v1173 = vld [vmem:[#allocation10 + $0x4e0] sm:$0xff]
    %v1174 = vld [vmem:[#allocation10 + $0x4e8] sm:$0xff]
    %v1175 = vld [vmem:[#allocation10 + $0x4f0] sm:$0xff]
    %v1176 = vld [vmem:[#allocation10 + $0x4f8] sm:$0xff]
    %v1177 = vld [vmem:[#allocation10 + $0x500] sm:$0xff]
    %v1178 = vld [vmem:[#allocation10 + $0x508] sm:$0xff]
    %v1179 = vld [vmem:[#allocation10 + $0x510] sm:$0xff]
    %v1180 = vld [vmem:[#allocation10 + $0x518] sm:$0xff]
    %v1181 = vld [vmem:[#allocation10 + $0x520] sm:$0xff]
    %v1182 = vld [vmem:[#allocation10 + $0x528] sm:$0xff]
    %v1183 = vld [vmem:[#allocation10 + $0x530] sm:$0xff]
    %v1184 = vld [vmem:[#allocation10 + $0x538] sm:$0xff]
    %v1185 = vld [vmem:[#allocation10 + $0x540] sm:$0xff]
    %v1186 = vld [vmem:[#allocation10 + $0x548] sm:$0xff]
    %v1187 = vld [vmem:[#allocation10 + $0x550] sm:$0xff]
    %v1188 = vld [vmem:[#allocation10 + $0x558] sm:$0xff]
    %v1189 = vld [vmem:[#allocation10 + $0x560] sm:$0xff]
    %v1190 = vld [vmem:[#allocation10 + $0x568] sm:$0xff]
    %v1191 = vld [vmem:[#allocation10 + $0x570] sm:$0xff]
    %v1192 = vld [vmem:[#allocation10 + $0x578] sm:$0xff]
    %v1193 = vld [vmem:[#allocation10 + $0x580] sm:$0xff]
    %v1194 = vld [vmem:[#allocation10 + $0x588] sm:$0xff]
    %v1195 = vld [vmem:[#allocation10 + $0x590] sm:$0xff]
    %v1196 = vld [vmem:[#allocation10 + $0x598] sm:$0xff]
    %v1197 = vld [vmem:[#allocation10 + $0x5a0] sm:$0xff]
    %v1198 = vld [vmem:[#allocation10 + $0x5a8] sm:$0xff]
    %v1199 = vld [vmem:[#allocation10 + $0x5b0] sm:$0xff]
    %v1200 = vld [vmem:[#allocation10 + $0x5b8] sm:$0xff]
    %v1201 = vld [vmem:[#allocation10 + $0x5c0] sm:$0xff]
    %v1202 = vld [vmem:[#allocation10 + $0x5c8] sm:$0xff]
    %v1203 = vld [vmem:[#allocation10 + $0x5d0] sm:$0xff]
    %v1204 = vld [vmem:[#allocation10 + $0x5d8] sm:$0xff]
    %v1205 = vld [vmem:[#allocation10 + $0x5e0] sm:$0xff]
    %v1206 = vld [vmem:[#allocation10 + $0x5e8] sm:$0xff]
    %v1207 = vld [vmem:[#allocation10 + $0x5f0] sm:$0xff]
    %v1208 = vld [vmem:[#allocation10 + $0x5f8] sm:$0xff]
    %v1209 = vld [vmem:[#allocation10 + $0x600] sm:$0xff]
    %v1210 = vld [vmem:[#allocation10 + $0x608] sm:$0xff]
    %v1211 = vld [vmem:[#allocation10 + $0x610] sm:$0xff]
    %v1212 = vld [vmem:[#allocation10 + $0x618] sm:$0xff]
    %v1213 = vld [vmem:[#allocation10 + $0x620] sm:$0xff]
    %v1214 = vld [vmem:[#allocation10 + $0x628] sm:$0xff]
    %v1215 = vld [vmem:[#allocation10 + $0x630] sm:$0xff]
    %v1216 = vld [vmem:[#allocation10 + $0x638] sm:$0xff]
    %v1217 = vld [vmem:[#allocation10 + $0x640] sm:$0xff]
    %v1218 = vld [vmem:[#allocation10 + $0x648] sm:$0xff]
    %v1219 = vld [vmem:[#allocation10 + $0x650] sm:$0xff]
    %v1220 = vld [vmem:[#allocation10 + $0x658] sm:$0xff]
    %v1221 = vld [vmem:[#allocation10 + $0x660] sm:$0xff]
    %v1222 = vld [vmem:[#allocation10 + $0x668] sm:$0xff]
    %v1223 = vld [vmem:[#allocation10 + $0x670] sm:$0xff]
    %v1224 = vld [vmem:[#allocation10 + $0x678] sm:$0xff]
    %v1225 = vld [vmem:[#allocation10 + $0x680] sm:$0xff]
    %v1226 = vld [vmem:[#allocation10 + $0x688] sm:$0xff]
    %v1227 = vld [vmem:[#allocation10 + $0x690] sm:$0xff]
    %v1228 = vld [vmem:[#allocation10 + $0x698] sm:$0xff]
    %v1229 = vld [vmem:[#allocation10 + $0x6a0] sm:$0xff]
    %v1230 = vld [vmem:[#allocation10 + $0x6a8] sm:$0xff]
    %v1231 = vld [vmem:[#allocation10 + $0x6b0] sm:$0xff]
    %v1232 = vld [vmem:[#allocation10 + $0x6b8] sm:$0xff]
    %v1233 = vld [vmem:[#allocation10 + $0x6c0] sm:$0xff]
    %v1234 = vld [vmem:[#allocation10 + $0x6c8] sm:$0xff]
    %v1235 = vld [vmem:[#allocation10 + $0x6d0] sm:$0xff]
    %v1236 = vld [vmem:[#allocation10 + $0x6d8] sm:$0xff]
    %v1237 = vld [vmem:[#allocation10 + $0x6e0] sm:$0xff]
    %v1238 = vld [vmem:[#allocation10 + $0x6e8] sm:$0xff]
    %v1239 = vld [vmem:[#allocation10 + $0x6f0] sm:$0xff]
    %v1240 = vld [vmem:[#allocation10 + $0x6f8] sm:$0xff]
    %v1241 = vld [vmem:[#allocation10 + $0x700] sm:$0xff]
    %v1242 = vld [vmem:[#allocation10 + $0x708] sm:$0xff]
    %v1243 = vld [vmem:[#allocation10 + $0x710] sm:$0xff]
    %v1244 = vld [vmem:[#allocation10 + $0x718] sm:$0xff]
    %v1245 = vld [vmem:[#allocation10 + $0x720] sm:$0xff]
    %v1246 = vld [vmem:[#allocation10 + $0x728] sm:$0xff]
    %v1247 = vld [vmem:[#allocation10 + $0x730] sm:$0xff]
    %v1248 = vld [vmem:[#allocation10 + $0x738] sm:$0xff]
    %v1249 = vld [vmem:[#allocation10 + $0x740] sm:$0xff]
    %v1250 = vld [vmem:[#allocation10 + $0x748] sm:$0xff]
    %v1251 = vld [vmem:[#allocation10 + $0x750] sm:$0xff]
    %v1252 = vld [vmem:[#allocation10 + $0x758] sm:$0xff]
    %v1253 = vld [vmem:[#allocation10 + $0x760] sm:$0xff]
    %v1254 = vld [vmem:[#allocation10 + $0x768] sm:$0xff]
    %v1255 = vld [vmem:[#allocation10 + $0x770] sm:$0xff]
    %v1256 = vld [vmem:[#allocation10 + $0x778] sm:$0xff]
    %v1257 = vld [vmem:[#allocation10 + $0x780] sm:$0xff]
    %v1258 = vld [vmem:[#allocation10 + $0x788] sm:$0xff]
    %v1259 = vld [vmem:[#allocation10 + $0x790] sm:$0xff]
    %v1260 = vld [vmem:[#allocation10 + $0x798] sm:$0xff]
    %v1261 = vld [vmem:[#allocation10 + $0x7a0] sm:$0xff]
    %v1262 = vld [vmem:[#allocation10 + $0x7a8] sm:$0xff]
    %v1263 = vld [vmem:[#allocation10 + $0x7b0] sm:$0xff]
    %v1264 = vld [vmem:[#allocation10 + $0x7b8] sm:$0xff]
    %v1265 = vld [vmem:[#allocation10 + $0x7c0] sm:$0xff]
    %v1266 = vld [vmem:[#allocation10 + $0x7c8] sm:$0xff]
    %v1267 = vld [vmem:[#allocation10 + $0x7d0] sm:$0xff]
    %v1268 = vld [vmem:[#allocation10 + $0x7d8] sm:$0xff]
    %v1269 = vld [vmem:[#allocation10 + $0x7e0] sm:$0xff]
    %v1270 = vld [vmem:[#allocation10 + $0x7e8] sm:$0xff]
    %v1271 = vld [vmem:[#allocation10 + $0x7f0] sm:$0xff]
    %v1272 = vld [vmem:[#allocation10 + $0x7f8] sm:$0xff]
    %v1529 = vunpack.c.l.b16 %v1017
    %v1530 = vunpack.c.h.b16 %v1017
    %v1531 = vunpack.c.l.b16 %v1018
    %v1532 = vunpack.c.h.b16 %v1018
    %v1533 = vunpack.c.l.b16 %v1019
    %v1534 = vunpack.c.h.b16 %v1019
    %v1535 = vunpack.c.l.b16 %v1020
    %v1536 = vunpack.c.h.b16 %v1020
    %v1537 = vunpack.c.l.b16 %v1021
    %v1538 = vunpack.c.h.b16 %v1021
    %v1539 = vunpack.c.l.b16 %v1022
    %v1540 = vunpack.c.h.b16 %v1022
    %v1541 = vunpack.c.l.b16 %v1023
    %v1542 = vunpack.c.h.b16 %v1023
    %v1543 = vunpack.c.l.b16 %v1024
    %v1544 = vunpack.c.h.b16 %v1024
    %v1545 = vunpack.c.l.b16 %v1025
    %v1546 = vunpack.c.h.b16 %v1025
    %v1547 = vunpack.c.l.b16 %v1026
    %v1548 = vunpack.c.h.b16 %v1026
    %v1549 = vunpack.c.l.b16 %v1027
    %v1550 = vunpack.c.h.b16 %v1027
    %v1551 = vunpack.c.l.b16 %v1028
    %v1552 = vunpack.c.h.b16 %v1028
    %v1553 = vunpack.c.l.b16 %v1029
    %v1554 = vunpack.c.h.b16 %v1029
    %v1555 = vunpack.c.l.b16 %v1030
    %v1556 = vunpack.c.h.b16 %v1030
    %v1557 = vunpack.c.l.b16 %v1031
    %v1558 = vunpack.c.h.b16 %v1031
    %v1559 = vunpack.c.l.b16 %v1032
    %v1560 = vunpack.c.h.b16 %v1032
    %v1561 = vunpack.c.l.b16 %v1033
    %v1562 = vunpack.c.h.b16 %v1033
    %v1563 = vunpack.c.l.b16 %v1034
    %v1564 = vunpack.c.h.b16 %v1034
    %v1565 = vunpack.c.l.b16 %v1035
    %v1566 = vunpack.c.h.b16 %v1035
    %v1567 = vunpack.c.l.b16 %v1036
    %v1568 = vunpack.c.h.b16 %v1036
    %v1569 = vunpack.c.l.b16 %v1037
    %v1570 = vunpack.c.h.b16 %v1037
    %v1571 = vunpack.c.l.b16 %v1038
    %v1572 = vunpack.c.h.b16 %v1038
    %v1573 = vunpack.c.l.b16 %v1039
    %v1574 = vunpack.c.h.b16 %v1039
    %v1575 = vunpack.c.l.b16 %v1040
    %v1576 = vunpack.c.h.b16 %v1040
    %v1577 = vunpack.c.l.b16 %v1041
    %v1578 = vunpack.c.h.b16 %v1041
    %v1579 = vunpack.c.l.b16 %v1042
    %v1580 = vunpack.c.h.b16 %v1042
    %v1581 = vunpack.c.l.b16 %v1043
    %v1582 = vunpack.c.h.b16 %v1043
    %v1583 = vunpack.c.l.b16 %v1044
    %v1584 = vunpack.c.h.b16 %v1044
    %v1585 = vunpack.c.l.b16 %v1045
    %v1586 = vunpack.c.h.b16 %v1045
    %v1587 = vunpack.c.l.b16 %v1046
    %v1588 = vunpack.c.h.b16 %v1046
    %v1589 = vunpack.c.l.b16 %v1047
    %v1590 = vunpack.c.h.b16 %v1047
    %v1591 = vunpack.c.l.b16 %v1048
    %v1592 = vunpack.c.h.b16 %v1048
    %v1593 = vunpack.c.l.b16 %v1049
    %v1594 = vunpack.c.h.b16 %v1049
    %v1595 = vunpack.c.l.b16 %v1050
    %v1596 = vunpack.c.h.b16 %v1050
    %v1597 = vunpack.c.l.b16 %v1051
    %v1598 = vunpack.c.h.b16 %v1051
    %v1599 = vunpack.c.l.b16 %v1052
    %v1600 = vunpack.c.h.b16 %v1052
    %v1601 = vunpack.c.l.b16 %v1053
    %v1602 = vunpack.c.h.b16 %v1053
    %v1603 = vunpack.c.l.b16 %v1054
    %v1604 = vunpack.c.h.b16 %v1054
    %v1605 = vunpack.c.l.b16 %v1055
    %v1606 = vunpack.c.h.b16 %v1055
    %v1607 = vunpack.c.l.b16 %v1056
    %v1608 = vunpack.c.h.b16 %v1056
    %v1609 = vunpack.c.l.b16 %v1057
    %v1610 = vunpack.c.h.b16 %v1057
    %v1611 = vunpack.c.l.b16 %v1058
    %v1612 = vunpack.c.h.b16 %v1058
    %v1613 = vunpack.c.l.b16 %v1059
    %v1614 = vunpack.c.h.b16 %v1059
    %v1615 = vunpack.c.l.b16 %v1060
    %v1616 = vunpack.c.h.b16 %v1060
    %v1617 = vunpack.c.l.b16 %v1061
    %v1618 = vunpack.c.h.b16 %v1061
    %v1619 = vunpack.c.l.b16 %v1062
    %v1620 = vunpack.c.h.b16 %v1062
    %v1621 = vunpack.c.l.b16 %v1063
    %v1622 = vunpack.c.h.b16 %v1063
    %v1623 = vunpack.c.l.b16 %v1064
    %v1624 = vunpack.c.h.b16 %v1064
    %v1625 = vunpack.c.l.b16 %v1065
    %v1626 = vunpack.c.h.b16 %v1065
    %v1627 = vunpack.c.l.b16 %v1066
    %v1628 = vunpack.c.h.b16 %v1066
    %v1629 = vunpack.c.l.b16 %v1067
    %v1630 = vunpack.c.h.b16 %v1067
    %v1631 = vunpack.c.l.b16 %v1068
    %v1632 = vunpack.c.h.b16 %v1068
    %v1633 = vunpack.c.l.b16 %v1069
    %v1634 = vunpack.c.h.b16 %v1069
    %v1635 = vunpack.c.l.b16 %v1070
    %v1636 = vunpack.c.h.b16 %v1070
    %v1637 = vunpack.c.l.b16 %v1071
    %v1638 = vunpack.c.h.b16 %v1071
    %v1639 = vunpack.c.l.b16 %v1072
    %v1640 = vunpack.c.h.b16 %v1072
    %v1641 = vunpack.c.l.b16 %v1073
    %v1642 = vunpack.c.h.b16 %v1073
    %v1643 = vunpack.c.l.b16 %v1074
    %v1644 = vunpack.c.h.b16 %v1074
    %v1645 = vunpack.c.l.b16 %v1075
    %v1646 = vunpack.c.h.b16 %v1075
    %v1647 = vunpack.c.l.b16 %v1076
    %v1648 = vunpack.c.h.b16 %v1076
    %v1649 = vunpack.c.l.b16 %v1077
    %v1650 = vunpack.c.h.b16 %v1077
    %v1651 = vunpack.c.l.b16 %v1078
    %v1652 = vunpack.c.h.b16 %v1078
    %v1653 = vunpack.c.l.b16 %v1079
    %v1654 = vunpack.c.h.b16 %v1079
    %v1655 = vunpack.c.l.b16 %v1080
    %v1656 = vunpack.c.h.b16 %v1080
    %v1657 = vunpack.c.l.b16 %v1081
    %v1658 = vunpack.c.h.b16 %v1081
    %v1659 = vunpack.c.l.b16 %v1082
    %v1660 = vunpack.c.h.b16 %v1082
    %v1661 = vunpack.c.l.b16 %v1083
    %v1662 = vunpack.c.h.b16 %v1083
    %v1663 = vunpack.c.l.b16 %v1084
    %v1664 = vunpack.c.h.b16 %v1084
    %v1665 = vunpack.c.l.b16 %v1085
    %v1666 = vunpack.c.h.b16 %v1085
    %v1667 = vunpack.c.l.b16 %v1086
    %v1668 = vunpack.c.h.b16 %v1086
    %v1669 = vunpack.c.l.b16 %v1087
    %v1670 = vunpack.c.h.b16 %v1087
    %v1671 = vunpack.c.l.b16 %v1088
    %v1672 = vunpack.c.h.b16 %v1088
    %v1673 = vunpack.c.l.b16 %v1089
    %v1674 = vunpack.c.h.b16 %v1089
    %v1675 = vunpack.c.l.b16 %v1090
    %v1676 = vunpack.c.h.b16 %v1090
    %v1677 = vunpack.c.l.b16 %v1091
    %v1678 = vunpack.c.h.b16 %v1091
    %v1679 = vunpack.c.l.b16 %v1092
    %v1680 = vunpack.c.h.b16 %v1092
    %v1681 = vunpack.c.l.b16 %v1093
    %v1682 = vunpack.c.h.b16 %v1093
    %v1683 = vunpack.c.l.b16 %v1094
    %v1684 = vunpack.c.h.b16 %v1094
    %v1685 = vunpack.c.l.b16 %v1095
    %v1686 = vunpack.c.h.b16 %v1095
    %v1687 = vunpack.c.l.b16 %v1096
    %v1688 = vunpack.c.h.b16 %v1096
    %v1689 = vunpack.c.l.b16 %v1097
    %v1690 = vunpack.c.h.b16 %v1097
    %v1691 = vunpack.c.l.b16 %v1098
    %v1692 = vunpack.c.h.b16 %v1098
    %v1693 = vunpack.c.l.b16 %v1099
    %v1694 = vunpack.c.h.b16 %v1099
    %v1695 = vunpack.c.l.b16 %v1100
    %v1696 = vunpack.c.h.b16 %v1100
    %v1697 = vunpack.c.l.b16 %v1101
    %v1698 = vunpack.c.h.b16 %v1101
    %v1699 = vunpack.c.l.b16 %v1102
    %v1700 = vunpack.c.h.b16 %v1102
    %v1701 = vunpack.c.l.b16 %v1103
    %v1702 = vunpack.c.h.b16 %v1103
    %v1703 = vunpack.c.l.b16 %v1104
    %v1704 = vunpack.c.h.b16 %v1104
    %v1705 = vunpack.c.l.b16 %v1105
    %v1706 = vunpack.c.h.b16 %v1105
    %v1707 = vunpack.c.l.b16 %v1106
    %v1708 = vunpack.c.h.b16 %v1106
    %v1709 = vunpack.c.l.b16 %v1107
    %v1710 = vunpack.c.h.b16 %v1107
    %v1711 = vunpack.c.l.b16 %v1108
    %v1712 = vunpack.c.h.b16 %v1108
    %v1713 = vunpack.c.l.b16 %v1109
    %v1714 = vunpack.c.h.b16 %v1109
    %v1715 = vunpack.c.l.b16 %v1110
    %v1716 = vunpack.c.h.b16 %v1110
    %v1717 = vunpack.c.l.b16 %v1111
    %v1718 = vunpack.c.h.b16 %v1111
    %v1719 = vunpack.c.l.b16 %v1112
    %v1720 = vunpack.c.h.b16 %v1112
    %v1721 = vunpack.c.l.b16 %v1113
    %v1722 = vunpack.c.h.b16 %v1113
    %v1723 = vunpack.c.l.b16 %v1114
    %v1724 = vunpack.c.h.b16 %v1114
    %v1725 = vunpack.c.l.b16 %v1115
    %v1726 = vunpack.c.h.b16 %v1115
    %v1727 = vunpack.c.l.b16 %v1116
    %v1728 = vunpack.c.h.b16 %v1116
    %v1729 = vunpack.c.l.b16 %v1117
    %v1730 = vunpack.c.h.b16 %v1117
    %v1731 = vunpack.c.l.b16 %v1118
    %v1732 = vunpack.c.h.b16 %v1118
    %v1733 = vunpack.c.l.b16 %v1119
    %v1734 = vunpack.c.h.b16 %v1119
    %v1735 = vunpack.c.l.b16 %v1120
    %v1736 = vunpack.c.h.b16 %v1120
    %v1737 = vunpack.c.l.b16 %v1121
    %v1738 = vunpack.c.h.b16 %v1121
    %v1739 = vunpack.c.l.b16 %v1122
    %v1740 = vunpack.c.h.b16 %v1122
    %v1741 = vunpack.c.l.b16 %v1123
    %v1742 = vunpack.c.h.b16 %v1123
    %v1743 = vunpack.c.l.b16 %v1124
    %v1744 = vunpack.c.h.b16 %v1124
    %v1745 = vunpack.c.l.b16 %v1125
    %v1746 = vunpack.c.h.b16 %v1125
    %v1747 = vunpack.c.l.b16 %v1126
    %v1748 = vunpack.c.h.b16 %v1126
    %v1749 = vunpack.c.l.b16 %v1127
    %v1750 = vunpack.c.h.b16 %v1127
    %v1751 = vunpack.c.l.b16 %v1128
    %v1752 = vunpack.c.h.b16 %v1128
    %v1753 = vunpack.c.l.b16 %v1129
    %v1754 = vunpack.c.h.b16 %v1129
    %v1755 = vunpack.c.l.b16 %v1130
    %v1756 = vunpack.c.h.b16 %v1130
    %v1757 = vunpack.c.l.b16 %v1131
    %v1758 = vunpack.c.h.b16 %v1131
    %v1759 = vunpack.c.l.b16 %v1132
    %v1760 = vunpack.c.h.b16 %v1132
    %v1761 = vunpack.c.l.b16 %v1133
    %v1762 = vunpack.c.h.b16 %v1133
    %v1763 = vunpack.c.l.b16 %v1134
    %v1764 = vunpack.c.h.b16 %v1134
    %v1765 = vunpack.c.l.b16 %v1135
    %v1766 = vunpack.c.h.b16 %v1135
    %v1767 = vunpack.c.l.b16 %v1136
    %v1768 = vunpack.c.h.b16 %v1136
    %v1769 = vunpack.c.l.b16 %v1137
    %v1770 = vunpack.c.h.b16 %v1137
    %v1771 = vunpack.c.l.b16 %v1138
    %v1772 = vunpack.c.h.b16 %v1138
    %v1773 = vunpack.c.l.b16 %v1139
    %v1774 = vunpack.c.h.b16 %v1139
    %v1775 = vunpack.c.l.b16 %v1140
    %v1776 = vunpack.c.h.b16 %v1140
    %v1777 = vunpack.c.l.b16 %v1141
    %v1778 = vunpack.c.h.b16 %v1141
    %v1779 = vunpack.c.l.b16 %v1142
    %v1780 = vunpack.c.h.b16 %v1142
    %v1781 = vunpack.c.l.b16 %v1143
    %v1782 = vunpack.c.h.b16 %v1143
    %v1783 = vunpack.c.l.b16 %v1144
    %v1784 = vunpack.c.h.b16 %v1144
    %v1785 = vunpack.c.l.b16 %v1145
    %v1786 = vunpack.c.h.b16 %v1145
    %v1787 = vunpack.c.l.b16 %v1146
    %v1788 = vunpack.c.h.b16 %v1146
    %v1789 = vunpack.c.l.b16 %v1147
    %v1790 = vunpack.c.h.b16 %v1147
    %v1791 = vunpack.c.l.b16 %v1148
    %v1792 = vunpack.c.h.b16 %v1148
    %v1793 = vunpack.c.l.b16 %v1149
    %v1794 = vunpack.c.h.b16 %v1149
    %v1795 = vunpack.c.l.b16 %v1150
    %v1796 = vunpack.c.h.b16 %v1150
    %v1797 = vunpack.c.l.b16 %v1151
    %v1798 = vunpack.c.h.b16 %v1151
    %v1799 = vunpack.c.l.b16 %v1152
    %v1800 = vunpack.c.h.b16 %v1152
    %v1801 = vunpack.c.l.b16 %v1153
    %v1802 = vunpack.c.h.b16 %v1153
    %v1803 = vunpack.c.l.b16 %v1154
    %v1804 = vunpack.c.h.b16 %v1154
    %v1805 = vunpack.c.l.b16 %v1155
    %v1806 = vunpack.c.h.b16 %v1155
    %v1807 = vunpack.c.l.b16 %v1156
    %v1808 = vunpack.c.h.b16 %v1156
    %v1809 = vunpack.c.l.b16 %v1157
    %v1810 = vunpack.c.h.b16 %v1157
    %v1811 = vunpack.c.l.b16 %v1158
    %v1812 = vunpack.c.h.b16 %v1158
    %v1813 = vunpack.c.l.b16 %v1159
    %v1814 = vunpack.c.h.b16 %v1159
    %v1815 = vunpack.c.l.b16 %v1160
    %v1816 = vunpack.c.h.b16 %v1160
    %v1817 = vunpack.c.l.b16 %v1161
    %v1818 = vunpack.c.h.b16 %v1161
    %v1819 = vunpack.c.l.b16 %v1162
    %v1820 = vunpack.c.h.b16 %v1162
    %v1821 = vunpack.c.l.b16 %v1163
    %v1822 = vunpack.c.h.b16 %v1163
    %v1823 = vunpack.c.l.b16 %v1164
    %v1824 = vunpack.c.h.b16 %v1164
    %v1825 = vunpack.c.l.b16 %v1165
    %v1826 = vunpack.c.h.b16 %v1165
    %v1827 = vunpack.c.l.b16 %v1166
    %v1828 = vunpack.c.h.b16 %v1166
    %v1829 = vunpack.c.l.b16 %v1167
    %v1830 = vunpack.c.h.b16 %v1167
    %v1831 = vunpack.c.l.b16 %v1168
    %v1832 = vunpack.c.h.b16 %v1168
    %v1833 = vunpack.c.l.b16 %v1169
    %v1834 = vunpack.c.h.b16 %v1169
    %v1835 = vunpack.c.l.b16 %v1170
    %v1836 = vunpack.c.h.b16 %v1170
    %v1837 = vunpack.c.l.b16 %v1171
    %v1838 = vunpack.c.h.b16 %v1171
    %v1839 = vunpack.c.l.b16 %v1172
    %v1840 = vunpack.c.h.b16 %v1172
    %v1841 = vunpack.c.l.b16 %v1173
    %v1842 = vunpack.c.h.b16 %v1173
    %v1843 = vunpack.c.l.b16 %v1174
    %v1844 = vunpack.c.h.b16 %v1174
    %v1845 = vunpack.c.l.b16 %v1175
    %v1846 = vunpack.c.h.b16 %v1175
    %v1847 = vunpack.c.l.b16 %v1176
    %v1848 = vunpack.c.h.b16 %v1176
    %v1849 = vunpack.c.l.b16 %v1177
    %v1850 = vunpack.c.h.b16 %v1177
    %v1851 = vunpack.c.l.b16 %v1178
    %v1852 = vunpack.c.h.b16 %v1178
    %v1853 = vunpack.c.l.b16 %v1179
    %v1854 = vunpack.c.h.b16 %v1179
    %v1855 = vunpack.c.l.b16 %v1180
    %v1856 = vunpack.c.h.b16 %v1180
    %v1857 = vunpack.c.l.b16 %v1181
    %v1858 = vunpack.c.h.b16 %v1181
    %v1859 = vunpack.c.l.b16 %v1182
    %v1860 = vunpack.c.h.b16 %v1182
    %v1861 = vunpack.c.l.b16 %v1183
    %v1862 = vunpack.c.h.b16 %v1183
    %v1863 = vunpack.c.l.b16 %v1184
    %v1864 = vunpack.c.h.b16 %v1184
    %v1865 = vunpack.c.l.b16 %v1185
    %v1866 = vunpack.c.h.b16 %v1185
    %v1867 = vunpack.c.l.b16 %v1186
    %v1868 = vunpack.c.h.b16 %v1186
    %v1869 = vunpack.c.l.b16 %v1187
    %v1870 = vunpack.c.h.b16 %v1187
    %v1871 = vunpack.c.l.b16 %v1188
    %v1872 = vunpack.c.h.b16 %v1188
    %v1873 = vunpack.c.l.b16 %v1189
    %v1874 = vunpack.c.h.b16 %v1189
    %v1875 = vunpack.c.l.b16 %v1190
    %v1876 = vunpack.c.h.b16 %v1190
    %v1877 = vunpack.c.l.b16 %v1191
    %v1878 = vunpack.c.h.b16 %v1191
    %v1879 = vunpack.c.l.b16 %v1192
    %v1880 = vunpack.c.h.b16 %v1192
    %v1881 = vunpack.c.l.b16 %v1193
    %v1882 = vunpack.c.h.b16 %v1193
    %v1883 = vunpack.c.l.b16 %v1194
    %v1884 = vunpack.c.h.b16 %v1194
    %v1885 = vunpack.c.l.b16 %v1195
    %v1886 = vunpack.c.h.b16 %v1195
    %v1887 = vunpack.c.l.b16 %v1196
    %v1888 = vunpack.c.h.b16 %v1196
    %v1889 = vunpack.c.l.b16 %v1197
    %v1890 = vunpack.c.h.b16 %v1197
    %v1891 = vunpack.c.l.b16 %v1198
    %v1892 = vunpack.c.h.b16 %v1198
    %v1893 = vunpack.c.l.b16 %v1199
    %v1894 = vunpack.c.h.b16 %v1199
    %v1895 = vunpack.c.l.b16 %v1200
    %v1896 = vunpack.c.h.b16 %v1200
    %v1897 = vunpack.c.l.b16 %v1201
    %v1898 = vunpack.c.h.b16 %v1201
    %v1899 = vunpack.c.l.b16 %v1202
    %v1900 = vunpack.c.h.b16 %v1202
    %v1901 = vunpack.c.l.b16 %v1203
    %v1902 = vunpack.c.h.b16 %v1203
    %v1903 = vunpack.c.l.b16 %v1204
    %v1904 = vunpack.c.h.b16 %v1204
    %v1905 = vunpack.c.l.b16 %v1205
    %v1906 = vunpack.c.h.b16 %v1205
    %v1907 = vunpack.c.l.b16 %v1206
    %v1908 = vunpack.c.h.b16 %v1206
    %v1909 = vunpack.c.l.b16 %v1207
    %v1910 = vunpack.c.h.b16 %v1207
    %v1911 = vunpack.c.l.b16 %v1208
    %v1912 = vunpack.c.h.b16 %v1208
    %v1913 = vunpack.c.l.b16 %v1209
    %v1914 = vunpack.c.h.b16 %v1209
    %v1915 = vunpack.c.l.b16 %v1210
    %v1916 = vunpack.c.h.b16 %v1210
    %v1917 = vunpack.c.l.b16 %v1211
    %v1918 = vunpack.c.h.b16 %v1211
    %v1919 = vunpack.c.l.b16 %v1212
    %v1920 = vunpack.c.h.b16 %v1212
    %v1921 = vunpack.c.l.b16 %v1213
    %v1922 = vunpack.c.h.b16 %v1213
    %v1923 = vunpack.c.l.b16 %v1214
    %v1924 = vunpack.c.h.b16 %v1214
    %v1925 = vunpack.c.l.b16 %v1215
    %v1926 = vunpack.c.h.b16 %v1215
    %v1927 = vunpack.c.l.b16 %v1216
    %v1928 = vunpack.c.h.b16 %v1216
    %v1929 = vunpack.c.l.b16 %v1217
    %v1930 = vunpack.c.h.b16 %v1217
    %v1931 = vunpack.c.l.b16 %v1218
    %v1932 = vunpack.c.h.b16 %v1218
    %v1933 = vunpack.c.l.b16 %v1219
    %v1934 = vunpack.c.h.b16 %v1219
    %v1935 = vunpack.c.l.b16 %v1220
    %v1936 = vunpack.c.h.b16 %v1220
    %v1937 = vunpack.c.l.b16 %v1221
    %v1938 = vunpack.c.h.b16 %v1221
    %v1939 = vunpack.c.l.b16 %v1222
    %v1940 = vunpack.c.h.b16 %v1222
    %v1941 = vunpack.c.l.b16 %v1223
    %v1942 = vunpack.c.h.b16 %v1223
    %v1943 = vunpack.c.l.b16 %v1224
    %v1944 = vunpack.c.h.b16 %v1224
    %v1945 = vunpack.c.l.b16 %v1225
    %v1946 = vunpack.c.h.b16 %v1225
    %v1947 = vunpack.c.l.b16 %v1226
    %v1948 = vunpack.c.h.b16 %v1226
    %v1949 = vunpack.c.l.b16 %v1227
    %v1950 = vunpack.c.h.b16 %v1227
    %v1951 = vunpack.c.l.b16 %v1228
    %v1952 = vunpack.c.h.b16 %v1228
    %v1953 = vunpack.c.l.b16 %v1229
    %v1954 = vunpack.c.h.b16 %v1229
    %v1955 = vunpack.c.l.b16 %v1230
    %v1956 = vunpack.c.h.b16 %v1230
    %v1957 = vunpack.c.l.b16 %v1231
    %v1958 = vunpack.c.h.b16 %v1231
    %v1959 = vunpack.c.l.b16 %v1232
    %v1960 = vunpack.c.h.b16 %v1232
    %v1961 = vunpack.c.l.b16 %v1233
    %v1962 = vunpack.c.h.b16 %v1233
    %v1963 = vunpack.c.l.b16 %v1234
    %v1964 = vunpack.c.h.b16 %v1234
    %v1965 = vunpack.c.l.b16 %v1235
    %v1966 = vunpack.c.h.b16 %v1235
    %v1967 = vunpack.c.l.b16 %v1236
    %v1968 = vunpack.c.h.b16 %v1236
    %v1969 = vunpack.c.l.b16 %v1237
    %v1970 = vunpack.c.h.b16 %v1237
    %v1971 = vunpack.c.l.b16 %v1238
    %v1972 = vunpack.c.h.b16 %v1238
    %v1973 = vunpack.c.l.b16 %v1239
    %v1974 = vunpack.c.h.b16 %v1239
    %v1975 = vunpack.c.l.b16 %v1240
    %v1976 = vunpack.c.h.b16 %v1240
    %v1977 = vunpack.c.l.b16 %v1241
    %v1978 = vunpack.c.h.b16 %v1241
    %v1979 = vunpack.c.l.b16 %v1242
    %v1980 = vunpack.c.h.b16 %v1242
    %v1981 = vunpack.c.l.b16 %v1243
    %v1982 = vunpack.c.h.b16 %v1243
    %v1983 = vunpack.c.l.b16 %v1244
    %v1984 = vunpack.c.h.b16 %v1244
    %v1985 = vunpack.c.l.b16 %v1245
    %v1986 = vunpack.c.h.b16 %v1245
    %v1987 = vunpack.c.l.b16 %v1246
    %v1988 = vunpack.c.h.b16 %v1246
    %v1989 = vunpack.c.l.b16 %v1247
    %v1990 = vunpack.c.h.b16 %v1247
    %v1991 = vunpack.c.l.b16 %v1248
    %v1992 = vunpack.c.h.b16 %v1248
    %v1993 = vunpack.c.l.b16 %v1249
    %v1994 = vunpack.c.h.b16 %v1249
    %v1995 = vunpack.c.l.b16 %v1250
    %v1996 = vunpack.c.h.b16 %v1250
    %v1997 = vunpack.c.l.b16 %v1251
    %v1998 = vunpack.c.h.b16 %v1251
    %v1999 = vunpack.c.l.b16 %v1252
    %v2000 = vunpack.c.h.b16 %v1252
    %v2001 = vunpack.c.l.b16 %v1253
    %v2002 = vunpack.c.h.b16 %v1253
    %v2003 = vunpack.c.l.b16 %v1254
    %v2004 = vunpack.c.h.b16 %v1254
    %v2005 = vunpack.c.l.b16 %v1255
    %v2006 = vunpack.c.h.b16 %v1255
    %v2007 = vunpack.c.l.b16 %v1256
    %v2008 = vunpack.c.h.b16 %v1256
    %v2009 = vunpack.c.l.b16 %v1257
    %v2010 = vunpack.c.h.b16 %v1257
    %v2011 = vunpack.c.l.b16 %v1258
    %v2012 = vunpack.c.h.b16 %v1258
    %v2013 = vunpack.c.l.b16 %v1259
    %v2014 = vunpack.c.h.b16 %v1259
    %v2015 = vunpack.c.l.b16 %v1260
    %v2016 = vunpack.c.h.b16 %v1260
    %v2017 = vunpack.c.l.b16 %v1261
    %v2018 = vunpack.c.h.b16 %v1261
    %v2019 = vunpack.c.l.b16 %v1262
    %v2020 = vunpack.c.h.b16 %v1262
    %v2021 = vunpack.c.l.b16 %v1263
    %v2022 = vunpack.c.h.b16 %v1263
    %v2023 = vunpack.c.l.b16 %v1264
    %v2024 = vunpack.c.h.b16 %v1264
    %v2025 = vunpack.c.l.b16 %v1265
    %v2026 = vunpack.c.h.b16 %v1265
    %v2027 = vunpack.c.l.b16 %v1266
    %v2028 = vunpack.c.h.b16 %v1266
    %v2029 = vunpack.c.l.b16 %v1267
    %v2030 = vunpack.c.h.b16 %v1267
    %v2031 = vunpack.c.l.b16 %v1268
    %v2032 = vunpack.c.h.b16 %v1268
    %v2033 = vunpack.c.l.b16 %v1269
    %v2034 = vunpack.c.h.b16 %v1269
    %v2035 = vunpack.c.l.b16 %v1270
    %v2036 = vunpack.c.h.b16 %v1270
    %v2037 = vunpack.c.l.b16 %v1271
    %v2038 = vunpack.c.h.b16 %v1271
    %v2039 = vunpack.c.l.b16 %v1272
    %v2040 = vunpack.c.h.b16 %v1272
    %v2041 = vpack.c.b16 %v1537, %v1529
    %v2042 = vpack.c.b16 %v1538, %v1530
    %v2043 = vpack.c.b16 %v1539, %v1531
    %v2044 = vpack.c.b16 %v1540, %v1532
    %v2045 = vpack.c.b16 %v1541, %v1533
    %v2046 = vpack.c.b16 %v1542, %v1534
    %v2047 = vpack.c.b16 %v1543, %v1535
    %v2048 = vpack.c.b16 %v1544, %v1536
    %v2049 = vpack.c.b16 %v1553, %v1545
    %v2050 = vpack.c.b16 %v1554, %v1546
    %v2051 = vpack.c.b16 %v1555, %v1547
    %v2052 = vpack.c.b16 %v1556, %v1548
    %v2053 = vpack.c.b16 %v1557, %v1549
    %v2054 = vpack.c.b16 %v1558, %v1550
    %v2055 = vpack.c.b16 %v1559, %v1551
    %v2056 = vpack.c.b16 %v1560, %v1552
    %v2057 = vpack.c.b16 %v1569, %v1561
    %v2058 = vpack.c.b16 %v1570, %v1562
    %v2059 = vpack.c.b16 %v1571, %v1563
    %v2060 = vpack.c.b16 %v1572, %v1564
    %v2061 = vpack.c.b16 %v1573, %v1565
    %v2062 = vpack.c.b16 %v1574, %v1566
    %v2063 = vpack.c.b16 %v1575, %v1567
    %v2064 = vpack.c.b16 %v1576, %v1568
    %v2065 = vpack.c.b16 %v1585, %v1577
    %v2066 = vpack.c.b16 %v1586, %v1578
    %v2067 = vpack.c.b16 %v1587, %v1579
    %v2068 = vpack.c.b16 %v1588, %v1580
    %v2069 = vpack.c.b16 %v1589, %v1581
    %v2070 = vpack.c.b16 %v1590, %v1582
    %v2071 = vpack.c.b16 %v1591, %v1583
    %v2072 = vpack.c.b16 %v1592, %v1584
    %v2073 = vpack.c.b16 %v1601, %v1593
    %v2074 = vpack.c.b16 %v1602, %v1594
    %v2075 = vpack.c.b16 %v1603, %v1595
    %v2076 = vpack.c.b16 %v1604, %v1596
    %v2077 = vpack.c.b16 %v1605, %v1597
    %v2078 = vpack.c.b16 %v1606, %v1598
    %v2079 = vpack.c.b16 %v1607, %v1599
    %v2080 = vpack.c.b16 %v1608, %v1600
    %v2081 = vpack.c.b16 %v1617, %v1609
    %v2082 = vpack.c.b16 %v1618, %v1610
    %v2083 = vpack.c.b16 %v1619, %v1611
    %v2084 = vpack.c.b16 %v1620, %v1612
    %v2085 = vpack.c.b16 %v1621, %v1613
    %v2086 = vpack.c.b16 %v1622, %v1614
    %v2087 = vpack.c.b16 %v1623, %v1615
    %v2088 = vpack.c.b16 %v1624, %v1616
    %v2089 = vpack.c.b16 %v1633, %v1625
    %v2090 = vpack.c.b16 %v1634, %v1626
    %v2091 = vpack.c.b16 %v1635, %v1627
    %v2092 = vpack.c.b16 %v1636, %v1628
    %v2093 = vpack.c.b16 %v1637, %v1629
    %v2094 = vpack.c.b16 %v1638, %v1630
    %v2095 = vpack.c.b16 %v1639, %v1631
    %v2096 = vpack.c.b16 %v1640, %v1632
    %v2097 = vpack.c.b16 %v1649, %v1641
    %v2098 = vpack.c.b16 %v1650, %v1642
    %v2099 = vpack.c.b16 %v1651, %v1643
    %v2100 = vpack.c.b16 %v1652, %v1644
    %v2101 = vpack.c.b16 %v1653, %v1645
    %v2102 = vpack.c.b16 %v1654, %v1646
    %v2103 = vpack.c.b16 %v1655, %v1647
    %v2104 = vpack.c.b16 %v1656, %v1648
    %v2105 = vpack.c.b16 %v1665, %v1657
    %v2106 = vpack.c.b16 %v1666, %v1658
    %v2107 = vpack.c.b16 %v1667, %v1659
    %v2108 = vpack.c.b16 %v1668, %v1660
    %v2109 = vpack.c.b16 %v1669, %v1661
    %v2110 = vpack.c.b16 %v1670, %v1662
    %v2111 = vpack.c.b16 %v1671, %v1663
    %v2112 = vpack.c.b16 %v1672, %v1664
    %v2113 = vpack.c.b16 %v1681, %v1673
    %v2114 = vpack.c.b16 %v1682, %v1674
    %v2115 = vpack.c.b16 %v1683, %v1675
    %v2116 = vpack.c.b16 %v1684, %v1676
    %v2117 = vpack.c.b16 %v1685, %v1677
    %v2118 = vpack.c.b16 %v1686, %v1678
    %v2119 = vpack.c.b16 %v1687, %v1679
    %v2120 = vpack.c.b16 %v1688, %v1680
    %v2121 = vpack.c.b16 %v1697, %v1689
    %v2122 = vpack.c.b16 %v1698, %v1690
    %v2123 = vpack.c.b16 %v1699, %v1691
    %v2124 = vpack.c.b16 %v1700, %v1692
    %v2125 = vpack.c.b16 %v1701, %v1693
    %v2126 = vpack.c.b16 %v1702, %v1694
    %v2127 = vpack.c.b16 %v1703, %v1695
    %v2128 = vpack.c.b16 %v1704, %v1696
    %v2129 = vpack.c.b16 %v1713, %v1705
    %v2130 = vpack.c.b16 %v1714, %v1706
    %v2131 = vpack.c.b16 %v1715, %v1707
    %v2132 = vpack.c.b16 %v1716, %v1708
    %v2133 = vpack.c.b16 %v1717, %v1709
    %v2134 = vpack.c.b16 %v1718, %v1710
    %v2135 = vpack.c.b16 %v1719, %v1711
    %v2136 = vpack.c.b16 %v1720, %v1712
    %v2137 = vpack.c.b16 %v1729, %v1721
    %v2138 = vpack.c.b16 %v1730, %v1722
    %v2139 = vpack.c.b16 %v1731, %v1723
    %v2140 = vpack.c.b16 %v1732, %v1724
    %v2141 = vpack.c.b16 %v1733, %v1725
    %v2142 = vpack.c.b16 %v1734, %v1726
    %v2143 = vpack.c.b16 %v1735, %v1727
    %v2144 = vpack.c.b16 %v1736, %v1728
    %v2145 = vpack.c.b16 %v1745, %v1737
    %v2146 = vpack.c.b16 %v1746, %v1738
    %v2147 = vpack.c.b16 %v1747, %v1739
    %v2148 = vpack.c.b16 %v1748, %v1740
    %v2149 = vpack.c.b16 %v1749, %v1741
    %v2150 = vpack.c.b16 %v1750, %v1742
    %v2151 = vpack.c.b16 %v1751, %v1743
    %v2152 = vpack.c.b16 %v1752, %v1744
    %v2153 = vpack.c.b16 %v1761, %v1753
    %v2154 = vpack.c.b16 %v1762, %v1754
    %v2155 = vpack.c.b16 %v1763, %v1755
    %v2156 = vpack.c.b16 %v1764, %v1756
    %v2157 = vpack.c.b16 %v1765, %v1757
    %v2158 = vpack.c.b16 %v1766, %v1758
    %v2159 = vpack.c.b16 %v1767, %v1759
    %v2160 = vpack.c.b16 %v1768, %v1760
    %v2161 = vpack.c.b16 %v1777, %v1769
    %v2162 = vpack.c.b16 %v1778, %v1770
    %v2163 = vpack.c.b16 %v1779, %v1771
    %v2164 = vpack.c.b16 %v1780, %v1772
    %v2165 = vpack.c.b16 %v1781, %v1773
    %v2166 = vpack.c.b16 %v1782, %v1774
    %v2167 = vpack.c.b16 %v1783, %v1775
    %v2168 = vpack.c.b16 %v1784, %v1776
    %v2169 = vpack.c.b16 %v1793, %v1785
    %v2170 = vpack.c.b16 %v1794, %v1786
    %v2171 = vpack.c.b16 %v1795, %v1787
    %v2172 = vpack.c.b16 %v1796, %v1788
    %v2173 = vpack.c.b16 %v1797, %v1789
    %v2174 = vpack.c.b16 %v1798, %v1790
    %v2175 = vpack.c.b16 %v1799, %v1791
    %v2176 = vpack.c.b16 %v1800, %v1792
    %v2177 = vpack.c.b16 %v1809, %v1801
    %v2178 = vpack.c.b16 %v1810, %v1802
    %v2179 = vpack.c.b16 %v1811, %v1803
    %v2180 = vpack.c.b16 %v1812, %v1804
    %v2181 = vpack.c.b16 %v1813, %v1805
    %v2182 = vpack.c.b16 %v1814, %v1806
    %v2183 = vpack.c.b16 %v1815, %v1807
    %v2184 = vpack.c.b16 %v1816, %v1808
    %v2185 = vpack.c.b16 %v1825, %v1817
    %v2186 = vpack.c.b16 %v1826, %v1818
    %v2187 = vpack.c.b16 %v1827, %v1819
    %v2188 = vpack.c.b16 %v1828, %v1820
    %v2189 = vpack.c.b16 %v1829, %v1821
    %v2190 = vpack.c.b16 %v1830, %v1822
    %v2191 = vpack.c.b16 %v1831, %v1823
    %v2192 = vpack.c.b16 %v1832, %v1824
    %v2193 = vpack.c.b16 %v1841, %v1833
    %v2194 = vpack.c.b16 %v1842, %v1834
    %v2195 = vpack.c.b16 %v1843, %v1835
    %v2196 = vpack.c.b16 %v1844, %v1836
    %v2197 = vpack.c.b16 %v1845, %v1837
    %v2198 = vpack.c.b16 %v1846, %v1838
    %v2199 = vpack.c.b16 %v1847, %v1839
    %v2200 = vpack.c.b16 %v1848, %v1840
    %v2201 = vpack.c.b16 %v1857, %v1849
    %v2202 = vpack.c.b16 %v1858, %v1850
    %v2203 = vpack.c.b16 %v1859, %v1851
    %v2204 = vpack.c.b16 %v1860, %v1852
    %v2205 = vpack.c.b16 %v1861, %v1853
    %v2206 = vpack.c.b16 %v1862, %v1854
    %v2207 = vpack.c.b16 %v1863, %v1855
    %v2208 = vpack.c.b16 %v1864, %v1856
    %v2209 = vpack.c.b16 %v1873, %v1865
    %v2210 = vpack.c.b16 %v1874, %v1866
    %v2211 = vpack.c.b16 %v1875, %v1867
    %v2212 = vpack.c.b16 %v1876, %v1868
    %v2213 = vpack.c.b16 %v1877, %v1869
    %v2214 = vpack.c.b16 %v1878, %v1870
    %v2215 = vpack.c.b16 %v1879, %v1871
    %v2216 = vpack.c.b16 %v1880, %v1872
    %v2217 = vpack.c.b16 %v1889, %v1881
    %v2218 = vpack.c.b16 %v1890, %v1882
    %v2219 = vpack.c.b16 %v1891, %v1883
    %v2220 = vpack.c.b16 %v1892, %v1884
    %v2221 = vpack.c.b16 %v1893, %v1885
    %v2222 = vpack.c.b16 %v1894, %v1886
    %v2223 = vpack.c.b16 %v1895, %v1887
    %v2224 = vpack.c.b16 %v1896, %v1888
    %v2225 = vpack.c.b16 %v1905, %v1897
    %v2226 = vpack.c.b16 %v1906, %v1898
    %v2227 = vpack.c.b16 %v1907, %v1899
    %v2228 = vpack.c.b16 %v1908, %v1900
    %v2229 = vpack.c.b16 %v1909, %v1901
    %v2230 = vpack.c.b16 %v1910, %v1902
    %v2231 = vpack.c.b16 %v1911, %v1903
    %v2232 = vpack.c.b16 %v1912, %v1904
    %v2233 = vpack.c.b16 %v1921, %v1913
    %v2234 = vpack.c.b16 %v1922, %v1914
    %v2235 = vpack.c.b16 %v1923, %v1915
    %v2236 = vpack.c.b16 %v1924, %v1916
    %v2237 = vpack.c.b16 %v1925, %v1917
    %v2238 = vpack.c.b16 %v1926, %v1918
    %v2239 = vpack.c.b16 %v1927, %v1919
    %v2240 = vpack.c.b16 %v1928, %v1920
    %v2241 = vpack.c.b16 %v1937, %v1929
    %v2242 = vpack.c.b16 %v1938, %v1930
    %v2243 = vpack.c.b16 %v1939, %v1931
    %v2244 = vpack.c.b16 %v1940, %v1932
    %v2245 = vpack.c.b16 %v1941, %v1933
    %v2246 = vpack.c.b16 %v1942, %v1934
    %v2247 = vpack.c.b16 %v1943, %v1935
    %v2248 = vpack.c.b16 %v1944, %v1936
    %v2249 = vpack.c.b16 %v1953, %v1945
    %v2250 = vpack.c.b16 %v1954, %v1946
    %v2251 = vpack.c.b16 %v1955, %v1947
    %v2252 = vpack.c.b16 %v1956, %v1948
    %v2253 = vpack.c.b16 %v1957, %v1949
    %v2254 = vpack.c.b16 %v1958, %v1950
    %v2255 = vpack.c.b16 %v1959, %v1951
    %v2256 = vpack.c.b16 %v1960, %v1952
    %v2257 = vpack.c.b16 %v1969, %v1961
    %v2258 = vpack.c.b16 %v1970, %v1962
    %v2259 = vpack.c.b16 %v1971, %v1963
    %v2260 = vpack.c.b16 %v1972, %v1964
    %v2261 = vpack.c.b16 %v1973, %v1965
    %v2262 = vpack.c.b16 %v1974, %v1966
    %v2263 = vpack.c.b16 %v1975, %v1967
    %v2264 = vpack.c.b16 %v1976, %v1968
    %v2265 = vpack.c.b16 %v1985, %v1977
    %v2266 = vpack.c.b16 %v1986, %v1978
    %v2267 = vpack.c.b16 %v1987, %v1979
    %v2268 = vpack.c.b16 %v1988, %v1980
    %v2269 = vpack.c.b16 %v1989, %v1981
    %v2270 = vpack.c.b16 %v1990, %v1982
    %v2271 = vpack.c.b16 %v1991, %v1983
    %v2272 = vpack.c.b16 %v1992, %v1984
    %v2273 = vpack.c.b16 %v2001, %v1993
    %v2274 = vpack.c.b16 %v2002, %v1994
    %v2275 = vpack.c.b16 %v2003, %v1995
    %v2276 = vpack.c.b16 %v2004, %v1996
    %v2277 = vpack.c.b16 %v2005, %v1997
    %v2278 = vpack.c.b16 %v2006, %v1998
    %v2279 = vpack.c.b16 %v2007, %v1999
    %v2280 = vpack.c.b16 %v2008, %v2000
    %v2281 = vpack.c.b16 %v2017, %v2009
    %v2282 = vpack.c.b16 %v2018, %v2010
    %v2283 = vpack.c.b16 %v2019, %v2011
    %v2284 = vpack.c.b16 %v2020, %v2012
    %v2285 = vpack.c.b16 %v2021, %v2013
    %v2286 = vpack.c.b16 %v2022, %v2014
    %v2287 = vpack.c.b16 %v2023, %v2015
    %v2288 = vpack.c.b16 %v2024, %v2016
    %v2289 = vpack.c.b16 %v2033, %v2025
    %v2290 = vpack.c.b16 %v2034, %v2026
    %v2291 = vpack.c.b16 %v2035, %v2027
    %v2292 = vpack.c.b16 %v2036, %v2028
    %v2293 = vpack.c.b16 %v2037, %v2029
    %v2294 = vpack.c.b16 %v2038, %v2030
    %v2295 = vpack.c.b16 %v2039, %v2031
    %v2296 = vpack.c.b16 %v2040, %v2032
    %2553 = vmatprep.subr.bf16.mxu0 %v2042
    %2554 = vmatpush1.bf16.msra.mxu0 %v2041
    %2555 = vmatprep.subr.bf16.mxu0 %v2050
    %2556 = vmatpush1.bf16.msra.mxu0 %v2049
    %2557 = vmatprep.subr.bf16.mxu0 %v2058
    %2558 = vmatpush1.bf16.msra.mxu0 %v2057
    %2559 = vmatprep.subr.bf16.mxu0 %v2066
    %2560 = vmatpush1.bf16.msra.mxu0 %v2065
    %2561 = vmatprep.subr.bf16.mxu0 %v2074
    %2562 = vmatpush1.bf16.msra.mxu0 %v2073
    %2563 = vmatprep.subr.bf16.mxu0 %v2082
    %2564 = vmatpush1.bf16.msra.mxu0 %v2081
    %2565 = vmatprep.subr.bf16.mxu0 %v2090
    %2566 = vmatpush1.bf16.msra.mxu0 %v2089
    %2567 = vmatprep.subr.bf16.mxu0 %v2098
    %2568 = vmatpush1.bf16.msra.mxu0 %v2097
    %2569 = vmatprep.subr.bf16.mxu0 %v2106
    %2570 = vmatpush1.bf16.msra.mxu0 %v2105
    %2571 = vmatprep.subr.bf16.mxu0 %v2114
    %2572 = vmatpush1.bf16.msra.mxu0 %v2113
    %2573 = vmatprep.subr.bf16.mxu0 %v2122
    %2574 = vmatpush1.bf16.msra.mxu0 %v2121
    %2575 = vmatprep.subr.bf16.mxu0 %v2130
    %2576 = vmatpush1.bf16.msra.mxu0 %v2129
    %2577 = vmatprep.subr.bf16.mxu0 %v2138
    %2578 = vmatpush1.bf16.msra.mxu0 %v2137
    %2579 = vmatprep.subr.bf16.mxu0 %v2146
    %2580 = vmatpush1.bf16.msra.mxu0 %v2145
    %2581 = vmatprep.subr.bf16.mxu0 %v2154
    %2582 = vmatpush1.bf16.msra.mxu0 %v2153
    %2583 = vmatprep.subr.bf16.mxu0 %v2162
    %2584 = vmatpush1.bf16.msra.mxu0 %v2161
    %2585 = vmatprep.mubr.bf16.mxu0 %v1014
    %2586 = vmatmul.mubr.bf16.gmra.mrb[0].mxu0 %v1013
    %v2587 = vpop.f32.mrb[0].mxu0
    %v2588 = vadd.f32 0.0, %v2587
    %v2589 = vpop.f32.mrb[0].mxu0
    %v2590 = vadd.f32 0.0, %v2589
    %v2591 = vpop.f32.mrb[0].mxu0
    %v2592 = vpop.f32.mrb[0].mxu0
    %2593 = vdwg.mxu0
    %2594 = vmatprep.subr.bf16.mxu0 %v2170
    %2595 = vmatpush1.bf16.msra.mxu0 %v2169
    %2596 = vmatprep.subr.bf16.mxu0 %v2178
    %2597 = vmatpush1.bf16.msra.mxu0 %v2177
    %2598 = vmatprep.subr.bf16.mxu0 %v2186
    %2599 = vmatpush1.bf16.msra.mxu0 %v2185
    %2600 = vmatprep.subr.bf16.mxu0 %v2194
    %2601 = vmatpush1.bf16.msra.mxu0 %v2193
    %2602 = vmatprep.subr.bf16.mxu0 %v2202
    %2603 = vmatpush1.bf16.msra.mxu0 %v2201
    %2604 = vmatprep.subr.bf16.mxu0 %v2210
    %2605 = vmatpush1.bf16.msra.mxu0 %v2209
    %2606 = vmatprep.subr.bf16.mxu0 %v2218
    %2607 = vmatpush1.bf16.msra.mxu0 %v2217
    %2608 = vmatprep.subr.bf16.mxu0 %v2226
    %2609 = vmatpush1.bf16.msra.mxu0 %v2225
    %2610 = vmatprep.subr.bf16.mxu0 %v2234
    %2611 = vmatpush1.bf16.msra.mxu0 %v2233
    %2612 = vmatprep.subr.bf16.mxu0 %v2242
    %2613 = vmatpush1.bf16.msra.mxu0 %v2241
    %2614 = vmatprep.subr.bf16.mxu0 %v2250
    %2615 = vmatpush1.bf16.msra.mxu0 %v2249
    %2616 = vmatprep.subr.bf16.mxu0 %v2258
    %2617 = vmatpush1.bf16.msra.mxu0 %v2257
    %2618 = vmatprep.subr.bf16.mxu0 %v2266
    %2619 = vmatpush1.bf16.msra.mxu0 %v2265
    %2620 = vmatprep.subr.bf16.mxu0 %v2274
    %2621 = vmatpush1.bf16.msra.mxu0 %v2273
    %2622 = vmatprep.subr.bf16.mxu0 %v2282
    %2623 = vmatpush1.bf16.msra.mxu0 %v2281
    %2624 = vmatprep.subr.bf16.mxu0 %v2290
    %2625 = vmatpush1.bf16.msra.mxu0 %v2289
    %2626 = vmatprep.mubr.bf16.mxu0 %v1016
    %2627 = vmatmul.mubr.bf16.gmra.mrb[0].mxu0 %v1015
    %v2628 = vpop.f32.mrb[0].mxu0
    %v2629 = vadd.f32 %v2588, %v2628
    %v2630 = vpop.f32.mrb[0].mxu0
    %v2631 = vadd.f32 %v2590, %v2630
    %v2632 = vpop.f32.mrb[0].mxu0
    %v2633 = vpop.f32.mrb[0].mxu0
    %2634 = vdwg.mxu0
    %2635 = vmatprep.subr.bf16.mxu0 %v2044
    %2636 = vmatpush1.bf16.msra.mxu0 %v2043
    %2637 = vmatprep.subr.bf16.mxu0 %v2052
    %2638 = vmatpush1.bf16.msra.mxu0 %v2051
    %2639 = vmatprep.subr.bf16.mxu0 %v2060
    %2640 = vmatpush1.bf16.msra.mxu0 %v2059
    %2641 = vmatprep.subr.bf16.mxu0 %v2068
    %2642 = vmatpush1.bf16.msra.mxu0 %v2067
    %2643 = vmatprep.subr.bf16.mxu0 %v2076
    %2644 = vmatpush1.bf16.msra.mxu0 %v2075
    %2645 = vmatprep.subr.bf16.mxu0 %v2084
    %2646 = vmatpush1.bf16.msra.mxu0 %v2083
    %2647 = vmatprep.subr.bf16.mxu0 %v2092
    %2648 = vmatpush1.bf16.msra.mxu0 %v2091
    %2649 = vmatprep.subr.bf16.mxu0 %v2100
    %2650 = vmatpush1.bf16.msra.mxu0 %v2099
    %2651 = vmatprep.subr.bf16.mxu0 %v2108
    %2652 = vmatpush1.bf16.msra.mxu0 %v2107
    %2653 = vmatprep.subr.bf16.mxu0 %v2116
    %2654 = vmatpush1.bf16.msra.mxu0 %v2115
    %2655 = vmatprep.subr.bf16.mxu0 %v2124
    %2656 = vmatpush1.bf16.msra.mxu0 %v2123
    %2657 = vmatprep.subr.bf16.mxu0 %v2132
    %2658 = vmatpush1.bf16.msra.mxu0 %v2131
    %2659 = vmatprep.subr.bf16.mxu0 %v2140
    %2660 = vmatpush1.bf16.msra.mxu0 %v2139
    %2661 = vmatprep.subr.bf16.mxu0 %v2148
    %2662 = vmatpush1.bf16.msra.mxu0 %v2147
    %2663 = vmatprep.subr.bf16.mxu0 %v2156
    %2664 = vmatpush1.bf16.msra.mxu0 %v2155
    %2665 = vmatprep.subr.bf16.mxu0 %v2164
    %2666 = vmatpush1.bf16.msra.mxu0 %v2163
    %2667 = vmatprep.mubr.bf16.mxu0 %v1014
    %2668 = vmatmul.mubr.bf16.gmra.mrb[0].mxu0 %v1013
    %v2669 = vpop.f32.mrb[0].mxu0
    %v2670 = vadd.f32 0.0, %v2669
    %v2671 = vpop.f32.mrb[0].mxu0
    %v2672 = vadd.f32 0.0, %v2671
    %v2673 = vpop.f32.mrb[0].mxu0
    %v2674 = vpop.f32.mrb[0].mxu0
    %2675 = vdwg.mxu0
    %2676 = vmatprep.subr.bf16.mxu0 %v2172
    %2677 = vmatpush1.bf16.msra.mxu0 %v2171
    %2678 = vmatprep.subr.bf16.mxu0 %v2180
    %2679 = vmatpush1.bf16.msra.mxu0 %v2179
    %2680 = vmatprep.subr.bf16.mxu0 %v2188
    %2681 = vmatpush1.bf16.msra.mxu0 %v2187
    %2682 = vmatprep.subr.bf16.mxu0 %v2196
    %2683 = vmatpush1.bf16.msra.mxu0 %v2195
    %2684 = vmatprep.subr.bf16.mxu0 %v2204
    %2685 = vmatpush1.bf16.msra.mxu0 %v2203
    %2686 = vmatprep.subr.bf16.mxu0 %v2212
    %2687 = vmatpush1.bf16.msra.mxu0 %v2211
    %2688 = vmatprep.subr.bf16.mxu0 %v2220
    %2689 = vmatpush1.bf16.msra.mxu0 %v2219
    %2690 = vmatprep.subr.bf16.mxu0 %v2228
    %2691 = vmatpush1.bf16.msra.mxu0 %v2227
    %2692 = vmatprep.subr.bf16.mxu0 %v2236
    %2693 = vmatpush1.bf16.msra.mxu0 %v2235
    %2694 = vmatprep.subr.bf16.mxu0 %v2244
    %2695 = vmatpush1.bf16.msra.mxu0 %v2243
    %2696 = vmatprep.subr.bf16.mxu0 %v2252
    %2697 = vmatpush1.bf16.msra.mxu0 %v2251
    %2698 = vmatprep.subr.bf16.mxu0 %v2260
    %2699 = vmatpush1.bf16.msra.mxu0 %v2259
    %2700 = vmatprep.subr.bf16.mxu0 %v2268
    %2701 = vmatpush1.bf16.msra.mxu0 %v2267
    %2702 = vmatprep.subr.bf16.mxu0 %v2276
    %2703 = vmatpush1.bf16.msra.mxu0 %v2275
    %2704 = vmatprep.subr.bf16.mxu0 %v2284
    %2705 = vmatpush1.bf16.msra.mxu0 %v2283
    %2706 = vmatprep.subr.bf16.mxu0 %v2292
    %2707 = vmatpush1.bf16.msra.mxu0 %v2291
    %2708 = vmatprep.mubr.bf16.mxu0 %v1016
    %2709 = vmatmul.mubr.bf16.gmra.mrb[0].mxu0 %v1015
    %v2710 = vpop.f32.mrb[0].mxu0
    %v2711 = vadd.f32 %v2670, %v2710
    %v2712 = vpop.f32.mrb[0].mxu0
    %v2713 = vadd.f32 %v2672, %v2712
    %v2714 = vpop.f32.mrb[0].mxu0
    %v2715 = vpop.f32.mrb[0].mxu0
    %2716 = vdwg.mxu0
    %2717 = vmatprep.subr.bf16.mxu0 %v2046
    %2718 = vmatpush1.bf16.msra.mxu0 %v2045
    %2719 = vmatprep.subr.bf16.mxu0 %v2054
    %2720 = vmatpush1.bf16.msra.mxu0 %v2053
    %2721 = vmatprep.subr.bf16.mxu0 %v2062
    %2722 = vmatpush1.bf16.msra.mxu0 %v2061
    %2723 = vmatprep.subr.bf16.mxu0 %v2070
    %2724 = vmatpush1.bf16.msra.mxu0 %v2069
    %2725 = vmatprep.subr.bf16.mxu0 %v2078
    %2726 = vmatpush1.bf16.msra.mxu0 %v2077
    %2727 = vmatprep.subr.bf16.mxu0 %v2086
    %2728 = vmatpush1.bf16.msra.mxu0 %v2085
    %2729 = vmatprep.subr.bf16.mxu0 %v2094
    %2730 = vmatpush1.bf16.msra.mxu0 %v2093
    %2731 = vmatprep.subr.bf16.mxu0 %v2102
    %2732 = vmatpush1.bf16.msra.mxu0 %v2101
    %2733 = vmatprep.subr.bf16.mxu0 %v2110
    %2734 = vmatpush1.bf16.msra.mxu0 %v2109
    %2735 = vmatprep.subr.bf16.mxu0 %v2118
    %2736 = vmatpush1.bf16.msra.mxu0 %v2117
    %2737 = vmatprep.subr.bf16.mxu0 %v2126
    %2738 = vmatpush1.bf16.msra.mxu0 %v2125
    %2739 = vmatprep.subr.bf16.mxu0 %v2134
    %2740 = vmatpush1.bf16.msra.mxu0 %v2133
    %2741 = vmatprep.subr.bf16.mxu0 %v2142
    %2742 = vmatpush1.bf16.msra.mxu0 %v2141
    %2743 = vmatprep.subr.bf16.mxu0 %v2150
    %2744 = vmatpush1.bf16.msra.mxu0 %v2149
    %2745 = vmatprep.subr.bf16.mxu0 %v2158
    %2746 = vmatpush1.bf16.msra.mxu0 %v2157
    %2747 = vmatprep.subr.bf16.mxu0 %v2166
    %2748 = vmatpush1.bf16.msra.mxu0 %v2165
    %2749 = vmatprep.mubr.bf16.mxu0 %v1014
    %2750 = vmatmul.mubr.bf16.gmra.mrb[0].mxu0 %v1013
    %v2751 = vpop.f32.mrb[0].mxu0
    %v2752 = vadd.f32 0.0, %v2751
    %v2753 = vpop.f32.mrb[0].mxu0
    %v2754 = vadd.f32 0.0, %v2753
    %v2755 = vpop.f32.mrb[0].mxu0
    %v2756 = vpop.f32.mrb[0].mxu0
    %2757 = vdwg.mxu0
    %2758 = vmatprep.subr.bf16.mxu0 %v2174
    %2759 = vmatpush1.bf16.msra.mxu0 %v2173
    %2760 = vmatprep.subr.bf16.mxu0 %v2182
    %2761 = vmatpush1.bf16.msra.mxu0 %v2181
    %2762 = vmatprep.subr.bf16.mxu0 %v2190
    %2763 = vmatpush1.bf16.msra.mxu0 %v2189
    %2764 = vmatprep.subr.bf16.mxu0 %v2198
    %2765 = vmatpush1.bf16.msra.mxu0 %v2197
    %2766 = vmatprep.subr.bf16.mxu0 %v2206
    %2767 = vmatpush1.bf16.msra.mxu0 %v2205
    %2768 = vmatprep.subr.bf16.mxu0 %v2214
    %2769 = vmatpush1.bf16.msra.mxu0 %v2213
    %2770 = vmatprep.subr.bf16.mxu0 %v2222
    %2771 = vmatpush1.bf16.msra.mxu0 %v2221
    %2772 = vmatprep.subr.bf16.mxu0 %v2230
    %2773 = vmatpush1.bf16.msra.mxu0 %v2229
    %2774 = vmatprep.subr.bf16.mxu0 %v2238
    %2775 = vmatpush1.bf16.msra.mxu0 %v2237
    %2776 = vmatprep.subr.bf16.mxu0 %v2246
    %2777 = vmatpush1.bf16.msra.mxu0 %v2245
    %2778 = vmatprep.subr.bf16.mxu0 %v2254
    %2779 = vmatpush1.bf16.msra.mxu0 %v2253
    %2780 = vmatprep.subr.bf16.mxu0 %v2262
    %2781 = vmatpush1.bf16.msra.mxu0 %v2261
    %2782 = vmatprep.subr.bf16.mxu0 %v2270
    %2783 = vmatpush1.bf16.msra.mxu0 %v2269
    %2784 = vmatprep.subr.bf16.mxu0 %v2278
    %2785 = vmatpush1.bf16.msra.mxu0 %v2277
    %2786 = vmatprep.subr.bf16.mxu0 %v2286
    %2787 = vmatpush1.bf16.msra.mxu0 %v2285
    %2788 = vmatprep.subr.bf16.mxu0 %v2294
    %2789 = vmatpush1.bf16.msra.mxu0 %v2293
    %2790 = vmatprep.mubr.bf16.mxu0 %v1016
    %2791 = vmatmul.mubr.bf16.gmra.mrb[0].mxu0 %v1015
    %v2792 = vpop.f32.mrb[0].mxu0
    %v2793 = vadd.f32 %v2752, %v2792
    %v2794 = vpop.f32.mrb[0].mxu0
    %v2795 = vadd.f32 %v2754, %v2794
    %v2796 = vpop.f32.mrb[0].mxu0
    %v2797 = vpop.f32.mrb[0].mxu0
    %2798 = vdwg.mxu0
    %2799 = vmatprep.subr.bf16.mxu0 %v2048
    %2800 = vmatpush1.bf16.msra.mxu0 %v2047
    %2801 = vmatprep.subr.bf16.mxu0 %v2056
    %2802 = vmatpush1.bf16.msra.mxu0 %v2055
    %2803 = vmatprep.subr.bf16.mxu0 %v2064
    %2804 = vmatpush1.bf16.msra.mxu0 %v2063
    %2805 = vmatprep.subr.bf16.mxu0 %v2072
    %2806 = vmatpush1.bf16.msra.mxu0 %v2071
    %2807 = vmatprep.subr.bf16.mxu0 %v2080
    %2808 = vmatpush1.bf16.msra.mxu0 %v2079
    %2809 = vmatprep.subr.bf16.mxu0 %v2088
    %2810 = vmatpush1.bf16.msra.mxu0 %v2087
    %2811 = vmatprep.subr.bf16.mxu0 %v2096
    %2812 = vmatpush1.bf16.msra.mxu0 %v2095
    %2813 = vmatprep.subr.bf16.mxu0 %v2104
    %2814 = vmatpush1.bf16.msra.mxu0 %v2103
    %2815 = vmatprep.subr.bf16.mxu0 %v2112
    %2816 = vmatpush1.bf16.msra.mxu0 %v2111
    %2817 = vmatprep.subr.bf16.mxu0 %v2120
    %2818 = vmatpush1.bf16.msra.mxu0 %v2119
    %2819 = vmatprep.subr.bf16.mxu0 %v2128
    %2820 = vmatpush1.bf16.msra.mxu0 %v2127
    %2821 = vmatprep.subr.bf16.mxu0 %v2136
    %2822 = vmatpush1.bf16.msra.mxu0 %v2135
    %2823 = vmatprep.subr.bf16.mxu0 %v2144
    %2824 = vmatpush1.bf16.msra.mxu0 %v2143
    %2825 = vmatprep.subr.bf16.mxu0 %v2152
    %2826 = vmatpush1.bf16.msra.mxu0 %v2151
    %2827 = vmatprep.subr.bf16.mxu0 %v2160
    %2828 = vmatpush1.bf16.msra.mxu0 %v2159
    %2829 = vmatprep.subr.bf16.mxu0 %v2168
    %2830 = vmatpush1.bf16.msra.mxu0 %v2167
    %2831 = vmatprep.mubr.bf16.mxu0 %v1014
    %2832 = vmatmul.mubr.bf16.gmra.mrb[0].mxu0 %v1013
    %v2833 = vpop.f32.mrb[0].mxu0
    %v2834 = vadd.f32 0.0, %v2833
    %v2835 = vpop.f32.mrb[0].mxu0
    %v2836 = vadd.f32 0.0, %v2835
    %v2837 = vpop.f32.mrb[0].mxu0
    %v2838 = vpop.f32.mrb[0].mxu0
    %2839 = vdwg.mxu0
    %2840 = vmatprep.subr.bf16.mxu0 %v2176
    %2841 = vmatpush1.bf16.msra.mxu0 %v2175
    %2842 = vmatprep.subr.bf16.mxu0 %v2184
    %2843 = vmatpush1.bf16.msra.mxu0 %v2183
    %2844 = vmatprep.subr.bf16.mxu0 %v2192
    %2845 = vmatpush1.bf16.msra.mxu0 %v2191
    %2846 = vmatprep.subr.bf16.mxu0 %v2200
    %2847 = vmatpush1.bf16.msra.mxu0 %v2199
    %2848 = vmatprep.subr.bf16.mxu0 %v2208
    %2849 = vmatpush1.bf16.msra.mxu0 %v2207
    %2850 = vmatprep.subr.bf16.mxu0 %v2216
    %2851 = vmatpush1.bf16.msra.mxu0 %v2215
    %2852 = vmatprep.subr.bf16.mxu0 %v2224
    %2853 = vmatpush1.bf16.msra.mxu0 %v2223
    %2854 = vmatprep.subr.bf16.mxu0 %v2232
    %2855 = vmatpush1.bf16.msra.mxu0 %v2231
    %2856 = vmatprep.subr.bf16.mxu0 %v2240
    %2857 = vmatpush1.bf16.msra.mxu0 %v2239
    %2858 = vmatprep.subr.bf16.mxu0 %v2248
    %2859 = vmatpush1.bf16.msra.mxu0 %v2247
    %2860 = vmatprep.subr.bf16.mxu0 %v2256
    %2861 = vmatpush1.bf16.msra.mxu0 %v2255
    %2862 = vmatprep.subr.bf16.mxu0 %v2264
    %2863 = vmatpush1.bf16.msra.mxu0 %v2263
    %2864 = vmatprep.subr.bf16.mxu0 %v2272
    %2865 = vmatpush1.bf16.msra.mxu0 %v2271
    %2866 = vmatprep.subr.bf16.mxu0 %v2280
    %2867 = vmatpush1.bf16.msra.mxu0 %v2279
    %2868 = vmatprep.subr.bf16.mxu0 %v2288
    %2869 = vmatpush1.bf16.msra.mxu0 %v2287
    %2870 = vmatprep.subr.bf16.mxu0 %v2296
    %2871 = vmatpush1.bf16.msra.mxu0 %v2295
    %2872 = vmatprep.mubr.bf16.mxu0 %v1016
    %2873 = vmatmul.mubr.bf16.gmra.mrb[0].mxu0 %v1015
    %v2874 = vpop.f32.mrb[0].mxu0
    %v2875 = vadd.f32 %v2834, %v2874
    %v2876 = vpop.f32.mrb[0].mxu0
    %v2877 = vadd.f32 %v2836, %v2876
    %v2878 = vpop.f32.mrb[0].mxu0
    %v2879 = vpop.f32.mrb[0].mxu0
    %2880 = vdwg.mxu0
    %v2881 = vrot.slane %v2629, 4
    %v2882 = vadd.f32 %v2629, %v2881
    %v2883 = vrot.slane %v2882, 2
    %v2884 = vadd.f32 %v2882, %v2883
    %v2885 = vrot.slane %v2884, 1
    %v2886 = vadd.f32 %v2884, %v2885
    %v2887 = vrot.slane %v2631, 4
    %v2888 = vadd.f32 %v2631, %v2887
    %v2889 = vrot.slane %v2888, 2
    %v2890 = vadd.f32 %v2888, %v2889
    %v2891 = vrot.slane %v2890, 1
    %v2892 = vadd.f32 %v2890, %v2891
    %v2893 = vrot.slane %v2711, 4
    %v2894 = vadd.f32 %v2711, %v2893
    %v2895 = vrot.slane %v2894, 2
    %v2896 = vadd.f32 %v2894, %v2895
    %v2897 = vrot.slane %v2896, 1
    %v2898 = vadd.f32 %v2896, %v2897
    %v2899 = vrot.slane %v2713, 4
    %v2900 = vadd.f32 %v2713, %v2899
    %v2901 = vrot.slane %v2900, 2
    %v2902 = vadd.f32 %v2900, %v2901
    %v2903 = vrot.slane %v2902, 1
    %v2904 = vadd.f32 %v2902, %v2903
    %v2905 = vrot.slane %v2793, 4
    %v2906 = vadd.f32 %v2793, %v2905
    %v2907 = vrot.slane %v2906, 2
    %v2908 = vadd.f32 %v2906, %v2907
    %v2909 = vrot.slane %v2908, 1
    %v2910 = vadd.f32 %v2908, %v2909
    %v2911 = vrot.slane %v2795, 4
    %v2912 = vadd.f32 %v2795, %v2911
    %v2913 = vrot.slane %v2912, 2
    %v2914 = vadd.f32 %v2912, %v2913
    %v2915 = vrot.slane %v2914, 1
    %v2916 = vadd.f32 %v2914, %v2915
    %v2917 = vrot.slane %v2875, 4
    %v2918 = vadd.f32 %v2875, %v2917
    %v2919 = vrot.slane %v2918, 2
    %v2920 = vadd.f32 %v2918, %v2919
    %v2921 = vrot.slane %v2920, 1
    %v2922 = vadd.f32 %v2920, %v2921
    %v2923 = vrot.slane %v2877, 4
    %v2924 = vadd.f32 %v2877, %v2923
    %v2925 = vrot.slane %v2924, 2
    %v2926 = vadd.f32 %v2924, %v2925
    %v2927 = vrot.slane %v2926, 1
    %v2928 = vadd.f32 %v2926, %v2927
    %v2929 = vmul.f32 %v2886, %v348
    %v2930 = vmul.f32 %v2892, %v348
    %v2931 = vmul.f32 %v2898, %v348
    %v2932 = vmul.f32 %v2904, %v348
    %v2933 = vmul.f32 %v2910, %v348
    %v2934 = vmul.f32 %v2916, %v348
    %v2935 = vmul.f32 %v2922, %v348
    %v2936 = vmul.f32 %v2928, %v348
    %v2937 = vsub.f32 %v2629, %v2929
    %v2938 = vsub.f32 %v2631, %v2930
    %v2939 = vsub.f32 %v2711, %v2931
    %v2940 = vsub.f32 %v2713, %v2932
    %v2941 = vsub.f32 %v2793, %v2933
    %v2942 = vsub.f32 %v2795, %v2934
    %v2943 = vsub.f32 %v2875, %v2935
    %v2944 = vsub.f32 %v2877, %v2936
    %v2945 = vmul.f32 %v2937, %v2937
    %v2946 = vmul.f32 %v2938, %v2938
    %v2947 = vmul.f32 %v2939, %v2939
    %v2948 = vmul.f32 %v2940, %v2940
    %v2949 = vmul.f32 %v2941, %v2941
    %v2950 = vmul.f32 %v2942, %v2942
    %v2951 = vmul.f32 %v2943, %v2943
    %v2952 = vmul.f32 %v2944, %v2944
    %v2953 = vrot.slane %v2945, 4
    %v2954 = vadd.f32 %v2945, %v2953
    %v2955 = vrot.slane %v2954, 2
    %v2956 = vadd.f32 %v2954, %v2955
    %v2957 = vrot.slane %v2956, 1
    %v2958 = vadd.f32 %v2956, %v2957
    %v2959 = vrot.slane %v2946, 4
    %v2960 = vadd.f32 %v2946, %v2959
    %v2961 = vrot.slane %v2960, 2
    %v2962 = vadd.f32 %v2960, %v2961
    %v2963 = vrot.slane %v2962, 1
    %v2964 = vadd.f32 %v2962, %v2963
    %v2965 = vrot.slane %v2947, 4
    %v2966 = vadd.f32 %v2947, %v2965
    %v2967 = vrot.slane %v2966, 2
    %v2968 = vadd.f32 %v2966, %v2967
    %v2969 = vrot.slane %v2968, 1
    %v2970 = vadd.f32 %v2968, %v2969
    %v2971 = vrot.slane %v2948, 4
    %v2972 = vadd.f32 %v2948, %v2971
    %v2973 = vrot.slane %v2972, 2
    %v2974 = vadd.f32 %v2972, %v2973
    %v2975 = vrot.slane %v2974, 1
    %v2976 = vadd.f32 %v2974, %v2975
    %v2977 = vrot.slane %v2949, 4
    %v2978 = vadd.f32 %v2949, %v2977
    %v2979 = vrot.slane %v2978, 2
    %v2980 = vadd.f32 %v2978, %v2979
    %v2981 = vrot.slane %v2980, 1
    %v2982 = vadd.f32 %v2980, %v2981
    %v2983 = vrot.slane %v2950, 4
    %v2984 = vadd.f32 %v2950, %v2983
    %v2985 = vrot.slane %v2984, 2
    %v2986 = vadd.f32 %v2984, %v2985
    %v2987 = vrot.slane %v2986, 1
    %v2988 = vadd.f32 %v2986, %v2987
    %v2989 = vrot.slane %v2951, 4
    %v2990 = vadd.f32 %v2951, %v2989
    %v2991 = vrot.slane %v2990, 2
    %v2992 = vadd.f32 %v2990, %v2991
    %v2993 = vrot.slane %v2992, 1
    %v2994 = vadd.f32 %v2992, %v2993
    %v2995 = vrot.slane %v2952, 4
    %v2996 = vadd.f32 %v2952, %v2995
    %v2997 = vrot.slane %v2996, 2
    %v2998 = vadd.f32 %v2996, %v2997
    %v2999 = vrot.slane %v2998, 1
    %v3000 = vadd.f32 %v2998, %v2999
    %v3001 = vmul.f32 %v2958, %v348
    %v3002 = vmul.f32 %v2964, %v348
    %v3003 = vmul.f32 %v2970, %v348
    %v3004 = vmul.f32 %v2976, %v348
    %v3005 = vmul.f32 %v2982, %v348
    %v3006 = vmul.f32 %v2988, %v348
    %v3007 = vmul.f32 %v2994, %v348
    %v3008 = vmul.f32 %v3000, %v348
    %v3009 = vadd.f32 %v3001, 0.8
    %v3010 = vadd.f32 %v3002, 0.8
    %v3011 = vadd.f32 %v3003, 0.8
    %v3012 = vadd.f32 %v3004, 0.8
    %v3013 = vadd.f32 %v3005, 0.8
    %v3014 = vadd.f32 %v3006, 0.8
    %v3015 = vadd.f32 %v3007, 0.8
    %v3016 = vadd.f32 %v3008, 0.8
    %v3017 = vrsqrt.pop %v3009
    %v3018 = vrsqrt.pop %v3010
    %v3019 = vrsqrt.pop %v3011
    %v3020 = vrsqrt.pop %v3012
    %v3021 = vrsqrt.pop %v3013
    %v3022 = vrsqrt.pop %v3014
    %v3023 = vrsqrt.pop %v3015
    %v3024 = vrsqrt.pop %v3016
    %v3025 = vmul.f32 %v2937, %v3017
    %v3026 = vmul.f32 %v2938, %v3018
    %v3027 = vmul.f32 %v2939, %v3019
    %v3028 = vmul.f32 %v2940, %v3020
    %v3029 = vmul.f32 %v2941, %v3021
    %v3030 = vmul.f32 %v2942, %v3022
    %v3031 = vmul.f32 %v2943, %v3023
    %v3032 = vmul.f32 %v2944, %v3024
    %v3034 = vlaneseq
    %v3035 = vshrl.u32 %v3034, 7
    %v3036 = vsub.s32 0, %v3035
    %v3037 = vrot.slane %v124, %v3036
    %v3038 = vlaneseq
    %v3039 = vshrl.u32 %v3038, 7
    %v3040 = vsub.s32 1, %v3039
    %v3041 = vrot.slane %v124, %v3040
    %v3042 = vlaneseq
    %v3043 = vshrl.u32 %v3042, 7
    %v3044 = vsub.s32 2, %v3043
    %v3045 = vrot.slane %v124, %v3044
    %v3046 = vlaneseq
    %v3047 = vshrl.u32 %v3046, 7
    %v3048 = vsub.s32 3, %v3047
    %v3049 = vrot.slane %v124, %v3048
    %v3050 = vlaneseq
    %v3051 = vshrl.u32 %v3050, 7
    %v3052 = vsub.s32 4, %v3051
    %v3053 = vrot.slane %v124, %v3052
    %v3054 = vlaneseq
    %v3055 = vshrl.u32 %v3054, 7
    %v3056 = vsub.s32 5, %v3055
    %v3057 = vrot.slane %v124, %v3056
    %v3058 = vlaneseq
    %v3059 = vshrl.u32 %v3058, 7
    %v3060 = vsub.s32 6, %v3059
    %v3061 = vrot.slane %v124, %v3060
    %v3062 = vlaneseq
    %v3063 = vshrl.u32 %v3062, 7
    %v3064 = vsub.s32 7, %v3063
    %v3065 = vrot.slane %v124, %v3064
    %v3074 = vmul.f32 %v3025, %v3037
    %v3075 = vmul.f32 %v3026, %v3041
    %v3076 = vmul.f32 %v3027, %v3045
    %v3077 = vmul.f32 %v3028, %v3049
    %v3078 = vmul.f32 %v3029, %v3053
    %v3079 = vmul.f32 %v3030, %v3057
    %v3080 = vmul.f32 %v3031, %v3061
    %v3081 = vmul.f32 %v3032, %v3065
    %v3083 = vlaneseq
    %v3084 = vshrl.u32 %v3083, 7
    %v3085 = vsub.s32 0, %v3084
    %v3086 = vrot.slane %v125, %v3085
    %v3087 = vlaneseq
    %v3088 = vshrl.u32 %v3087, 7
    %v3089 = vsub.s32 1, %v3088
    %v3090 = vrot.slane %v125, %v3089
    %v3091 = vlaneseq
    %v3092 = vshrl.u32 %v3091, 7
    %v3093 = vsub.s32 2, %v3092
    %v3094 = vrot.slane %v125, %v3093
    %v3095 = vlaneseq
    %v3096 = vshrl.u32 %v3095, 7
    %v3097 = vsub.s32 3, %v3096
    %v3098 = vrot.slane %v125, %v3097
    %v3099 = vlaneseq
    %v3100 = vshrl.u32 %v3099, 7
    %v3101 = vsub.s32 4, %v3100
    %v3102 = vrot.slane %v125, %v3101
    %v3103 = vlaneseq
    %v3104 = vshrl.u32 %v3103, 7
    %v3105 = vsub.s32 5, %v3104
    %v3106 = vrot.slane %v125, %v3105
    %v3107 = vlaneseq
    %v3108 = vshrl.u32 %v3107, 7
    %v3109 = vsub.s32 6, %v3108
    %v3110 = vrot.slane %v125, %v3109
    %v3111 = vlaneseq
    %v3112 = vshrl.u32 %v3111, 7
    %v3113 = vsub.s32 7, %v3112
    %v3114 = vrot.slane %v125, %v3113
    %v3123 = vadd.f32 %v3074, %v3086
    %v3124 = vadd.f32 %v3075, %v3090
    %v3125 = vadd.f32 %v3076, %v3094
    %v3126 = vadd.f32 %v3077, %v3098
    %v3127 = vadd.f32 %v3078, %v3102
    %v3128 = vadd.f32 %v3079, %v3106
    %v3129 = vadd.f32 %v3080, %v3110
    %v3130 = vadd.f32 %v3081, %v3114
    %vm3131 = vcmp.gt.f32.partialorder %v3123, 0.0
    %vm3132 = vcmp.gt.f32.partialorder %v3124, 0.0
    %vm3133 = vcmp.gt.f32.partialorder %v3125, 0.0
    %vm3134 = vcmp.gt.f32.partialorder %v3126, 0.0
    %vm3135 = vcmp.gt.f32.partialorder %v3127, 0.0
    %vm3136 = vcmp.gt.f32.partialorder %v3128, 0.0
    %vm3137 = vcmp.gt.f32.partialorder %v3129, 0.0
    %vm3138 = vcmp.gt.f32.partialorder %v3130, 0.0
    %v3139 = vmul.f32 %v3123, 0.2
    %v3140 = vmul.f32 %v3124, 0.2
    %v3141 = vmul.f32 %v3125, 0.2
    %v3142 = vmul.f32 %v3126, 0.2
    %v3143 = vmul.f32 %v3127, 0.2
    %v3144 = vmul.f32 %v3128, 0.2
    %v3145 = vmul.f32 %v3129, 0.2
    %v3146 = vmul.f32 %v3130, 0.2
    %v3147 = vsel %vm3131, %v3123, %v3139
    %v3148 = vsel %vm3132, %v3124, %v3140
    %v3149 = vsel %vm3133, %v3125, %v3141
    %v3150 = vsel %vm3134, %v3126, %v3142
    %v3151 = vsel %vm3135, %v3127, %v3143
    %v3152 = vsel %vm3136, %v3128, %v3144
    %v3153 = vsel %vm3137, %v3129, %v3145
    %v3154 = vsel %vm3138, %v3130, %v3146
    %v3155 = vpack.c.bf16 %v3147, %v3147
    %v3156 = vpack.c.bf16 %v3148, %v3148
    %v3157 = vpack.c.bf16 %v3149, %v3149
    %v3158 = vpack.c.bf16 %v3150, %v3150
    %v3159 = vpack.c.bf16 %v3151, %v3151
    %v3160 = vpack.c.bf16 %v3152, %v3152
    %v3161 = vpack.c.bf16 %v3153, %v3153
    %v3162 = vpack.c.bf16 %v3154, %v3154
    %v3163 = vld [vmem:[#allocation11] sm:$0xf]
    %v3164 = vld [vmem:[#allocation11 + $0x4] sm:$0xf]
    %v3165 = vld [vmem:[#allocation11 + $0x8] sm:$0xf]
    %v3166 = vld [vmem:[#allocation11 + $0xc] sm:$0xf]
    %v3167 = vld [vmem:[#allocation11 + $0x10] sm:$0xf]
    %v3168 = vld [vmem:[#allocation11 + $0x14] sm:$0xf]
    %v3169 = vld [vmem:[#allocation11 + $0x18] sm:$0xf]
    %v3170 = vld [vmem:[#allocation11 + $0x1c] sm:$0xf]
    %v3171 = vld [vmem:[#allocation11 + $0x20] sm:$0xf]
    %v3172 = vld [vmem:[#allocation11 + $0x24] sm:$0xf]
    %v3173 = vld [vmem:[#allocation11 + $0x28] sm:$0xf]
    %v3174 = vld [vmem:[#allocation11 + $0x2c] sm:$0xf]
    %v3175 = vld [vmem:[#allocation11 + $0x30] sm:$0xf]
    %v3176 = vld [vmem:[#allocation11 + $0x34] sm:$0xf]
    %v3177 = vld [vmem:[#allocation11 + $0x38] sm:$0xf]
    %v3178 = vld [vmem:[#allocation11 + $0x3c] sm:$0xf]
    %v3179 = vld [vmem:[#allocation11 + $0x40] sm:$0xf]
    %v3180 = vld [vmem:[#allocation11 + $0x44] sm:$0xf]
    %v3181 = vld [vmem:[#allocation11 + $0x48] sm:$0xf]
    %v3182 = vld [vmem:[#allocation11 + $0x4c] sm:$0xf]
    %v3183 = vld [vmem:[#allocation11 + $0x50] sm:$0xf]
    %v3184 = vld [vmem:[#allocation11 + $0x54] sm:$0xf]
    %v3185 = vld [vmem:[#allocation11 + $0x58] sm:$0xf]
    %v3186 = vld [vmem:[#allocation11 + $0x5c] sm:$0xf]
    %v3187 = vld [vmem:[#allocation11 + $0x60] sm:$0xf]
    %v3188 = vld [vmem:[#allocation11 + $0x64] sm:$0xf]
    %v3189 = vld [vmem:[#allocation11 + $0x68] sm:$0xf]
    %v3190 = vld [vmem:[#allocation11 + $0x6c] sm:$0xf]
    %v3191 = vld [vmem:[#allocation11 + $0x70] sm:$0xf]
    %v3192 = vld [vmem:[#allocation11 + $0x74] sm:$0xf]
    %v3193 = vld [vmem:[#allocation11 + $0x78] sm:$0xf]
    %v3194 = vld [vmem:[#allocation11 + $0x7c] sm:$0xf]
    %v3195 = vld [vmem:[#allocation11 + $0x80] sm:$0xf]
    %v3196 = vld [vmem:[#allocation11 + $0x84] sm:$0xf]
    %v3197 = vld [vmem:[#allocation11 + $0x88] sm:$0xf]
    %v3198 = vld [vmem:[#allocation11 + $0x8c] sm:$0xf]
    %v3199 = vld [vmem:[#allocation11 + $0x90] sm:$0xf]
    %v3200 = vld [vmem:[#allocation11 + $0x94] sm:$0xf]
    %v3201 = vld [vmem:[#allocation11 + $0x98] sm:$0xf]
    %v3202 = vld [vmem:[#allocation11 + $0x9c] sm:$0xf]
    %v3203 = vld [vmem:[#allocation11 + $0xa0] sm:$0xf]
    %v3204 = vld [vmem:[#allocation11 + $0xa4] sm:$0xf]
    %v3205 = vld [vmem:[#allocation11 + $0xa8] sm:$0xf]
    %v3206 = vld [vmem:[#allocation11 + $0xac] sm:$0xf]
    %v3207 = vld [vmem:[#allocation11 + $0xb0] sm:$0xf]
    %v3208 = vld [vmem:[#allocation11 + $0xb4] sm:$0xf]
    %v3209 = vld [vmem:[#allocation11 + $0xb8] sm:$0xf]
    %v3210 = vld [vmem:[#allocation11 + $0xbc] sm:$0xf]
    %v3211 = vld [vmem:[#allocation11 + $0xc0] sm:$0xf]
    %v3212 = vld [vmem:[#allocation11 + $0xc4] sm:$0xf]
    %v3213 = vld [vmem:[#allocation11 + $0xc8] sm:$0xf]
    %v3214 = vld [vmem:[#allocation11 + $0xcc] sm:$0xf]
    %v3215 = vld [vmem:[#allocation11 + $0xd0] sm:$0xf]
    %v3216 = vld [vmem:[#allocation11 + $0xd4] sm:$0xf]
    %v3217 = vld [vmem:[#allocation11 + $0xd8] sm:$0xf]
    %v3218 = vld [vmem:[#allocation11 + $0xdc] sm:$0xf]
    %v3219 = vld [vmem:[#allocation11 + $0xe0] sm:$0xf]
    %v3220 = vld [vmem:[#allocation11 + $0xe4] sm:$0xf]
    %v3221 = vld [vmem:[#allocation11 + $0xe8] sm:$0xf]
    %v3222 = vld [vmem:[#allocation11 + $0xec] sm:$0xf]
    %v3223 = vld [vmem:[#allocation11 + $0xf0] sm:$0xf]
    %v3224 = vld [vmem:[#allocation11 + $0xf4] sm:$0xf]
    %v3225 = vld [vmem:[#allocation11 + $0xf8] sm:$0xf]
    %v3226 = vld [vmem:[#allocation11 + $0xfc] sm:$0xf]
    %v3227 = vld [vmem:[#allocation11 + $0x100] sm:$0xf]
    %v3228 = vld [vmem:[#allocation11 + $0x104] sm:$0xf]
    %v3229 = vld [vmem:[#allocation11 + $0x108] sm:$0xf]
    %v3230 = vld [vmem:[#allocation11 + $0x10c] sm:$0xf]
    %v3231 = vld [vmem:[#allocation11 + $0x110] sm:$0xf]
    %v3232 = vld [vmem:[#allocation11 + $0x114] sm:$0xf]
    %v3233 = vld [vmem:[#allocation11 + $0x118] sm:$0xf]
    %v3234 = vld [vmem:[#allocation11 + $0x11c] sm:$0xf]
    %v3235 = vld [vmem:[#allocation11 + $0x120] sm:$0xf]
    %v3236 = vld [vmem:[#allocation11 + $0x124] sm:$0xf]
    %v3237 = vld [vmem:[#allocation11 + $0x128] sm:$0xf]
    %v3238 = vld [vmem:[#allocation11 + $0x12c] sm:$0xf]
    %v3239 = vld [vmem:[#allocation11 + $0x130] sm:$0xf]
    %v3240 = vld [vmem:[#allocation11 + $0x134] sm:$0xf]
    %v3241 = vld [vmem:[#allocation11 + $0x138] sm:$0xf]
    %v3242 = vld [vmem:[#allocation11 + $0x13c] sm:$0xf]
    %v3243 = vld [vmem:[#allocation11 + $0x140] sm:$0xf]
    %v3244 = vld [vmem:[#allocation11 + $0x144] sm:$0xf]
    %v3245 = vld [vmem:[#allocation11 + $0x148] sm:$0xf]
    %v3246 = vld [vmem:[#allocation11 + $0x14c] sm:$0xf]
    %v3247 = vld [vmem:[#allocation11 + $0x150] sm:$0xf]
    %v3248 = vld [vmem:[#allocation11 + $0x154] sm:$0xf]
    %v3249 = vld [vmem:[#allocation11 + $0x158] sm:$0xf]
    %v3250 = vld [vmem:[#allocation11 + $0x15c] sm:$0xf]
    %v3251 = vld [vmem:[#allocation11 + $0x160] sm:$0xf]
    %v3252 = vld [vmem:[#allocation11 + $0x164] sm:$0xf]
    %v3253 = vld [vmem:[#allocation11 + $0x168] sm:$0xf]
    %v3254 = vld [vmem:[#allocation11 + $0x16c] sm:$0xf]
    %v3255 = vld [vmem:[#allocation11 + $0x170] sm:$0xf]
    %v3256 = vld [vmem:[#allocation11 + $0x174] sm:$0xf]
    %v3257 = vld [vmem:[#allocation11 + $0x178] sm:$0xf]
    %v3258 = vld [vmem:[#allocation11 + $0x17c] sm:$0xf]
    %v3259 = vld [vmem:[#allocation11 + $0x180] sm:$0xf]
    %v3260 = vld [vmem:[#allocation11 + $0x184] sm:$0xf]
    %v3261 = vld [vmem:[#allocation11 + $0x188] sm:$0xf]
    %v3262 = vld [vmem:[#allocation11 + $0x18c] sm:$0xf]
    %v3263 = vld [vmem:[#allocation11 + $0x190] sm:$0xf]
    %v3264 = vld [vmem:[#allocation11 + $0x194] sm:$0xf]
    %v3265 = vld [vmem:[#allocation11 + $0x198] sm:$0xf]
    %v3266 = vld [vmem:[#allocation11 + $0x19c] sm:$0xf]
    %v3267 = vld [vmem:[#allocation11 + $0x1a0] sm:$0xf]
    %v3268 = vld [vmem:[#allocation11 + $0x1a4] sm:$0xf]
    %v3269 = vld [vmem:[#allocation11 + $0x1a8] sm:$0xf]
    %v3270 = vld [vmem:[#allocation11 + $0x1ac] sm:$0xf]
    %v3271 = vld [vmem:[#allocation11 + $0x1b0] sm:$0xf]
    %v3272 = vld [vmem:[#allocation11 + $0x1b4] sm:$0xf]
    %v3273 = vld [vmem:[#allocation11 + $0x1b8] sm:$0xf]
    %v3274 = vld [vmem:[#allocation11 + $0x1bc] sm:$0xf]
    %v3275 = vld [vmem:[#allocation11 + $0x1c0] sm:$0xf]
    %v3276 = vld [vmem:[#allocation11 + $0x1c4] sm:$0xf]
    %v3277 = vld [vmem:[#allocation11 + $0x1c8] sm:$0xf]
    %v3278 = vld [vmem:[#allocation11 + $0x1cc] sm:$0xf]
    %v3279 = vld [vmem:[#allocation11 + $0x1d0] sm:$0xf]
    %v3280 = vld [vmem:[#allocation11 + $0x1d4] sm:$0xf]
    %v3281 = vld [vmem:[#allocation11 + $0x1d8] sm:$0xf]
    %v3282 = vld [vmem:[#allocation11 + $0x1dc] sm:$0xf]
    %v3283 = vld [vmem:[#allocation11 + $0x1e0] sm:$0xf]
    %v3284 = vld [vmem:[#allocation11 + $0x1e4] sm:$0xf]
    %v3285 = vld [vmem:[#allocation11 + $0x1e8] sm:$0xf]
    %v3286 = vld [vmem:[#allocation11 + $0x1ec] sm:$0xf]
    %v3287 = vld [vmem:[#allocation11 + $0x1f0] sm:$0xf]
    %v3288 = vld [vmem:[#allocation11 + $0x1f4] sm:$0xf]
    %v3289 = vld [vmem:[#allocation11 + $0x1f8] sm:$0xf]
    %v3290 = vld [vmem:[#allocation11 + $0x1fc] sm:$0xf]
    %v3292 = vlaneseq
    %v3293 = vshrl.u32 %v3292, 7
    %v3294 = vsub.s32 0, %v3293
    %v3295 = vrot.slane %v126, %v3294
    %v3425 = vunpack.c.l.b16 %v3163
    %v3426 = vunpack.c.l.b16 %v3164
    %v3427 = vunpack.c.l.b16 %v3165
    %v3428 = vunpack.c.l.b16 %v3166
    %v3429 = vunpack.c.l.b16 %v3167
    %v3430 = vunpack.c.l.b16 %v3168
    %v3431 = vunpack.c.l.b16 %v3169
    %v3432 = vunpack.c.l.b16 %v3170
    %v3433 = vunpack.c.l.b16 %v3171
    %v3434 = vunpack.c.l.b16 %v3172
    %v3435 = vunpack.c.l.b16 %v3173
    %v3436 = vunpack.c.l.b16 %v3174
    %v3437 = vunpack.c.l.b16 %v3175
    %v3438 = vunpack.c.l.b16 %v3176
    %v3439 = vunpack.c.l.b16 %v3177
    %v3440 = vunpack.c.l.b16 %v3178
    %v3441 = vunpack.c.l.b16 %v3179
    %v3442 = vunpack.c.l.b16 %v3180
    %v3443 = vunpack.c.l.b16 %v3181
    %v3444 = vunpack.c.l.b16 %v3182
    %v3445 = vunpack.c.l.b16 %v3183
    %v3446 = vunpack.c.l.b16 %v3184
    %v3447 = vunpack.c.l.b16 %v3185
    %v3448 = vunpack.c.l.b16 %v3186
    %v3449 = vunpack.c.l.b16 %v3187
    %v3450 = vunpack.c.l.b16 %v3188
    %v3451 = vunpack.c.l.b16 %v3189
    %v3452 = vunpack.c.l.b16 %v3190
    %v3453 = vunpack.c.l.b16 %v3191
    %v3454 = vunpack.c.l.b16 %v3192
    %v3455 = vunpack.c.l.b16 %v3193
    %v3456 = vunpack.c.l.b16 %v3194
    %v3457 = vunpack.c.l.b16 %v3195
    %v3458 = vunpack.c.l.b16 %v3196
    %v3459 = vunpack.c.l.b16 %v3197
    %v3460 = vunpack.c.l.b16 %v3198
    %v3461 = vunpack.c.l.b16 %v3199
    %v3462 = vunpack.c.l.b16 %v3200
    %v3463 = vunpack.c.l.b16 %v3201
    %v3464 = vunpack.c.l.b16 %v3202
    %v3465 = vunpack.c.l.b16 %v3203
    %v3466 = vunpack.c.l.b16 %v3204
    %v3467 = vunpack.c.l.b16 %v3205
    %v3468 = vunpack.c.l.b16 %v3206
    %v3469 = vunpack.c.l.b16 %v3207
    %v3470 = vunpack.c.l.b16 %v3208
    %v3471 = vunpack.c.l.b16 %v3209
    %v3472 = vunpack.c.l.b16 %v3210
    %v3473 = vunpack.c.l.b16 %v3211
    %v3474 = vunpack.c.l.b16 %v3212
    %v3475 = vunpack.c.l.b16 %v3213
    %v3476 = vunpack.c.l.b16 %v3214
    %v3477 = vunpack.c.l.b16 %v3215
    %v3478 = vunpack.c.l.b16 %v3216
    %v3479 = vunpack.c.l.b16 %v3217
    %v3480 = vunpack.c.l.b16 %v3218
    %v3481 = vunpack.c.l.b16 %v3219
    %v3482 = vunpack.c.l.b16 %v3220
    %v3483 = vunpack.c.l.b16 %v3221
    %v3484 = vunpack.c.l.b16 %v3222
    %v3485 = vunpack.c.l.b16 %v3223
    %v3486 = vunpack.c.l.b16 %v3224
    %v3487 = vunpack.c.l.b16 %v3225
    %v3488 = vunpack.c.l.b16 %v3226
    %v3489 = vunpack.c.l.b16 %v3227
    %v3490 = vunpack.c.l.b16 %v3228
    %v3491 = vunpack.c.l.b16 %v3229
    %v3492 = vunpack.c.l.b16 %v3230
    %v3493 = vunpack.c.l.b16 %v3231
    %v3494 = vunpack.c.l.b16 %v3232
    %v3495 = vunpack.c.l.b16 %v3233
    %v3496 = vunpack.c.l.b16 %v3234
    %v3497 = vunpack.c.l.b16 %v3235
    %v3498 = vunpack.c.l.b16 %v3236
    %v3499 = vunpack.c.l.b16 %v3237
    %v3500 = vunpack.c.l.b16 %v3238
    %v3501 = vunpack.c.l.b16 %v3239
    %v3502 = vunpack.c.l.b16 %v3240
    %v3503 = vunpack.c.l.b16 %v3241
    %v3504 = vunpack.c.l.b16 %v3242
    %v3505 = vunpack.c.l.b16 %v3243
    %v3506 = vunpack.c.l.b16 %v3244
    %v3507 = vunpack.c.l.b16 %v3245
    %v3508 = vunpack.c.l.b16 %v3246
    %v3509 = vunpack.c.l.b16 %v3247
    %v3510 = vunpack.c.l.b16 %v3248
    %v3511 = vunpack.c.l.b16 %v3249
    %v3512 = vunpack.c.l.b16 %v3250
    %v3513 = vunpack.c.l.b16 %v3251
    %v3514 = vunpack.c.l.b16 %v3252
    %v3515 = vunpack.c.l.b16 %v3253
    %v3516 = vunpack.c.l.b16 %v3254
    %v3517 = vunpack.c.l.b16 %v3255
    %v3518 = vunpack.c.l.b16 %v3256
    %v3519 = vunpack.c.l.b16 %v3257
    %v3520 = vunpack.c.l.b16 %v3258
    %v3521 = vunpack.c.l.b16 %v3259
    %v3522 = vunpack.c.l.b16 %v3260
    %v3523 = vunpack.c.l.b16 %v3261
    %v3524 = vunpack.c.l.b16 %v3262
    %v3525 = vunpack.c.l.b16 %v3263
    %v3526 = vunpack.c.l.b16 %v3264
    %v3527 = vunpack.c.l.b16 %v3265
    %v3528 = vunpack.c.l.b16 %v3266
    %v3529 = vunpack.c.l.b16 %v3267
    %v3530 = vunpack.c.l.b16 %v3268
    %v3531 = vunpack.c.l.b16 %v3269
    %v3532 = vunpack.c.l.b16 %v3270
    %v3533 = vunpack.c.l.b16 %v3271
    %v3534 = vunpack.c.l.b16 %v3272
    %v3535 = vunpack.c.l.b16 %v3273
    %v3536 = vunpack.c.l.b16 %v3274
    %v3537 = vunpack.c.l.b16 %v3275
    %v3538 = vunpack.c.l.b16 %v3276
    %v3539 = vunpack.c.l.b16 %v3277
    %v3540 = vunpack.c.l.b16 %v3278
    %v3541 = vunpack.c.l.b16 %v3279
    %v3542 = vunpack.c.l.b16 %v3280
    %v3543 = vunpack.c.l.b16 %v3281
    %v3544 = vunpack.c.l.b16 %v3282
    %v3545 = vunpack.c.l.b16 %v3283
    %v3546 = vunpack.c.l.b16 %v3284
    %v3547 = vunpack.c.l.b16 %v3285
    %v3548 = vunpack.c.l.b16 %v3286
    %v3549 = vunpack.c.l.b16 %v3287
    %v3550 = vunpack.c.l.b16 %v3288
    %v3551 = vunpack.c.l.b16 %v3289
    %v3552 = vunpack.c.l.b16 %v3290
    %v3553 = vpack.c.b16 %v3426, %v3425
    %v3554 = vpack.c.b16 %v3428, %v3427
    %v3555 = vpack.c.b16 %v3430, %v3429
    %v3556 = vpack.c.b16 %v3432, %v3431
    %v3557 = vpack.c.b16 %v3434, %v3433
    %v3558 = vpack.c.b16 %v3436, %v3435
    %v3559 = vpack.c.b16 %v3438, %v3437
    %v3560 = vpack.c.b16 %v3440, %v3439
    %v3561 = vpack.c.b16 %v3442, %v3441
    %v3562 = vpack.c.b16 %v3444, %v3443
    %v3563 = vpack.c.b16 %v3446, %v3445
    %v3564 = vpack.c.b16 %v3448, %v3447
    %v3565 = vpack.c.b16 %v3450, %v3449
    %v3566 = vpack.c.b16 %v3452, %v3451
    %v3567 = vpack.c.b16 %v3454, %v3453
    %v3568 = vpack.c.b16 %v3456, %v3455
    %v3569 = vpack.c.b16 %v3458, %v3457
    %v3570 = vpack.c.b16 %v3460, %v3459
    %v3571 = vpack.c.b16 %v3462, %v3461
    %v3572 = vpack.c.b16 %v3464, %v3463
    %v3573 = vpack.c.b16 %v3466, %v3465
    %v3574 = vpack.c.b16 %v3468, %v3467
    %v3575 = vpack.c.b16 %v3470, %v3469
    %v3576 = vpack.c.b16 %v3472, %v3471
    %v3577 = vpack.c.b16 %v3474, %v3473
    %v3578 = vpack.c.b16 %v3476, %v3475
    %v3579 = vpack.c.b16 %v3478, %v3477
    %v3580 = vpack.c.b16 %v3480, %v3479
    %v3581 = vpack.c.b16 %v3482, %v3481
    %v3582 = vpack.c.b16 %v3484, %v3483
    %v3583 = vpack.c.b16 %v3486, %v3485
    %v3584 = vpack.c.b16 %v3488, %v3487
    %v3585 = vpack.c.b16 %v3490, %v3489
    %v3586 = vpack.c.b16 %v3492, %v3491
    %v3587 = vpack.c.b16 %v3494, %v3493
    %v3588 = vpack.c.b16 %v3496, %v3495
    %v3589 = vpack.c.b16 %v3498, %v3497
    %v3590 = vpack.c.b16 %v3500, %v3499
    %v3591 = vpack.c.b16 %v3502, %v3501
    %v3592 = vpack.c.b16 %v3504, %v3503
    %v3593 = vpack.c.b16 %v3506, %v3505
    %v3594 = vpack.c.b16 %v3508, %v3507
    %v3595 = vpack.c.b16 %v3510, %v3509
    %v3596 = vpack.c.b16 %v3512, %v3511
    %v3597 = vpack.c.b16 %v3514, %v3513
    %v3598 = vpack.c.b16 %v3516, %v3515
    %v3599 = vpack.c.b16 %v3518, %v3517
    %v3600 = vpack.c.b16 %v3520, %v3519
    %v3601 = vpack.c.b16 %v3522, %v3521
    %v3602 = vpack.c.b16 %v3524, %v3523
    %v3603 = vpack.c.b16 %v3526, %v3525
    %v3604 = vpack.c.b16 %v3528, %v3527
    %v3605 = vpack.c.b16 %v3530, %v3529
    %v3606 = vpack.c.b16 %v3532, %v3531
    %v3607 = vpack.c.b16 %v3534, %v3533
    %v3608 = vpack.c.b16 %v3536, %v3535
    %v3609 = vpack.c.b16 %v3538, %v3537
    %v3610 = vpack.c.b16 %v3540, %v3539
    %v3611 = vpack.c.b16 %v3542, %v3541
    %v3612 = vpack.c.b16 %v3544, %v3543
    %v3613 = vpack.c.b16 %v3546, %v3545
    %v3614 = vpack.c.b16 %v3548, %v3547
    %v3615 = vpack.c.b16 %v3550, %v3549
    %v3616 = vpack.c.b16 %v3552, %v3551
    %3681 = vmatprep.subr.bf16.mxu0 0
    %3682 = vmatpush1.bf16.msra.mxu0 %v3553
    %3683 = vmatprep.subr.bf16.mxu0 0
    %3684 = vmatpush1.bf16.msra.mxu0 %v3554
    %3685 = vmatprep.subr.bf16.mxu0 0
    %3686 = vmatpush1.bf16.msra.mxu0 %v3555
    %3687 = vmatprep.subr.bf16.mxu0 0
    %3688 = vmatpush1.bf16.msra.mxu0 %v3556
    %3689 = vmatprep.subr.bf16.mxu0 0
    %3690 = vmatpush1.bf16.msra.mxu0 %v3557
    %3691 = vmatprep.subr.bf16.mxu0 0
    %3692 = vmatpush1.bf16.msra.mxu0 %v3558
    %3693 = vmatprep.subr.bf16.mxu0 0
    %3694 = vmatpush1.bf16.msra.mxu0 %v3559
    %3695 = vmatprep.subr.bf16.mxu0 0
    %3696 = vmatpush1.bf16.msra.mxu0 %v3560
    %3697 = vmatprep.subr.bf16.mxu0 0
    %3698 = vmatpush1.bf16.msra.mxu0 %v3561
    %3699 = vmatprep.subr.bf16.mxu0 0
    %3700 = vmatpush1.bf16.msra.mxu0 %v3562
    %3701 = vmatprep.subr.bf16.mxu0 0
    %3702 = vmatpush1.bf16.msra.mxu0 %v3563
    %3703 = vmatprep.subr.bf16.mxu0 0
    %3704 = vmatpush1.bf16.msra.mxu0 %v3564
    %3705 = vmatprep.subr.bf16.mxu0 0
    %3706 = vmatpush1.bf16.msra.mxu0 %v3565
    %3707 = vmatprep.subr.bf16.mxu0 0
    %3708 = vmatpush1.bf16.msra.mxu0 %v3566
    %3709 = vmatprep.subr.bf16.mxu0 0
    %3710 = vmatpush1.bf16.msra.mxu0 %v3567
    %3711 = vmatprep.subr.bf16.mxu0 0
    %3712 = vmatpush1.bf16.msra.mxu0 %v3568
    %3713 = vmatprep.mubr.bf16.mxu0 %v3156
    %3714 = vmatmul.mubr.bf16.gmra.mrb[0].mxu0 %v3155
    %v3715 = vpop.f32.mrb[0].mxu0
    %v3716 = vadd.f32 %v3295, %v3715
    %v3717 = vpop.f32.mrb[0].mxu0
    %v3718 = vpop.f32.mrb[0].mxu0
    %v3719 = vpop.f32.mrb[0].mxu0
    %3720 = vdwg.mxu0
    %3721 = vmatprep.subr.bf16.mxu0 0
    %3722 = vmatpush1.bf16.msra.mxu0 %v3569
    %3723 = vmatprep.subr.bf16.mxu0 0
    %3724 = vmatpush1.bf16.msra.mxu0 %v3570
    %3725 = vmatprep.subr.bf16.mxu0 0
    %3726 = vmatpush1.bf16.msra.mxu0 %v3571
    %3727 = vmatprep.subr.bf16.mxu0 0
    %3728 = vmatpush1.bf16.msra.mxu0 %v3572
    %3729 = vmatprep.subr.bf16.mxu0 0
    %3730 = vmatpush1.bf16.msra.mxu0 %v3573
    %3731 = vmatprep.subr.bf16.mxu0 0
    %3732 = vmatpush1.bf16.msra.mxu0 %v3574
    %3733 = vmatprep.subr.bf16.mxu0 0
    %3734 = vmatpush1.bf16.msra.mxu0 %v3575
    %3735 = vmatprep.subr.bf16.mxu0 0
    %3736 = vmatpush1.bf16.msra.mxu0 %v3576
    %3737 = vmatprep.subr.bf16.mxu0 0
    %3738 = vmatpush1.bf16.msra.mxu0 %v3577
    %3739 = vmatprep.subr.bf16.mxu0 0
    %3740 = vmatpush1.bf16.msra.mxu0 %v3578
    %3741 = vmatprep.subr.bf16.mxu0 0
    %3742 = vmatpush1.bf16.msra.mxu0 %v3579
    %3743 = vmatprep.subr.bf16.mxu0 0
    %3744 = vmatpush1.bf16.msra.mxu0 %v3580
    %3745 = vmatprep.subr.bf16.mxu0 0
    %3746 = vmatpush1.bf16.msra.mxu0 %v3581
    %3747 = vmatprep.subr.bf16.mxu0 0
    %3748 = vmatpush1.bf16.msra.mxu0 %v3582
    %3749 = vmatprep.subr.bf16.mxu0 0
    %3750 = vmatpush1.bf16.msra.mxu0 %v3583
    %3751 = vmatprep.subr.bf16.mxu0 0
    %3752 = vmatpush1.bf16.msra.mxu0 %v3584
    %3753 = vmatprep.mubr.bf16.mxu0 %v3158
    %3754 = vmatmul.mubr.bf16.gmra.mrb[0].mxu0 %v3157
    %v3755 = vpop.f32.mrb[0].mxu0
    %v3756 = vadd.f32 %v3716, %v3755
    %v3757 = vpop.f32.mrb[0].mxu0
    %v3758 = vpop.f32.mrb[0].mxu0
    %v3759 = vpop.f32.mrb[0].mxu0
    %3760 = vdwg.mxu0
    %3761 = vmatprep.subr.bf16.mxu0 0
    %3762 = vmatpush1.bf16.msra.mxu0 %v3585
    %3763 = vmatprep.subr.bf16.mxu0 0
    %3764 = vmatpush1.bf16.msra.mxu0 %v3586
    %3765 = vmatprep.subr.bf16.mxu0 0
    %3766 = vmatpush1.bf16.msra.mxu0 %v3587
    %3767 = vmatprep.subr.bf16.mxu0 0
    %3768 = vmatpush1.bf16.msra.mxu0 %v3588
    %3769 = vmatprep.subr.bf16.mxu0 0
    %3770 = vmatpush1.bf16.msra.mxu0 %v3589
    %3771 = vmatprep.subr.bf16.mxu0 0
    %3772 = vmatpush1.bf16.msra.mxu0 %v3590
    %3773 = vmatprep.subr.bf16.mxu0 0
    %3774 = vmatpush1.bf16.msra.mxu0 %v3591
    %3775 = vmatprep.subr.bf16.mxu0 0
    %3776 = vmatpush1.bf16.msra.mxu0 %v3592
    %3777 = vmatprep.subr.bf16.mxu0 0
    %3778 = vmatpush1.bf16.msra.mxu0 %v3593
    %3779 = vmatprep.subr.bf16.mxu0 0
    %3780 = vmatpush1.bf16.msra.mxu0 %v3594
    %3781 = vmatprep.subr.bf16.mxu0 0
    %3782 = vmatpush1.bf16.msra.mxu0 %v3595
    %3783 = vmatprep.subr.bf16.mxu0 0
    %3784 = vmatpush1.bf16.msra.mxu0 %v3596
    %3785 = vmatprep.subr.bf16.mxu0 0
    %3786 = vmatpush1.bf16.msra.mxu0 %v3597
    %3787 = vmatprep.subr.bf16.mxu0 0
    %3788 = vmatpush1.bf16.msra.mxu0 %v3598
    %3789 = vmatprep.subr.bf16.mxu0 0
    %3790 = vmatpush1.bf16.msra.mxu0 %v3599
    %3791 = vmatprep.subr.bf16.mxu0 0
    %3792 = vmatpush1.bf16.msra.mxu0 %v3600
    %3793 = vmatprep.mubr.bf16.mxu0 %v3160
    %3794 = vmatmul.mubr.bf16.gmra.mrb[0].mxu0 %v3159
    %v3795 = vpop.f32.mrb[0].mxu0
    %v3796 = vadd.f32 %v3756, %v3795
    %v3797 = vpop.f32.mrb[0].mxu0
    %v3798 = vpop.f32.mrb[0].mxu0
    %v3799 = vpop.f32.mrb[0].mxu0
    %3800 = vdwg.mxu0
    %3801 = vmatprep.subr.bf16.mxu0 0
    %3802 = vmatpush1.bf16.msra.mxu0 %v3601
    %3803 = vmatprep.subr.bf16.mxu0 0
    %3804 = vmatpush1.bf16.msra.mxu0 %v3602
    %3805 = vmatprep.subr.bf16.mxu0 0
    %3806 = vmatpush1.bf16.msra.mxu0 %v3603
    %3807 = vmatprep.subr.bf16.mxu0 0
    %3808 = vmatpush1.bf16.msra.mxu0 %v3604
    %3809 = vmatprep.subr.bf16.mxu0 0
    %3810 = vmatpush1.bf16.msra.mxu0 %v3605
    %3811 = vmatprep.subr.bf16.mxu0 0
    %3812 = vmatpush1.bf16.msra.mxu0 %v3606
    %3813 = vmatprep.subr.bf16.mxu0 0
    %3814 = vmatpush1.bf16.msra.mxu0 %v3607
    %3815 = vmatprep.subr.bf16.mxu0 0
    %3816 = vmatpush1.bf16.msra.mxu0 %v3608
    %3817 = vmatprep.subr.bf16.mxu0 0
    %3818 = vmatpush1.bf16.msra.mxu0 %v3609
    %3819 = vmatprep.subr.bf16.mxu0 0
    %3820 = vmatpush1.bf16.msra.mxu0 %v3610
    %3821 = vmatprep.subr.bf16.mxu0 0
    %3822 = vmatpush1.bf16.msra.mxu0 %v3611
    %3823 = vmatprep.subr.bf16.mxu0 0
    %3824 = vmatpush1.bf16.msra.mxu0 %v3612
    %3825 = vmatprep.subr.bf16.mxu0 0
    %3826 = vmatpush1.bf16.msra.mxu0 %v3613
    %3827 = vmatprep.subr.bf16.mxu0 0
    %3828 = vmatpush1.bf16.msra.mxu0 %v3614
    %3829 = vmatprep.subr.bf16.mxu0 0
    %3830 = vmatpush1.bf16.msra.mxu0 %v3615
    %3831 = vmatprep.subr.bf16.mxu0 0
    %3832 = vmatpush1.bf16.msra.mxu0 %v3616
    %3833 = vmatprep.mubr.bf16.mxu0 %v3162
    %3834 = vmatmul.mubr.bf16.gmra.mrb[0].mxu0 %v3161
    %v3835 = vpop.f32.mrb[0].mxu0
    %v3836 = vadd.f32 %v3796, %v3835
    %v3837 = vpop.f32.mrb[0].mxu0
    %v3838 = vpop.f32.mrb[0].mxu0
    %v3839 = vpop.f32.mrb[0].mxu0
    %3840 = vdwg.mxu0
    %v3841 = vtanh.pop %v3836
    %3842 = vst [vmem:[#allocation14] sm:$0xff] %v3841
    // Predicated region
    $region58: #{tpu_custom_call.1} parent=1 // pred_check
      _
    $region59: #{tpu_custom_call.1} parent=1 // pred_check_branch
      %3844 = sbr.rel (0) target = $region61
    $region60: #{tpu_custom_call.1} parent=1 // pred_region
      %s3846 = ssub.s32 128, 128
      %3847 = vsyncadd [#allocation4], %s3846
      %s3849 = sshll.u32 [#allocation14], 4
      %s3850 = int_to_ptr.vmem [resolvable:$true] %s3849
      %3852 = dma.vmem_to_hbm [thread:$0]  %s3850, 128, %s7, [#allocation4]
    $region61: #{tpu_custom_call.1} parent=1 // pred_fallthru
      _
    // Predicated region
    $region62: #{tpu_custom_call.1} parent=1 // pred_check
      _
    $region63: #{tpu_custom_call.1} parent=1 // pred_check_branch
      %3854 = sbr.rel (0) target = $region65
    $region64: #{tpu_custom_call.1} parent=1 // pred_region
      %3855 = dma.done [#allocation4], 128
    $region65: #{tpu_custom_call.1} parent=1 // pred_fallthru
      _
    %3856 = vsyncpa [#allocation3], 1
    %3857 = vsyncpa [#allocation6], 1
    %3858 = vsyncpa [#allocation9], 1
    %3859 = vsyncpa [#allocation12], 1
    %3860 = vsyncpa [#allocation4], 1

</llo_original>
